<compile_context>
chip_gen: v5e
topology: v5e:2x2
jax: 0.10.0
libtpu: 0.0.40
codegen_flags: <defaults>
</compile_context>

<pallas_src>
import functools

import numpy as np
import jax
import jax.numpy as jnp
from jax.experimental import pallas as pl
from jax.experimental.pallas import tpu as pltpu

C1 = 64          # conv1 output channels
C2 = 32          # conv2 output channels
FC_HIDDEN = 128
NUM_CLASSES = 20
LANE_PAD = 128   # fc2 logits padded to one full lane group


# ----------------------------------------------------------------------------
# The fused kernel: one grid step == B images, everything stays in VMEM.
# ----------------------------------------------------------------------------
def _fused_kernel(x_ref, m1_ref, ph_ref, s1_ref, t1_ref,
                  m2_ref, a_ref, s2_ref, t2_ref,
                  sel_ref, wfc1_ref, bfc1_ref, wfc2_ref, bfc2_ref,
                  o_ref, *, B, H, W):
    f32, bf16 = jnp.float32, jnp.bfloat16
    Hf = H // 4
    S1 = (W // 2) * C1       # conv1-stage lane width
    S2 = (W // 4) * C2       # conv2-stage lane width

    # ---- conv1(3x3,'same') + avgpool(2) + bn1 --------------------------------
    # x_ref: (B*H, W) bf16 slab (B images stacked along sublanes, no padding).
    # m1_ref: (W, 3*S1) width taps, 3 kernel rows lane-concatenated, with the
    #   0.5*[1,1] width pooling and the 'same' width zero padding folded in.
    # ph_ref[kh]: (B*H/2, B*H) block-diagonal height-pool matrices with the kh
    #   row shift and the 'same' row zero padding folded in.
    v = jnp.dot(x_ref[...], m1_ref[...], preferred_element_type=f32).astype(bf16)
    q1 = jnp.dot(ph_ref[0], v[:, 0:S1], preferred_element_type=f32)
    q1 = q1 + jnp.dot(ph_ref[1], v[:, S1:2 * S1], preferred_element_type=f32)
    q1 = q1 + jnp.dot(ph_ref[2], v[:, 2 * S1:3 * S1], preferred_element_type=f32)
    q1 = (q1 * s1_ref[...] + t1_ref[...]).astype(bf16)      # conv bias + BN folded

    # ---- conv2(2x2,'same': pad 0-before/1-after) + avgpool(2) + bn2 ----------
    # m2_ref: (S1, 2*S2) width taps lane-concatenated over kh; a_ref[kh]:
    # (B*Hf, B*H/2) block-diagonal row pooling with the kh shift / pad-after row folded in.
    g = jnp.dot(q1, m2_ref[...], preferred_element_type=f32).astype(bf16)
    q2 = jnp.dot(a_ref[0], g[:, 0:S2], preferred_element_type=f32)
    q2 = q2 + jnp.dot(a_ref[1], g[:, S2:2 * S2], preferred_element_type=f32)
    q2 = (q2 * s2_ref[...] + t2_ref[...]).astype(bf16)       # (B*Hf, S2)

    # ---- flatten (NCHW order folded into fc1 rows) + fc1 + relu --------------
    # Selection matmuls move each per-image pooled-row group into its own
    # 128-lane block (lane-aligned concat) instead of a sublane->lane reshape,
    # then ONE K=Hf*S2 fc1 contraction with M=B.
    pieces = [jnp.dot(sel_ref[hf], q2, preferred_element_type=f32)
              for hf in range(Hf)]
    q2flat = jnp.concatenate(pieces, axis=-1).astype(bf16)    # (B, Hf*S2)
    h1 = jnp.dot(q2flat, wfc1_ref[...], preferred_element_type=f32) + bfc1_ref[...]
    h1 = jnp.maximum(h1, 0.0).astype(bf16)                    # dropout(eval) = identity

    # ---- fc2 (lane-dense 128 wide) + softmax ---------------------------------
    logits = jnp.dot(h1, wfc2_ref[...], preferred_element_type=f32) + bfc2_ref[...]
    m = jnp.max(logits, axis=-1, keepdims=True)
    e = jnp.exp(logits - m)                                   # padded lanes -> 0
    s = jnp.sum(e, axis=-1, keepdims=True)
    r = pl.reciprocal(s, approx=True)
    r = r * (2.0 - s * r)          # one Newton step: near-exact, divide stays off VALU
    o_ref[...] = (e * r).astype(o_ref.dtype)


# ----------------------------------------------------------------------------
# One-time host-side weight preparation (folding + permutation), numpy.
# ----------------------------------------------------------------------------
def prepare_params(p, H, W, block_b):
    assert H % 4 == 0 and W % 4 == 0, "spatial dims must be divisible by 4"
    B = block_b
    Ho1, Wo1, Hf, Wf = H // 2, W // 2, H // 4, W // 4
    S1, S2 = Wo1 * C1, Wf * C2

    w1 = np.asarray(p["w1"], np.float32)           # (64, 1, 3, 3)
    w2 = np.asarray(p["w2"], np.float32)           # (32, 64, 2, 2)

    # conv1 width matrix (kh lane-concatenated, width pool + 'same' pad folded).
    m1 = np.zeros((W, 3 * S1), np.float32)
    for kh in range(3):
        for d in range(4):                          # d = dw + kw
            tap = np.zeros((C1,), np.float32)
            if d <= 2:
                tap += w1[:, 0, kh, d]              # (dw=0, kw=d)
            if 1 <= d <= 3:
                tap += w1[:, 0, kh, d - 1]          # (dw=1, kw=d-1)
            for wo in range(Wo1):
                j = 2 * wo + d - 1                  # unpadded input column
                if 0 <= j < W:
                    m1[j, kh * S1 + wo * C1: kh * S1 + (wo + 1) * C1] += 0.5 * tap

    # conv2 width matrix (kh lane-concatenated, pad 0-before / 1-after folded).
    m2 = np.zeros((S1, 2 * S2), np.float32)
    for kh in range(2):
        for d in range(3):                          # d = dw + kw
            tap = np.zeros((C1, C2), np.float32)    # (ci, co)
            if d <= 1:
                tap += w2[:, :, kh, d].T
            if d >= 1:
                tap += w2[:, :, kh, d - 1].T
            for wf in range(Wf):
                wcol = 2 * wf + d
                if wcol < Wo1:
                    m2[wcol * C1:(wcol + 1) * C1,
                       kh * S2 + wf * C2: kh * S2 + (wf + 1) * C2] += 0.5 * tap

    # Left pooling matrices with the kh row shift and zero-pad rows folded in,
    # block-diagonal over the B images of a grid step (I_B kron ph_kh).
    def pool_shift(rows_out, rows_in, kh, pad_before):
        m = np.zeros((rows_out, rows_in), np.float32)
        for ro in range(rows_out):
            for dh in range(2):
                r = 2 * ro + dh + kh - pad_before
                if 0 <= r < rows_in:
                    m[ro, r] = 0.5
        return m

    def blockdiag(m):
        ro, ri = m.shape
        out = np.zeros((B * ro, B * ri), np.float32)
        for b in range(B):
            out[b * ro:(b + 1) * ro, b * ri:(b + 1) * ri] = m
        return out

    ph = np.stack([blockdiag(pool_shift(Ho1, H, kh, 1)) for kh in range(3)])
    a = np.stack([blockdiag(pool_shift(Hf, Ho1, kh, 0)) for kh in range(2)])

    # Row-group selection matrices for the flatten (sel[hf][b, b*Hf+hf] = 1).
    sel = np.zeros((Hf, B, B * Hf), np.float32)
    for hf in range(Hf):
        for b in range(B):
            sel[hf, b, b * Hf + hf] = 1.0

    # Conv bias + frozen BatchNorm folded into per-(w, c) scale/shift rows.
    s1 = np.asarray(p["bn1_scale"], np.float32)
    t1 = np.asarray(p["bn1_shift"], np.float32) + s1 * np.asarray(p["b1"], np.float32)
    s2 = np.asarray(p["bn2_scale"], np.float32)
    t2 = np.asarray(p["bn2_shift"], np.float32) + s2 * np.asarray(p["b2"], np.float32)
    s1row, t1row = np.tile(s1, Wo1)[None, :], np.tile(t1, Wo1)[None, :]
    s2row, t2row = np.tile(s2, Wf)[None, :], np.tile(t2, Wf)[None, :]

    # fc1 rows permuted from torch's NCHW flatten (c, h, w) to the kernel's
    # (h, w, c) layout -> single (Hf*Wf*C2, 128) matrix.
    fc1_w = np.asarray(p["fc1_w"], np.float32)                 # (C2*Hf*Wf, 128)
    wfc1 = (fc1_w.reshape(C2, Hf, Wf, FC_HIDDEN)
            .transpose(1, 2, 0, 3).reshape(Hf * S2, FC_HIDDEN))
    bfc1 = np.asarray(p["fc1_b"], np.float32)[None, :]

    # fc2 padded to 128 lanes; padded logits masked via a -1e30 bias.
    wfc2 = np.zeros((FC_HIDDEN, LANE_PAD), np.float32)
    wfc2[:, :NUM_CLASSES] = np.asarray(p["fc2_w"], np.float32)
    bfc2 = np.full((1, LANE_PAD), -1e30, np.float32)
    bfc2[0, :NUM_CLASSES] = np.asarray(p["fc2_b"], np.float32)

    bf16 = jnp.bfloat16
    f32 = jnp.float32
    return dict(
        # MXU operands stored bf16 (halves DMA/VMEM; pool/sel entries 0/0.5/1 exact).
        m1=jnp.asarray(m1, bf16), ph=jnp.asarray(ph, bf16),
        m2=jnp.asarray(m2, bf16), a=jnp.asarray(a, bf16),
        sel=jnp.asarray(sel, bf16),
        wfc1=jnp.asarray(wfc1, bf16), wfc2=jnp.asarray(wfc2, bf16),
        # Elementwise affine / bias rows stay f32.
        s1row=jnp.asarray(s1row, f32), t1row=jnp.asarray(t1row, f32),
        s2row=jnp.asarray(s2row, f32), t2row=jnp.asarray(t2row, f32),
        bfc1=jnp.asarray(bfc1, f32), bfc2=jnp.asarray(bfc2, f32),
    )


# ----------------------------------------------------------------------------
# Forward pass wrapper
# ----------------------------------------------------------------------------
@functools.partial(jax.jit, static_argnames=("block_b",))
def conv_comp_forward(x_nchw, prep, *, block_b=8):
    N, _, H, W = x_nchw.shape
    B = block_b
    Ho1, Hf = H // 2, H // 4
    S1, S2 = (W // 2) * C1, (W // 4) * C2
    Ng = pl.cdiv(N, B)
    Npad = Ng * B

    x = x_nchw[:, 0, :, :].astype(jnp.bfloat16)
    if Npad != N:                                   # pad batch to a multiple of B
        x = jnp.pad(x, ((0, Npad - N), (0, 0), (0, 0)))
    x2d = x.reshape(Npad * H, W)                    # (B*H)-row slabs per grid step

    kern = functools.partial(_fused_kernel, B=B, H=H, W=W)

    def rep(arr):                                   # replicated weight spec
        return pl.BlockSpec(arr.shape, lambda n, nd=arr.ndim: (0,) * nd)

    weight_names = ("m1", "ph", "s1row", "t1row", "m2", "a", "s2row", "t2row",
                    "sel", "wfc1", "bfc1", "wfc2", "bfc2")
    weight_args = [prep[k] for k in weight_names]

    grid_spec = pltpu.PrefetchScalarGridSpec(
        num_scalar_prefetch=0,
        grid=(Ng,),
        in_specs=[pl.BlockSpec((B * H, W), lambda n: (n, 0))]
                 + [rep(a) for a in weight_args],
        out_specs=pl.BlockSpec((B, LANE_PAD), lambda n: (n, 0)),
    )

    flops_step = 2 * ((B * H) * W * (3 * S1) + 3 * (B * Ho1) * (B * H) * S1
                      + (B * Ho1) * S1 * (2 * S2) + 2 * (B * Hf) * (B * Ho1) * S2
                      + Hf * B * (B * Hf) * S2 + B * (Hf * S2) * FC_HIDDEN
                      + B * FC_HIDDEN * LANE_PAD)
    w_bytes = sum(int(np.prod(a.shape)) * a.dtype.itemsize for a in weight_args)
    cost = pl.CostEstimate(
        flops=int(flops_step * Ng),
        transcendentals=int(Ng * B * LANE_PAD),
        bytes_accessed=int(x2d.size * x2d.dtype.itemsize
                           + Npad * LANE_PAD * 4 + w_bytes))

    out = pl.pallas_call(
        kern,
        out_shape=jax.ShapeDtypeStruct((Npad, LANE_PAD), jnp.float32),
        grid_spec=grid_spec,
        compiler_params=pltpu.CompilerParams(
            dimension_semantics=("parallel",)),
        cost_estimate=cost,
    )(x2d, *weight_args)
    return out[:N, :NUM_CLASSES]


# ----------------------------------------------------------------------------
# Pure-JAX reference (for the correctness check)
# ----------------------------------------------------------------------------
def _avgpool_nchw(x):
    N, C, H, W = x.shape
    return x.reshape(N, C, H // 2, 2, W // 2, 2).mean(axis=(3, 5))


def reference_forward(x_nchw, p):
    dn = ("NCHW", "OIHW", "NCHW")
    x = jax.lax.conv_general_dilated(
        x_nchw, p["w1"], (1, 1), ((1, 1), (1, 1)), dimension_numbers=dn
    ) + p["b1"][None, :, None, None]
    x = _avgpool_nchw(x)
    x = x * p["bn1_scale"][None, :, None, None] + p["bn1_shift"][None, :, None, None]
    x = jax.lax.conv_general_dilated(
        x, p["w2"], (1, 1), ((0, 1), (0, 1)), dimension_numbers=dn
    ) + p["b2"][None, :, None, None]
    x = _avgpool_nchw(x)
    x = x * p["bn2_scale"][None, :, None, None] + p["bn2_shift"][None, :, None, None]
    x = x.reshape(x.shape[0], -1)
    x = jnp.maximum(x @ p["fc1_w"] + p["fc1_b"], 0.0)
    z = x @ p["fc2_w"] + p["fc2_b"]
    return jax.nn.softmax(z, axis=1)


# ----------------------------------------------------------------------------
# Deterministic parameter construction (synthetic, not a checkpoint)
# ----------------------------------------------------------------------------
def make_params(key, n_fc_input):
    ks = jax.random.split(key, 16)
    u = lambda k, shape, bound: jax.random.uniform(k, shape, jnp.float32, -bound, bound)

    w1 = u(ks[0], (64, 1, 3, 3), 1.0 / (1 * 3 * 3) ** 0.5)
    b1 = u(ks[1], (64,), 1.0 / (1 * 3 * 3) ** 0.5)
    w2 = u(ks[2], (32, 64, 2, 2), 1.0 / (64 * 2 * 2) ** 0.5)
    b2 = u(ks[3], (32,), 1.0 / (64 * 2 * 2) ** 0.5)

    def bn(kg, kb, km, kv, c):
        gamma = jax.random.uniform(kg, (c,), jnp.float32, 0.5, 1.5)
        beta = 0.1 * jax.random.normal(kb, (c,), jnp.float32)
        rmean = 0.1 * jax.random.normal(km, (c,), jnp.float32)
        rvar = jax.random.uniform(kv, (c,), jnp.float32, 0.5, 1.5)
        scale = gamma / jnp.sqrt(rvar + 1e-5)
        shift = beta - rmean * scale
        return scale, shift

    bn1_scale, bn1_shift = bn(ks[4], ks[5], ks[6], ks[7], 64)
    bn2_scale, bn2_shift = bn(ks[8], ks[9], ks[10], ks[11], 32)

    fc1_w = u(ks[12], (n_fc_input, 128), 1.0 / n_fc_input ** 0.5)   # stored as (in, out)
    fc1_b = u(ks[13], (128,), 1.0 / n_fc_input ** 0.5)
    fc2_w = u(ks[14], (128, 20), 1.0 / 128 ** 0.5)
    fc2_b = u(ks[15], (20,), 1.0 / 128 ** 0.5)

    return dict(
        w1=w1, b1=b1, w2=w2, b2=b2,
        bn1_scale=bn1_scale, bn1_shift=bn1_shift,
        bn2_scale=bn2_scale, bn2_shift=bn2_shift,
        fc1_w=fc1_w, fc1_b=fc1_b, fc2_w=fc2_w, fc2_b=fc2_b,
    )


if __name__ == "__main__":
    # Small shapes consistent with the module: (N, 1, H, W) single-channel input.
    # N=12 with B=8 exercises both the batch-padding path and a 2-step grid
    # (>=2 steps keeps both v7x TensorCores busy).  For larger real batches on
    # v6e, B=32 (conv1 M=512, pooled M=256) is the better choice.
    N, H, W = 12, 16, 16
    BLOCK_B = 8
    n_fc_input = C2 * (H // 4) * (W // 4)      # same rule as _get_fc_input_features

    key = jax.random.PRNGKey(0)
    kx, kp = jax.random.split(key)
    x = jax.random.normal(kx, (N, 1, H, W), jnp.float32)
    params = make_params(kp, n_fc_input)

    prep = jax.tree_util.tree_map(jax.block_until_ready,
                                  prepare_params(params, H, W, BLOCK_B))

    out = conv_comp_forward(x, prep, block_b=BLOCK_B)
    out = jax.block_until_ready(out)

    ref = reference_forward(x, params)
    assert out.shape == (N, NUM_CLASSES)
    assert jnp.allclose(jnp.sum(out, axis=1), 1.0, atol=1e-4)
    # bf16 MXU operands (f32 accumulation) -> looser tolerance than the f32 version.
    err = float(jnp.max(jnp.abs(out - ref)))
    assert err < 5e-3, f"mismatch vs JAX reference: max abs err {err}"

    print("KERNEL_OK")
</pallas_src>

<mosaic_0001>
module attributes {stable_mosaic.version = 11 : i64} {
  func.func @_fused_kernel(%arg0: i32, %arg1: memref<128x16xbf16, #tpu.memory_space<vmem>>, %arg2: memref<16x1536xbf16, #tpu.memory_space<vmem>>, %arg3: memref<3x64x128xbf16, #tpu.memory_space<vmem>>, %arg4: memref<1x512xf32, #tpu.memory_space<vmem>>, %arg5: memref<1x512xf32, #tpu.memory_space<vmem>>, %arg6: memref<512x256xbf16, #tpu.memory_space<vmem>>, %arg7: memref<2x32x64xbf16, #tpu.memory_space<vmem>>, %arg8: memref<1x128xf32, #tpu.memory_space<vmem>>, %arg9: memref<1x128xf32, #tpu.memory_space<vmem>>, %arg10: memref<4x8x32xbf16, #tpu.memory_space<vmem>>, %arg11: memref<512x128xbf16, #tpu.memory_space<vmem>>, %arg12: memref<1x128xf32, #tpu.memory_space<vmem>>, %arg13: memref<128x128xbf16, #tpu.memory_space<vmem>>, %arg14: memref<1x128xf32, #tpu.memory_space<vmem>>, %arg15: memref<8x128xf32, #tpu.memory_space<vmem>>) attributes {dimension_semantics = [#tpu.dimension_semantics<parallel>], iteration_bounds = array<i64: 2>, scalar_prefetch = 0 : i64, scratch_operands = 0 : i64, tpu.core_type = #tpu.core_type<tc>, window_params = [{transform_indices = @transform_0, window_bounds = array<i64: 128, 16>}, {pipeline_mode = #tpu.pipeline_mode<synchronous>, transform_indices = @transform_1, window_bounds = array<i64: 16, 1536>}, {pipeline_mode = #tpu.pipeline_mode<synchronous>, transform_indices = @transform_2, window_bounds = array<i64: 3, 64, 128>}, {pipeline_mode = #tpu.pipeline_mode<synchronous>, transform_indices = @transform_3, window_bounds = array<i64: 1, 512>}, {pipeline_mode = #tpu.pipeline_mode<synchronous>, transform_indices = @transform_4, window_bounds = array<i64: 1, 512>}, {pipeline_mode = #tpu.pipeline_mode<synchronous>, transform_indices = @transform_5, window_bounds = array<i64: 512, 256>}, {pipeline_mode = #tpu.pipeline_mode<synchronous>, transform_indices = @transform_6, window_bounds = array<i64: 2, 32, 64>}, {pipeline_mode = #tpu.pipeline_mode<synchronous>, transform_indices = @transform_7, window_bounds = array<i64: 1, 128>}, {pipeline_mode = #tpu.pipeline_mode<synchronous>, transform_indices = @transform_8, window_bounds = array<i64: 1, 128>}, {pipeline_mode = #tpu.pipeline_mode<synchronous>, transform_indices = @transform_9, window_bounds = array<i64: 4, 8, 32>}, {pipeline_mode = #tpu.pipeline_mode<synchronous>, transform_indices = @transform_10, window_bounds = array<i64: 512, 128>}, {pipeline_mode = #tpu.pipeline_mode<synchronous>, transform_indices = @transform_11, window_bounds = array<i64: 1, 128>}, {pipeline_mode = #tpu.pipeline_mode<synchronous>, transform_indices = @transform_12, window_bounds = array<i64: 128, 128>}, {pipeline_mode = #tpu.pipeline_mode<synchronous>, transform_indices = @transform_13, window_bounds = array<i64: 1, 128>}, {transform_indices = @transform_14, window_bounds = array<i64: 8, 128>}]} {
    %c0 = arith.constant 0 : index
    %c0_0 = arith.constant 0 : index
    %0 = vector.load %arg1[%c0, %c0_0] : memref<128x16xbf16, #tpu.memory_space<vmem>>, vector<128x16xbf16>
    %c0_1 = arith.constant 0 : index
    %c0_2 = arith.constant 0 : index
    %1 = vector.load %arg2[%c0_1, %c0_2] : memref<16x1536xbf16, #tpu.memory_space<vmem>>, vector<16x1536xbf16>
    %cst = arith.constant dense<0.000000e+00> : vector<128x1536xf32>
    %2 = tpu.matmul %0, %1, %cst {dimension_numbers = #tpu.dot_dimension_numbers<[1], [0], [0], [1], [0, 0, 1, 1], [], []>} : vector<128x16xbf16>, vector<16x1536xbf16>, vector<128x1536xf32> -> vector<128x1536xf32>
    %3 = arith.truncf %2 : vector<128x1536xf32> to vector<128x1536xbf16>
    %c0_3 = arith.constant 0 : index
    %c0_4 = arith.constant 0 : index
    %c0_5 = arith.constant 0 : index
    %4 = vector.load %arg3[%c0_3, %c0_4, %c0_5] : memref<3x64x128xbf16, #tpu.memory_space<vmem>>, vector<1x64x128xbf16>
    %5 = vector.shape_cast %4 : vector<1x64x128xbf16> to vector<64x128xbf16>
    %6 = vector.extract_strided_slice %3 {offsets = [0, 0], sizes = [128, 512], strides = [1, 1]} : vector<128x1536xbf16> to vector<128x512xbf16>
    %cst_6 = arith.constant dense<0.000000e+00> : vector<64x512xf32>
    %7 = tpu.matmul %5, %6, %cst_6 {dimension_numbers = #tpu.dot_dimension_numbers<[1], [0], [0], [1], [0, 0, 1, 1], [], []>} : vector<64x128xbf16>, vector<128x512xbf16>, vector<64x512xf32> -> vector<64x512xf32>
    %c1 = arith.constant 1 : index
    %c0_7 = arith.constant 0 : index
    %c0_8 = arith.constant 0 : index
    %8 = vector.load %arg3[%c1, %c0_7, %c0_8] : memref<3x64x128xbf16, #tpu.memory_space<vmem>>, vector<1x64x128xbf16>
    %9 = vector.shape_cast %8 : vector<1x64x128xbf16> to vector<64x128xbf16>
    %10 = vector.extract_strided_slice %3 {offsets = [0, 512], sizes = [128, 512], strides = [1, 1]} : vector<128x1536xbf16> to vector<128x512xbf16>
    %cst_9 = arith.constant dense<0.000000e+00> : vector<64x512xf32>
    %11 = tpu.matmul %9, %10, %cst_9 {dimension_numbers = #tpu.dot_dimension_numbers<[1], [0], [0], [1], [0, 0, 1, 1], [], []>} : vector<64x128xbf16>, vector<128x512xbf16>, vector<64x512xf32> -> vector<64x512xf32>
    %12 = arith.addf %7, %11 : vector<64x512xf32>
    %c2 = arith.constant 2 : index
    %c0_10 = arith.constant 0 : index
    %c0_11 = arith.constant 0 : index
    %13 = vector.load %arg3[%c2, %c0_10, %c0_11] : memref<3x64x128xbf16, #tpu.memory_space<vmem>>, vector<1x64x128xbf16>
    %14 = vector.shape_cast %13 : vector<1x64x128xbf16> to vector<64x128xbf16>
    %15 = vector.extract_strided_slice %3 {offsets = [0, 1024], sizes = [128, 512], strides = [1, 1]} : vector<128x1536xbf16> to vector<128x512xbf16>
    %cst_12 = arith.constant dense<0.000000e+00> : vector<64x512xf32>
    %16 = tpu.matmul %14, %15, %cst_12 {dimension_numbers = #tpu.dot_dimension_numbers<[1], [0], [0], [1], [0, 0, 1, 1], [], []>} : vector<64x128xbf16>, vector<128x512xbf16>, vector<64x512xf32> -> vector<64x512xf32>
    %17 = arith.addf %12, %16 : vector<64x512xf32>
    %c0_13 = arith.constant 0 : index
    %c0_14 = arith.constant 0 : index
    %18 = vector.load %arg4[%c0_13, %c0_14] : memref<1x512xf32, #tpu.memory_space<vmem>>, vector<1x512xf32>
    %19 = vector.broadcast %18 : vector<1x512xf32> to vector<64x512xf32>
    %20 = arith.mulf %17, %19 : vector<64x512xf32>
    %c0_15 = arith.constant 0 : index
    %c0_16 = arith.constant 0 : index
    %21 = vector.load %arg5[%c0_15, %c0_16] : memref<1x512xf32, #tpu.memory_space<vmem>>, vector<1x512xf32>
    %22 = vector.broadcast %21 : vector<1x512xf32> to vector<64x512xf32>
    %23 = arith.addf %20, %22 : vector<64x512xf32>
    %24 = arith.truncf %23 : vector<64x512xf32> to vector<64x512xbf16>
    %c0_17 = arith.constant 0 : index
    %c0_18 = arith.constant 0 : index
    %25 = vector.load %arg6[%c0_17, %c0_18] : memref<512x256xbf16, #tpu.memory_space<vmem>>, vector<512x256xbf16>
    %cst_19 = arith.constant dense<0.000000e+00> : vector<64x256xf32>
    %26 = tpu.matmul %24, %25, %cst_19 {dimension_numbers = #tpu.dot_dimension_numbers<[1], [0], [0], [1], [0, 0, 1, 1], [], []>} : vector<64x512xbf16>, vector<512x256xbf16>, vector<64x256xf32> -> vector<64x256xf32>
    %27 = arith.truncf %26 : vector<64x256xf32> to vector<64x256xbf16>
    %c0_20 = arith.constant 0 : index
    %c0_21 = arith.constant 0 : index
    %c0_22 = arith.constant 0 : index
    %28 = vector.load %arg7[%c0_20, %c0_21, %c0_22] : memref<2x32x64xbf16, #tpu.memory_space<vmem>>, vector<1x32x64xbf16>
    %29 = vector.shape_cast %28 : vector<1x32x64xbf16> to vector<32x64xbf16>
    %30 = vector.extract_strided_slice %27 {offsets = [0, 0], sizes = [64, 128], strides = [1, 1]} : vector<64x256xbf16> to vector<64x128xbf16>
    %cst_23 = arith.constant dense<0.000000e+00> : vector<32x128xf32>
    %31 = tpu.matmul %29, %30, %cst_23 {dimension_numbers = #tpu.dot_dimension_numbers<[1], [0], [0], [1], [0, 0, 1, 1], [], []>} : vector<32x64xbf16>, vector<64x128xbf16>, vector<32x128xf32> -> vector<32x128xf32>
    %c1_24 = arith.constant 1 : index
    %c0_25 = arith.constant 0 : index
    %c0_26 = arith.constant 0 : index
    %32 = vector.load %arg7[%c1_24, %c0_25, %c0_26] : memref<2x32x64xbf16, #tpu.memory_space<vmem>>, vector<1x32x64xbf16>
    %33 = vector.shape_cast %32 : vector<1x32x64xbf16> to vector<32x64xbf16>
    %34 = vector.extract_strided_slice %27 {offsets = [0, 128], sizes = [64, 128], strides = [1, 1]} : vector<64x256xbf16> to vector<64x128xbf16>
    %cst_27 = arith.constant dense<0.000000e+00> : vector<32x128xf32>
    %35 = tpu.matmul %33, %34, %cst_27 {dimension_numbers = #tpu.dot_dimension_numbers<[1], [0], [0], [1], [0, 0, 1, 1], [], []>} : vector<32x64xbf16>, vector<64x128xbf16>, vector<32x128xf32> -> vector<32x128xf32>
    %36 = arith.addf %31, %35 : vector<32x128xf32>
    %c0_28 = arith.constant 0 : index
    %c0_29 = arith.constant 0 : index
    %37 = vector.load %arg8[%c0_28, %c0_29] : memref<1x128xf32, #tpu.memory_space<vmem>>, vector<1x128xf32>
    %38 = vector.broadcast %37 : vector<1x128xf32> to vector<32x128xf32>
    %39 = arith.mulf %36, %38 : vector<32x128xf32>
    %c0_30 = arith.constant 0 : index
    %c0_31 = arith.constant 0 : index
    %40 = vector.load %arg9[%c0_30, %c0_31] : memref<1x128xf32, #tpu.memory_space<vmem>>, vector<1x128xf32>
    %41 = vector.broadcast %40 : vector<1x128xf32> to vector<32x128xf32>
    %42 = arith.addf %39, %41 : vector<32x128xf32>
    %43 = arith.truncf %42 : vector<32x128xf32> to vector<32x128xbf16>
    %c0_32 = arith.constant 0 : index
    %c0_33 = arith.constant 0 : index
    %c0_34 = arith.constant 0 : index
    %44 = vector.load %arg10[%c0_32, %c0_33, %c0_34] : memref<4x8x32xbf16, #tpu.memory_space<vmem>>, vector<1x8x32xbf16>
    %45 = vector.shape_cast %44 : vector<1x8x32xbf16> to vector<8x32xbf16>
    %cst_35 = arith.constant dense<0.000000e+00> : vector<8x128xf32>
    %46 = tpu.matmul %45, %43, %cst_35 {dimension_numbers = #tpu.dot_dimension_numbers<[1], [0], [0], [1], [0, 0, 1, 1], [], []>} : vector<8x32xbf16>, vector<32x128xbf16>, vector<8x128xf32> -> vector<8x128xf32>
    %c1_36 = arith.constant 1 : index
    %c0_37 = arith.constant 0 : index
    %c0_38 = arith.constant 0 : index
    %47 = vector.load %arg10[%c1_36, %c0_37, %c0_38] : memref<4x8x32xbf16, #tpu.memory_space<vmem>>, vector<1x8x32xbf16>
    %48 = vector.shape_cast %47 : vector<1x8x32xbf16> to vector<8x32xbf16>
    %cst_39 = arith.constant dense<0.000000e+00> : vector<8x128xf32>
    %49 = tpu.matmul %48, %43, %cst_39 {dimension_numbers = #tpu.dot_dimension_numbers<[1], [0], [0], [1], [0, 0, 1, 1], [], []>} : vector<8x32xbf16>, vector<32x128xbf16>, vector<8x128xf32> -> vector<8x128xf32>
    %c2_40 = arith.constant 2 : index
    %c0_41 = arith.constant 0 : index
    %c0_42 = arith.constant 0 : index
    %50 = vector.load %arg10[%c2_40, %c0_41, %c0_42] : memref<4x8x32xbf16, #tpu.memory_space<vmem>>, vector<1x8x32xbf16>
    %51 = vector.shape_cast %50 : vector<1x8x32xbf16> to vector<8x32xbf16>
    %cst_43 = arith.constant dense<0.000000e+00> : vector<8x128xf32>
    %52 = tpu.matmul %51, %43, %cst_43 {dimension_numbers = #tpu.dot_dimension_numbers<[1], [0], [0], [1], [0, 0, 1, 1], [], []>} : vector<8x32xbf16>, vector<32x128xbf16>, vector<8x128xf32> -> vector<8x128xf32>
    %c3 = arith.constant 3 : index
    %c0_44 = arith.constant 0 : index
    %c0_45 = arith.constant 0 : index
    %53 = vector.load %arg10[%c3, %c0_44, %c0_45] : memref<4x8x32xbf16, #tpu.memory_space<vmem>>, vector<1x8x32xbf16>
    %54 = vector.shape_cast %53 : vector<1x8x32xbf16> to vector<8x32xbf16>
    %cst_46 = arith.constant dense<0.000000e+00> : vector<8x128xf32>
    %55 = tpu.matmul %54, %43, %cst_46 {dimension_numbers = #tpu.dot_dimension_numbers<[1], [0], [0], [1], [0, 0, 1, 1], [], []>} : vector<8x32xbf16>, vector<32x128xbf16>, vector<8x128xf32> -> vector<8x128xf32>
    %56 = tpu.concatenate %46, %49, %52, %55 in 1 : vector<8x128xf32>, vector<8x128xf32>, vector<8x128xf32>, vector<8x128xf32> -> vector<8x512xf32>
    %57 = arith.truncf %56 : vector<8x512xf32> to vector<8x512xbf16>
    %c0_47 = arith.constant 0 : index
    %c0_48 = arith.constant 0 : index
    %58 = vector.load %arg11[%c0_47, %c0_48] : memref<512x128xbf16, #tpu.memory_space<vmem>>, vector<512x128xbf16>
    %cst_49 = arith.constant dense<0.000000e+00> : vector<8x128xf32>
    %59 = tpu.matmul %57, %58, %cst_49 {dimension_numbers = #tpu.dot_dimension_numbers<[1], [0], [0], [1], [0, 0, 1, 1], [], []>} : vector<8x512xbf16>, vector<512x128xbf16>, vector<8x128xf32> -> vector<8x128xf32>
    %c0_50 = arith.constant 0 : index
    %c0_51 = arith.constant 0 : index
    %60 = vector.load %arg12[%c0_50, %c0_51] : memref<1x128xf32, #tpu.memory_space<vmem>>, vector<1x128xf32>
    %61 = vector.broadcast %60 : vector<1x128xf32> to vector<8x128xf32>
    %62 = arith.addf %59, %61 : vector<8x128xf32>
    %cst_52 = arith.constant 0.000000e+00 : f32
    %63 = vector.broadcast %cst_52 : f32 to vector<8x128xf32>
    %64 = arith.maximumf %62, %63 : vector<8x128xf32>
    %65 = arith.truncf %64 : vector<8x128xf32> to vector<8x128xbf16>
    %c0_53 = arith.constant 0 : index
    %c0_54 = arith.constant 0 : index
    %66 = vector.load %arg13[%c0_53, %c0_54] : memref<128x128xbf16, #tpu.memory_space<vmem>>, vector<128x128xbf16>
    %cst_55 = arith.constant dense<0.000000e+00> : vector<8x128xf32>
    %67 = tpu.matmul %65, %66, %cst_55 {dimension_numbers = #tpu.dot_dimension_numbers<[1], [0], [0], [1], [0, 0, 1, 1], [], []>} : vector<8x128xbf16>, vector<128x128xbf16>, vector<8x128xf32> -> vector<8x128xf32>
    %c0_56 = arith.constant 0 : index
    %c0_57 = arith.constant 0 : index
    %68 = vector.load %arg14[%c0_56, %c0_57] : memref<1x128xf32, #tpu.memory_space<vmem>>, vector<1x128xf32>
    %69 = vector.broadcast %68 : vector<1x128xf32> to vector<8x128xf32>
    %70 = arith.addf %67, %69 : vector<8x128xf32>
    %cst_58 = arith.constant dense<0xFF800000> : vector<8xf32>
    %71 = vector.multi_reduction <maximumf>, %70, %cst_58 [1] : vector<8x128xf32> to vector<8xf32>
    %72 = vector.shape_cast %71 : vector<8xf32> to vector<8x1xf32>
    %73 = vector.broadcast %72 : vector<8x1xf32> to vector<8x128xf32>
    %74 = arith.subf %70, %73 : vector<8x128xf32>
    %75 = math.exp %74 : vector<8x128xf32>
    %cst_59 = arith.constant dense<0.000000e+00> : vector<8xf32>
    %76 = vector.multi_reduction <add>, %75, %cst_59 [1] : vector<8x128xf32> to vector<8xf32>
    %77 = vector.shape_cast %76 : vector<8xf32> to vector<8x1xf32>
    %78 = tpu.reciprocal %77 {approx = true} : vector<8x1xf32> -> vector<8x1xf32>
    %79 = arith.mulf %77, %78 : vector<8x1xf32>
    %cst_60 = arith.constant 2.000000e+00 : f32
    %80 = vector.broadcast %cst_60 : f32 to vector<8x1xf32>
    %81 = arith.subf %80, %79 : vector<8x1xf32>
    %82 = arith.mulf %78, %81 : vector<8x1xf32>
    %83 = vector.broadcast %82 : vector<8x1xf32> to vector<8x128xf32>
    %84 = arith.mulf %75, %83 : vector<8x128xf32>
    %c0_61 = arith.constant 0 : index
    %c0_62 = arith.constant 0 : index
    %85 = vector.load %arg15[%c0_61, %c0_62] : memref<8x128xf32, #tpu.memory_space<vmem>>, vector<8x128xf32>
    tpu.vector_store %arg15[%c0_61, %c0_62], %84 {strides = array<i32>} : memref<8x128xf32, #tpu.memory_space<vmem>>, vector<8x128xf32>,
    return
  }
  func.func @transform_0(%arg0: i32) -> (i32, i32) {
    %c0_i32 = arith.constant 0 : i32
    %c0_i32_0 = arith.constant 0 : i32
    return %arg0, %c0_i32 : i32, i32
  }
  func.func @transform_1(%arg0: i32) -> (i32, i32) {
    %c0_i32 = arith.constant 0 : i32
    %c0_i32_0 = arith.constant 0 : i32
    %c0_i32_1 = arith.constant 0 : i32
    return %c0_i32, %c0_i32_0 : i32, i32
  }
  func.func @transform_2(%arg0: i32) -> (i32, i32, i32) {
    %c0_i32 = arith.constant 0 : i32
    %c0_i32_0 = arith.constant 0 : i32
    %c0_i32_1 = arith.constant 0 : i32
    %c0_i32_2 = arith.constant 0 : i32
    return %c0_i32, %c0_i32_0, %c0_i32_1 : i32, i32, i32
  }
  func.func @transform_3(%arg0: i32) -> (i32, i32) {
    %c0_i32 = arith.constant 0 : i32
    %c0_i32_0 = arith.constant 0 : i32
    %c0_i32_1 = arith.constant 0 : i32
    return %c0_i32, %c0_i32_0 : i32, i32
  }
  func.func @transform_4(%arg0: i32) -> (i32, i32) {
    %c0_i32 = arith.constant 0 : i32
    %c0_i32_0 = arith.constant 0 : i32
    %c0_i32_1 = arith.constant 0 : i32
    return %c0_i32, %c0_i32_0 : i32, i32
  }
  func.func @transform_5(%arg0: i32) -> (i32, i32) {
    %c0_i32 = arith.constant 0 : i32
    %c0_i32_0 = arith.constant 0 : i32
    %c0_i32_1 = arith.constant 0 : i32
    return %c0_i32, %c0_i32_0 : i32, i32
  }
  func.func @transform_6(%arg0: i32) -> (i32, i32, i32) {
    %c0_i32 = arith.constant 0 : i32
    %c0_i32_0 = arith.constant 0 : i32
    %c0_i32_1 = arith.constant 0 : i32
    %c0_i32_2 = arith.constant 0 : i32
    return %c0_i32, %c0_i32_0, %c0_i32_1 : i32, i32, i32
  }
  func.func @transform_7(%arg0: i32) -> (i32, i32) {
    %c0_i32 = arith.constant 0 : i32
    %c0_i32_0 = arith.constant 0 : i32
    %c0_i32_1 = arith.constant 0 : i32
    return %c0_i32, %c0_i32_0 : i32, i32
  }
  func.func @transform_8(%arg0: i32) -> (i32, i32) {
    %c0_i32 = arith.constant 0 : i32
    %c0_i32_0 = arith.constant 0 : i32
    %c0_i32_1 = arith.constant 0 : i32
    return %c0_i32, %c0_i32_0 : i32, i32
  }
  func.func @transform_9(%arg0: i32) -> (i32, i32, i32) {
    %c0_i32 = arith.constant 0 : i32
    %c0_i32_0 = arith.constant 0 : i32
    %c0_i32_1 = arith.constant 0 : i32
    %c0_i32_2 = arith.constant 0 : i32
    return %c0_i32, %c0_i32_0, %c0_i32_1 : i32, i32, i32
  }
  func.func @transform_10(%arg0: i32) -> (i32, i32) {
    %c0_i32 = arith.constant 0 : i32
    %c0_i32_0 = arith.constant 0 : i32
    %c0_i32_1 = arith.constant 0 : i32
    return %c0_i32, %c0_i32_0 : i32, i32
  }
  func.func @transform_11(%arg0: i32) -> (i32, i32) {
    %c0_i32 = arith.constant 0 : i32
    %c0_i32_0 = arith.constant 0 : i32
    %c0_i32_1 = arith.constant 0 : i32
    return %c0_i32, %c0_i32_0 : i32, i32
  }
  func.func @transform_12(%arg0: i32) -> (i32, i32) {
    %c0_i32 = arith.constant 0 : i32
    %c0_i32_0 = arith.constant 0 : i32
    %c0_i32_1 = arith.constant 0 : i32
    return %c0_i32, %c0_i32_0 : i32, i32
  }
  func.func @transform_13(%arg0: i32) -> (i32, i32) {
    %c0_i32 = arith.constant 0 : i32
    %c0_i32_0 = arith.constant 0 : i32
    %c0_i32_1 = arith.constant 0 : i32
    return %c0_i32, %c0_i32_0 : i32, i32
  }
  func.func @transform_14(%arg0: i32) -> (i32, i32) {
    %c0_i32 = arith.constant 0 : i32
    %c0_i32_0 = arith.constant 0 : i32
    return %arg0, %c0_i32 : i32, i32
  }
}

</mosaic_0001>

<llo_original>
// kernel: conv_comp_forward.1
$region0: #{conv_comp_forward.1}
  #allocation0 [shape = 'u32[]', space=smem, size = 0x4, offset = 0x4, fixed_abs, tag = 'smem constant byte address 0x4 - core index']
  #allocation1 [shape = 'u32[72,128]{1,0:T(1,128)}', space=vmem, size = 0x9000, scoped, tag = 'internal scratch']
  %s0 = inlined_call_operand.vmem [shape: bf16[256,16], index: 0, kind: input, shape index: {}]
  %s1 = inlined_call_operand.hbm [shape: bf16[16,1536], index: 1, kind: input, shape index: {}]
  %s2 = inlined_call_operand.hbm [shape: bf16[3,64,128], index: 2, kind: input, shape index: {}]
  %s3 = inlined_call_operand.vmem [shape: f32[1,512], index: 3, kind: input, shape index: {}]
  %s4 = inlined_call_operand.hbm [shape: f32[1,512], index: 4, kind: input, shape index: {}]
  %s5 = inlined_call_operand.vmem [shape: bf16[512,256], index: 5, kind: input, shape index: {}]
  %s6 = inlined_call_operand.hbm [shape: bf16[2,32,64], index: 6, kind: input, shape index: {}]
  %s7 = inlined_call_operand.vmem [shape: f32[1,128], index: 7, kind: input, shape index: {}]
  %s8 = inlined_call_operand.vmem [shape: f32[1,128], index: 8, kind: input, shape index: {}]
  %s9 = inlined_call_operand.hbm [shape: bf16[4,8,32], index: 9, kind: input, shape index: {}]
  %s10 = inlined_call_operand.hbm [shape: bf16[512,128], index: 10, kind: input, shape index: {}]
  %s11 = inlined_call_operand.hbm [shape: f32[1,128], index: 11, kind: input, shape index: {}]
  %s12 = inlined_call_operand.hbm [shape: bf16[128,128], index: 12, kind: input, shape index: {}]
  %s13 = inlined_call_operand.hbm [shape: f32[1,128], index: 13, kind: input, shape index: {}]
  %s14 = inlined_call_operand.hbm [shape: f32[16,128], index: 14, kind: output, shape index: {}]
  %s15 = sld [smem:[#allocation0]]
  $region125: #{conv_comp_forward.1} parent=0
    _
  %s17 = ssub.s32 1, %s15
  %s18 = scalar_select 0, %s17, %s15
  $region1: #{conv_comp_forward.1} parent=0
    #allocation2 [shape = 'u8[49152]{0}', space=vmem, size = 0xc000, scoped, tag = 'input window, operand 1, single buffered']
    #allocation3 [shape = 's32[2]{0}', space=sflag, size = 0x8, scoped, tag = 'scoped memory for conv_comp_forward.1']
    #allocation4 [shape = 's32[2]{0}', space=sflag, size = 0x8, scoped, tag = 'scoped memory for conv_comp_forward.1']
    #allocation5 [shape = 'u8[49152]{0}', space=vmem, size = 0xc000, scoped, tag = 'input window, operand 2, single buffered']
    #allocation6 [shape = 's32[1]{0}', space=sflag, size = 0x4, scoped, tag = 'scoped memory for conv_comp_forward.1']
    #allocation7 [shape = 'u8[2048]{0}', space=vmem, size = 0x800, scoped, tag = 'input window, operand 4, single buffered']
    #allocation8 [shape = 'u8[16384]{0}', space=vmem, size = 0x4000, scoped, tag = 'input window, operand 6, single buffered']
    #allocation9 [shape = 's32[1]{0}', space=sflag, size = 0x4, scoped, tag = 'scoped memory for conv_comp_forward.1']
    #allocation10 [shape = 'u8[8192]{0}', space=vmem, size = 0x2000, scoped, tag = 'input window, operand 9, single buffered']
    #allocation11 [shape = 'u8[131072]{0}', space=vmem, size = 0x20000, scoped, tag = 'input window, operand 10, single buffered']
    #allocation12 [shape = 's32[1]{0}', space=sflag, size = 0x4, scoped, tag = 'scoped memory for conv_comp_forward.1']
    #allocation13 [shape = 'u8[512]{0}', space=vmem, size = 0x400, scoped, tag = 'input window, operand 11, single buffered']
    #allocation14 [shape = 'u8[32768]{0}', space=vmem, size = 0x8000, scoped, tag = 'input window, operand 12, single buffered']
    #allocation15 [shape = 's32[1]{0}', space=sflag, size = 0x4, scoped, tag = 'scoped memory for conv_comp_forward.1']
    #allocation16 [shape = 'u8[512]{0}', space=vmem, size = 0x400, scoped, tag = 'input window, operand 13, single buffered']
    #allocation17 [shape = 'u8[8192]{0}', space=vmem, size = 0x2000, scoped, tag = 'output window, operand 0']
    %19 = vsyncpa [#allocation3], 0
    %20 = vsyncpa [#allocation6], 0
    %21 = vsyncpa [#allocation9], 0
    %22 = vsyncpa [#allocation12], 0
    %23 = vsyncpa [#allocation15], 0
    %24 = vsyncpa [#allocation4], 0
    %s25 = scalar_lea.sflag [#allocation4], 1
    %26 = vsyncpa %s25, 0
    loop: start=0, step=1, limit=4
    $region2: #{conv_comp_forward.1} parent=1 // loop_pre_header
      _
    $region3: #{conv_comp_forward.1} parent=1 // loop_header
      %s28 = sphi 0, %s32
      %p29 = scmp.ge.s32.totalorder %s28, 4
      %s38 = sphi 0, %s40
      %s41 = sphi 0, %s38
      %s42 = sphi 0, %s41
      %s58 = sphi 0, %s42
      %s62 = sphi 0, %s62
      %s64 = sphi 0, %s62
      %s65 = sphi 0, %s64
      %s79 = sphi 0, %s65
      %s83 = sphi 0, %s83
      %s85 = sphi 0, %s83
      %s86 = sphi 0, %s85
      %s100 = sphi 0, %s86
      %s104 = sphi 0, %s104
      %s106 = sphi 0, %s104
      %s107 = sphi 0, %s106
      %s121 = sphi 0, %s107
      %s125 = sphi 0, %s125
      %s127 = sphi 0, %s125
      %s128 = sphi 0, %s127
      %s142 = sphi 0, %s128
      %s146 = sphi 0, %s146
      %s148 = sphi 0, %s146
      %s149 = sphi 0, %s148
      %s163 = sphi 0, %s149
      %s167 = sphi 0, %s167
      %s169 = sphi 0, %s167
      %s170 = sphi 0, %s169
      %s184 = sphi 0, %s170
      %s188 = sphi 0, %s188
      %s190 = sphi 0, %s188
      %s191 = sphi 0, %s190
      %s205 = sphi 0, %s191
      %s209 = sphi 0, %s209
      %s211 = sphi 0, %s209
      %s212 = sphi 0, %s211
      %s226 = sphi 0, %s212
      %s230 = sphi 0, %s230
      %s232 = sphi 0, %s230
      %s233 = sphi 0, %s232
      %s247 = sphi 0, %s233
      %s251 = sphi 0, %s251
      %s253 = sphi 0, %s251
      %s254 = sphi 0, %s253
      %s268 = sphi 0, %s254
      %s272 = sphi 0, %s272
      %s274 = sphi 0, %s272
      %s275 = sphi 0, %s274
      %s289 = sphi 0, %s275
      %s293 = sphi 0, %s293
      %s295 = sphi 0, %s293
      %s296 = sphi 0, %s295
      %s310 = sphi 0, %s296
      %s314 = sphi 0, %s314
      %s316 = sphi 0, %s314
      %s317 = sphi 0, %s316
      %s331 = sphi 0, %s317
      %s337 = sphi 0, %s339
      %s340 = sphi 0, %s337
      %s341 = sphi 0, %s340
      %s357 = sphi 0, %s341
    $region4: #{conv_comp_forward.1} parent=1 // loop_header_branch
      %31 = sbr.rel (%p29) target = $region8
    $region5: #{conv_comp_forward.1} parent=1 // loop_body
      %s33 = ssub.s32 %s28, 1
      %s34 = ssub.s32 %s28, 2
      %s35 = sadd.s32 %s28, 1
      %s36 = ssub.s32 %s28, %s35
      %p37 = scmp.eq.s32.totalorder %s36, 0
      %s39 = sadd.s32 %s38, 1
      %s40 = scalar_select %p37, %s38, %s39
      %p43 = pneg %p37
      %p44 = scmp.eq.s32.totalorder %s28, 1
      %p45 = por %p43, %p44
      %p46 = scmp.ne.s32.totalorder %s38, %s41
      %p47 = scmp.eq.s32.totalorder %s28, 0
      %p48 = por %p46, %p47
      %p49 = scmp.ne.s32.totalorder %s38, %s41
      %p50 = scmp.eq.s32.totalorder %s33, 1
      %p51 = por %p49, %p50
      %p52 = scmp.ne.s32.totalorder %s41, %s42
      %p53 = scmp.eq.s32.totalorder %s33, 0
      %p54 = por %p52, %p53
      %p55 = scmp.ne.s32.totalorder %s41, %s42
      %p56 = scmp.eq.s32.totalorder %s34, 1
      %p57 = por %p55, %p56
      %p59 = scmp.ne.s32.totalorder %s42, %s58
      %p60 = scmp.eq.s32.totalorder %s34, 0
      %p61 = por %p59, %p60
      %s63 = sadd.s32 %s62, 1
      %p66 = scmp.eq.s32.totalorder %s28, 1
      %p67 = scmp.ne.s32.totalorder %s62, %s64
      %p68 = scmp.eq.s32.totalorder %s28, 0
      %p69 = por %p67, %p68
      %p70 = scmp.ne.s32.totalorder %s62, %s64
      %p71 = scmp.eq.s32.totalorder %s33, 1
      %p72 = por %p70, %p71
      %p73 = scmp.ne.s32.totalorder %s64, %s65
      %p74 = scmp.eq.s32.totalorder %s33, 0
      %p75 = por %p73, %p74
      %p76 = scmp.ne.s32.totalorder %s64, %s65
      %p77 = scmp.eq.s32.totalorder %s34, 1
      %p78 = por %p76, %p77
      %p80 = scmp.ne.s32.totalorder %s65, %s79
      %p81 = scmp.eq.s32.totalorder %s34, 0
      %p82 = por %p80, %p81
      %s84 = sadd.s32 %s83, 1
      %p87 = scmp.eq.s32.totalorder %s28, 1
      %p88 = scmp.ne.s32.totalorder %s83, %s85
      %p89 = scmp.eq.s32.totalorder %s28, 0
      %p90 = por %p88, %p89
      %p91 = scmp.ne.s32.totalorder %s83, %s85
      %p92 = scmp.eq.s32.totalorder %s33, 1
      %p93 = por %p91, %p92
      %p94 = scmp.ne.s32.totalorder %s85, %s86
      %p95 = scmp.eq.s32.totalorder %s33, 0
      %p96 = por %p94, %p95
      %p97 = scmp.ne.s32.totalorder %s85, %s86
      %p98 = scmp.eq.s32.totalorder %s34, 1
      %p99 = por %p97, %p98
      %p101 = scmp.ne.s32.totalorder %s86, %s100
      %p102 = scmp.eq.s32.totalorder %s34, 0
      %p103 = por %p101, %p102
      %s105 = sadd.s32 %s104, 1
      %p108 = scmp.eq.s32.totalorder %s28, 1
      %p109 = scmp.ne.s32.totalorder %s104, %s106
      %p110 = scmp.eq.s32.totalorder %s28, 0
      %p111 = por %p109, %p110
      %p112 = scmp.ne.s32.totalorder %s104, %s106
      %p113 = scmp.eq.s32.totalorder %s33, 1
      %p114 = por %p112, %p113
      %p115 = scmp.ne.s32.totalorder %s106, %s107
      %p116 = scmp.eq.s32.totalorder %s33, 0
      %p117 = por %p115, %p116
      %p118 = scmp.ne.s32.totalorder %s106, %s107
      %p119 = scmp.eq.s32.totalorder %s34, 1
      %p120 = por %p118, %p119
      %p122 = scmp.ne.s32.totalorder %s107, %s121
      %p123 = scmp.eq.s32.totalorder %s34, 0
      %p124 = por %p122, %p123
      %s126 = sadd.s32 %s125, 1
      %p129 = scmp.eq.s32.totalorder %s28, 1
      %p130 = scmp.ne.s32.totalorder %s125, %s127
      %p131 = scmp.eq.s32.totalorder %s28, 0
      %p132 = por %p130, %p131
      %p133 = scmp.ne.s32.totalorder %s125, %s127
      %p134 = scmp.eq.s32.totalorder %s33, 1
      %p135 = por %p133, %p134
      %p136 = scmp.ne.s32.totalorder %s127, %s128
      %p137 = scmp.eq.s32.totalorder %s33, 0
      %p138 = por %p136, %p137
      %p139 = scmp.ne.s32.totalorder %s127, %s128
      %p140 = scmp.eq.s32.totalorder %s34, 1
      %p141 = por %p139, %p140
      %p143 = scmp.ne.s32.totalorder %s128, %s142
      %p144 = scmp.eq.s32.totalorder %s34, 0
      %p145 = por %p143, %p144
      %s147 = sadd.s32 %s146, 1
      %p150 = scmp.eq.s32.totalorder %s28, 1
      %p151 = scmp.ne.s32.totalorder %s146, %s148
      %p152 = scmp.eq.s32.totalorder %s28, 0
      %p153 = por %p151, %p152
      %p154 = scmp.ne.s32.totalorder %s146, %s148
      %p155 = scmp.eq.s32.totalorder %s33, 1
      %p156 = por %p154, %p155
      %p157 = scmp.ne.s32.totalorder %s148, %s149
      %p158 = scmp.eq.s32.totalorder %s33, 0
      %p159 = por %p157, %p158
      %p160 = scmp.ne.s32.totalorder %s148, %s149
      %p161 = scmp.eq.s32.totalorder %s34, 1
      %p162 = por %p160, %p161
      %p164 = scmp.ne.s32.totalorder %s149, %s163
      %p165 = scmp.eq.s32.totalorder %s34, 0
      %p166 = por %p164, %p165
      %s168 = sadd.s32 %s167, 1
      %p171 = scmp.eq.s32.totalorder %s28, 1
      %p172 = scmp.ne.s32.totalorder %s167, %s169
      %p173 = scmp.eq.s32.totalorder %s28, 0
      %p174 = por %p172, %p173
      %p175 = scmp.ne.s32.totalorder %s167, %s169
      %p176 = scmp.eq.s32.totalorder %s33, 1
      %p177 = por %p175, %p176
      %p178 = scmp.ne.s32.totalorder %s169, %s170
      %p179 = scmp.eq.s32.totalorder %s33, 0
      %p180 = por %p178, %p179
      %p181 = scmp.ne.s32.totalorder %s169, %s170
      %p182 = scmp.eq.s32.totalorder %s34, 1
      %p183 = por %p181, %p182
      %p185 = scmp.ne.s32.totalorder %s170, %s184
      %p186 = scmp.eq.s32.totalorder %s34, 0
      %p187 = por %p185, %p186
      %s189 = sadd.s32 %s188, 1
      %p192 = scmp.eq.s32.totalorder %s28, 1
      %p193 = scmp.ne.s32.totalorder %s188, %s190
      %p194 = scmp.eq.s32.totalorder %s28, 0
      %p195 = por %p193, %p194
      %p196 = scmp.ne.s32.totalorder %s188, %s190
      %p197 = scmp.eq.s32.totalorder %s33, 1
      %p198 = por %p196, %p197
      %p199 = scmp.ne.s32.totalorder %s190, %s191
      %p200 = scmp.eq.s32.totalorder %s33, 0
      %p201 = por %p199, %p200
      %p202 = scmp.ne.s32.totalorder %s190, %s191
      %p203 = scmp.eq.s32.totalorder %s34, 1
      %p204 = por %p202, %p203
      %p206 = scmp.ne.s32.totalorder %s191, %s205
      %p207 = scmp.eq.s32.totalorder %s34, 0
      %p208 = por %p206, %p207
      %s210 = sadd.s32 %s209, 1
      %p213 = scmp.eq.s32.totalorder %s28, 1
      %p214 = scmp.ne.s32.totalorder %s209, %s211
      %p215 = scmp.eq.s32.totalorder %s28, 0
      %p216 = por %p214, %p215
      %p217 = scmp.ne.s32.totalorder %s209, %s211
      %p218 = scmp.eq.s32.totalorder %s33, 1
      %p219 = por %p217, %p218
      %p220 = scmp.ne.s32.totalorder %s211, %s212
      %p221 = scmp.eq.s32.totalorder %s33, 0
      %p222 = por %p220, %p221
      %p223 = scmp.ne.s32.totalorder %s211, %s212
      %p224 = scmp.eq.s32.totalorder %s34, 1
      %p225 = por %p223, %p224
      %p227 = scmp.ne.s32.totalorder %s212, %s226
      %p228 = scmp.eq.s32.totalorder %s34, 0
      %p229 = por %p227, %p228
      %s231 = sadd.s32 %s230, 1
      %p234 = scmp.eq.s32.totalorder %s28, 1
      %p235 = scmp.ne.s32.totalorder %s230, %s232
      %p236 = scmp.eq.s32.totalorder %s28, 0
      %p237 = por %p235, %p236
      %p238 = scmp.ne.s32.totalorder %s230, %s232
      %p239 = scmp.eq.s32.totalorder %s33, 1
      %p240 = por %p238, %p239
      %p241 = scmp.ne.s32.totalorder %s232, %s233
      %p242 = scmp.eq.s32.totalorder %s33, 0
      %p243 = por %p241, %p242
      %p244 = scmp.ne.s32.totalorder %s232, %s233
      %p245 = scmp.eq.s32.totalorder %s34, 1
      %p246 = por %p244, %p245
      %p248 = scmp.ne.s32.totalorder %s233, %s247
      %p249 = scmp.eq.s32.totalorder %s34, 0
      %p250 = por %p248, %p249
      %s252 = sadd.s32 %s251, 1
      %p255 = scmp.eq.s32.totalorder %s28, 1
      %p256 = scmp.ne.s32.totalorder %s251, %s253
      %p257 = scmp.eq.s32.totalorder %s28, 0
      %p258 = por %p256, %p257
      %p259 = scmp.ne.s32.totalorder %s251, %s253
      %p260 = scmp.eq.s32.totalorder %s33, 1
      %p261 = por %p259, %p260
      %p262 = scmp.ne.s32.totalorder %s253, %s254
      %p263 = scmp.eq.s32.totalorder %s33, 0
      %p264 = por %p262, %p263
      %p265 = scmp.ne.s32.totalorder %s253, %s254
      %p266 = scmp.eq.s32.totalorder %s34, 1
      %p267 = por %p265, %p266
      %p269 = scmp.ne.s32.totalorder %s254, %s268
      %p270 = scmp.eq.s32.totalorder %s34, 0
      %p271 = por %p269, %p270
      %s273 = sadd.s32 %s272, 1
      %p276 = scmp.eq.s32.totalorder %s28, 1
      %p277 = scmp.ne.s32.totalorder %s272, %s274
      %p278 = scmp.eq.s32.totalorder %s28, 0
      %p279 = por %p277, %p278
      %p280 = scmp.ne.s32.totalorder %s272, %s274
      %p281 = scmp.eq.s32.totalorder %s33, 1
      %p282 = por %p280, %p281
      %p283 = scmp.ne.s32.totalorder %s274, %s275
      %p284 = scmp.eq.s32.totalorder %s33, 0
      %p285 = por %p283, %p284
      %p286 = scmp.ne.s32.totalorder %s274, %s275
      %p287 = scmp.eq.s32.totalorder %s34, 1
      %p288 = por %p286, %p287
      %p290 = scmp.ne.s32.totalorder %s275, %s289
      %p291 = scmp.eq.s32.totalorder %s34, 0
      %p292 = por %p290, %p291
      %s294 = sadd.s32 %s293, 1
      %p297 = scmp.eq.s32.totalorder %s28, 1
      %p298 = scmp.ne.s32.totalorder %s293, %s295
      %p299 = scmp.eq.s32.totalorder %s28, 0
      %p300 = por %p298, %p299
      %p301 = scmp.ne.s32.totalorder %s293, %s295
      %p302 = scmp.eq.s32.totalorder %s33, 1
      %p303 = por %p301, %p302
      %p304 = scmp.ne.s32.totalorder %s295, %s296
      %p305 = scmp.eq.s32.totalorder %s33, 0
      %p306 = por %p304, %p305
      %p307 = scmp.ne.s32.totalorder %s295, %s296
      %p308 = scmp.eq.s32.totalorder %s34, 1
      %p309 = por %p307, %p308
      %p311 = scmp.ne.s32.totalorder %s296, %s310
      %p312 = scmp.eq.s32.totalorder %s34, 0
      %p313 = por %p311, %p312
      %s315 = sadd.s32 %s314, 1
      %p318 = scmp.eq.s32.totalorder %s28, 1
      %p319 = scmp.ne.s32.totalorder %s314, %s316
      %p320 = scmp.eq.s32.totalorder %s28, 0
      %p321 = por %p319, %p320
      %p322 = scmp.ne.s32.totalorder %s314, %s316
      %p323 = scmp.eq.s32.totalorder %s33, 1
      %p324 = por %p322, %p323
      %p325 = scmp.ne.s32.totalorder %s316, %s317
      %p326 = scmp.eq.s32.totalorder %s33, 0
      %p327 = por %p325, %p326
      %p328 = scmp.ne.s32.totalorder %s316, %s317
      %p329 = scmp.eq.s32.totalorder %s34, 1
      %p330 = por %p328, %p329
      %p332 = scmp.ne.s32.totalorder %s317, %s331
      %p333 = scmp.eq.s32.totalorder %s34, 0
      %p334 = por %p332, %p333
      %s335 = ssub.s32 %s28, %s35
      %p336 = scmp.eq.s32.totalorder %s335, 0
      %s338 = sadd.s32 %s337, 1
      %s339 = scalar_select %p336, %s337, %s338
      %p342 = pneg %p336
      %p343 = scmp.eq.s32.totalorder %s28, 1
      %p344 = por %p342, %p343
      %p345 = scmp.ne.s32.totalorder %s337, %s340
      %p346 = scmp.eq.s32.totalorder %s28, 0
      %p347 = por %p345, %p346
      %p348 = scmp.ne.s32.totalorder %s337, %s340
      %p349 = scmp.eq.s32.totalorder %s33, 1
      %p350 = por %p348, %p349
      %p351 = scmp.ne.s32.totalorder %s340, %s341
      %p352 = scmp.eq.s32.totalorder %s33, 0
      %p353 = por %p351, %p352
      %p354 = scmp.ne.s32.totalorder %s340, %s341
      %p355 = scmp.eq.s32.totalorder %s34, 1
      %p356 = por %p354, %p355
      %p358 = scmp.ne.s32.totalorder %s341, %s357
      %p359 = scmp.eq.s32.totalorder %s34, 0
      %p360 = por %p358, %p359
      %p361 = scmp.le.s32.totalorder 1, %s28
      %p362 = scmp.lt.s32.totalorder %s28, 3
      %p363 = pnand %p361, %p362
      %p364 = pneg %p363
      // Predicated region
      $region9: #{conv_comp_forward.1} parent=5 // pred_check
        _
      $region10: #{conv_comp_forward.1} parent=5 // pred_check_branch
        %366 = sbr.rel (%p363) target = $region12
      $region11: #{conv_comp_forward.1} parent=5 // pred_region
        %s367 = ssub.s32 %s28, 1
        // Predicated region
        $region13: #{conv_comp_forward.1} parent=11 // pred_check
          %p368 = pneg %p75
        $region14: #{conv_comp_forward.1} parent=11 // pred_check_branch
          %370 = sbr.rel (%p368) target = $region16
        $region15: #{conv_comp_forward.1} parent=11 // pred_region
          %372 = vsyncadd [#allocation3], 0
          %s373 = sshll.u32 %s1, 4
          %s374 = int_to_ptr.hbm [resolvable:$true] %s373
          %s375 = sshll.u32 [#allocation2], 4
          %s376 = int_to_ptr.vmem [resolvable:$true] %s375
          %381 = dma.hbm_to_vmem [thread:$0]  %s374, 1536, %s376, [#allocation3], 768, 768, 48
        $region16: #{conv_comp_forward.1} parent=11 // pred_fallthru
          _
        // Predicated region
        $region17: #{conv_comp_forward.1} parent=11 // pred_check
          %p382 = pneg %p96
        $region18: #{conv_comp_forward.1} parent=11 // pred_check_branch
          %384 = sbr.rel (%p382) target = $region20
        $region19: #{conv_comp_forward.1} parent=11 // pred_region
          %386 = vsyncadd [#allocation6], 0
          %s387 = sshll.u32 %s2, 4
          %s388 = int_to_ptr.hbm [resolvable:$true] %s387
          %s389 = sshll.u32 [#allocation5], 4
          %s390 = int_to_ptr.vmem [resolvable:$true] %s389
          %395 = dma.hbm_to_vmem [thread:$0]  %s388, 1536, %s390, [#allocation6], 64, 64, 4
        $region20: #{conv_comp_forward.1} parent=11 // pred_fallthru
          _
        // Predicated region
        $region21: #{conv_comp_forward.1} parent=11 // pred_check
          %p396 = pneg %p117
        $region22: #{conv_comp_forward.1} parent=11 // pred_check_branch
          %398 = sbr.rel (%p396) target = $region24
        $region23: #{conv_comp_forward.1} parent=11 // pred_region
          _
        $region24: #{conv_comp_forward.1} parent=11 // pred_fallthru
          _
        // Predicated region
        $region25: #{conv_comp_forward.1} parent=11 // pred_check
          %p399 = pneg %p138
        $region26: #{conv_comp_forward.1} parent=11 // pred_check_branch
          %401 = sbr.rel (%p399) target = $region28
        $region27: #{conv_comp_forward.1} parent=11 // pred_region
          %403 = vsyncadd [#allocation6], 0
          %s405 = sshll.u32 %s4, 4
          %s406 = int_to_ptr.hbm [resolvable:$true] %s405
          %s407 = sshll.u32 [#allocation7], 4
          %s408 = int_to_ptr.vmem [resolvable:$true] %s407
          %410 = dma.hbm_to_vmem [thread:$0]  %s406, 64, %s408, [#allocation6]
        $region28: #{conv_comp_forward.1} parent=11 // pred_fallthru
          _
        // Predicated region
        $region29: #{conv_comp_forward.1} parent=11 // pred_check
          %p411 = pneg %p159
        $region30: #{conv_comp_forward.1} parent=11 // pred_check_branch
          %413 = sbr.rel (%p411) target = $region32
        $region31: #{conv_comp_forward.1} parent=11 // pred_region
          _
        $region32: #{conv_comp_forward.1} parent=11 // pred_fallthru
          _
        // Predicated region
        $region33: #{conv_comp_forward.1} parent=11 // pred_check
          %p414 = pneg %p180
        $region34: #{conv_comp_forward.1} parent=11 // pred_check_branch
          %416 = sbr.rel (%p414) target = $region36
        $region35: #{conv_comp_forward.1} parent=11 // pred_region
          %418 = vsyncadd [#allocation9], 0
          %s419 = sshll.u32 %s6, 4
          %s420 = int_to_ptr.hbm [resolvable:$true] %s419
          %s421 = sshll.u32 [#allocation8], 4
          %s422 = int_to_ptr.vmem [resolvable:$true] %s421
          %427 = dma.hbm_to_vmem [thread:$0]  %s420, 512, %s422, [#allocation9], 64, 64, 4
        $region36: #{conv_comp_forward.1} parent=11 // pred_fallthru
          _
        // Predicated region
        $region37: #{conv_comp_forward.1} parent=11 // pred_check
          %p428 = pneg %p201
        $region38: #{conv_comp_forward.1} parent=11 // pred_check_branch
          %430 = sbr.rel (%p428) target = $region40
        $region39: #{conv_comp_forward.1} parent=11 // pred_region
          _
        $region40: #{conv_comp_forward.1} parent=11 // pred_fallthru
          _
        // Predicated region
        $region41: #{conv_comp_forward.1} parent=11 // pred_check
          %p431 = pneg %p222
        $region42: #{conv_comp_forward.1} parent=11 // pred_check_branch
          %433 = sbr.rel (%p431) target = $region44
        $region43: #{conv_comp_forward.1} parent=11 // pred_region
          _
        $region44: #{conv_comp_forward.1} parent=11 // pred_fallthru
          _
        // Predicated region
        $region45: #{conv_comp_forward.1} parent=11 // pred_check
          %p434 = pneg %p243
        $region46: #{conv_comp_forward.1} parent=11 // pred_check_branch
          %436 = sbr.rel (%p434) target = $region48
        $region47: #{conv_comp_forward.1} parent=11 // pred_region
          %438 = vsyncadd [#allocation9], 0
          %s439 = sshll.u32 %s9, 4
          %s440 = int_to_ptr.hbm [resolvable:$true] %s439
          %s441 = sshll.u32 [#allocation10], 4
          %s442 = int_to_ptr.vmem [resolvable:$true] %s441
          %447 = dma.hbm_to_vmem [thread:$0]  %s440, 256, %s442, [#allocation9], 64, 64, 4
        $region48: #{conv_comp_forward.1} parent=11 // pred_fallthru
          _
        // Predicated region
        $region49: #{conv_comp_forward.1} parent=11 // pred_check
          %p448 = pneg %p264
        $region50: #{conv_comp_forward.1} parent=11 // pred_check_branch
          %450 = sbr.rel (%p448) target = $region52
        $region51: #{conv_comp_forward.1} parent=11 // pred_region
          %452 = vsyncadd [#allocation12], 0
          %s453 = sshll.u32 %s10, 4
          %s454 = int_to_ptr.hbm [resolvable:$true] %s453
          %s455 = sshll.u32 [#allocation11], 4
          %s456 = int_to_ptr.vmem [resolvable:$true] %s455
          %461 = dma.hbm_to_vmem [thread:$0]  %s454, 4096, %s456, [#allocation12], 64, 64, 4
        $region52: #{conv_comp_forward.1} parent=11 // pred_fallthru
          _
        // Predicated region
        $region53: #{conv_comp_forward.1} parent=11 // pred_check
          %p462 = pneg %p285
        $region54: #{conv_comp_forward.1} parent=11 // pred_check_branch
          %464 = sbr.rel (%p462) target = $region56
        $region55: #{conv_comp_forward.1} parent=11 // pred_region
          %466 = vsyncadd [#allocation12], 0
          %s468 = sshll.u32 %s11, 4
          %s469 = int_to_ptr.hbm [resolvable:$true] %s468
          %s470 = sshll.u32 [#allocation13], 4
          %s471 = int_to_ptr.vmem [resolvable:$true] %s470
          %473 = dma.hbm_to_vmem [thread:$0]  %s469, 16, %s471, [#allocation12]
        $region56: #{conv_comp_forward.1} parent=11 // pred_fallthru
          _
        // Predicated region
        $region57: #{conv_comp_forward.1} parent=11 // pred_check
          %p474 = pneg %p306
        $region58: #{conv_comp_forward.1} parent=11 // pred_check_branch
          %476 = sbr.rel (%p474) target = $region60
        $region59: #{conv_comp_forward.1} parent=11 // pred_region
          %478 = vsyncadd [#allocation15], 0
          %s479 = sshll.u32 %s12, 4
          %s480 = int_to_ptr.hbm [resolvable:$true] %s479
          %s481 = sshll.u32 [#allocation14], 4
          %s482 = int_to_ptr.vmem [resolvable:$true] %s481
          %487 = dma.hbm_to_vmem [thread:$0]  %s480, 1024, %s482, [#allocation15], 64, 64, 4
        $region60: #{conv_comp_forward.1} parent=11 // pred_fallthru
          _
        // Predicated region
        $region61: #{conv_comp_forward.1} parent=11 // pred_check
          %p488 = pneg %p327
        $region62: #{conv_comp_forward.1} parent=11 // pred_check_branch
          %490 = sbr.rel (%p488) target = $region64
        $region63: #{conv_comp_forward.1} parent=11 // pred_region
          %492 = vsyncadd [#allocation15], 0
          %s494 = sshll.u32 %s13, 4
          %s495 = int_to_ptr.hbm [resolvable:$true] %s494
          %s496 = sshll.u32 [#allocation16], 4
          %s497 = int_to_ptr.vmem [resolvable:$true] %s496
          %499 = dma.hbm_to_vmem [thread:$0]  %s495, 16, %s497, [#allocation15]
        $region64: #{conv_comp_forward.1} parent=11 // pred_fallthru
          _
      $region12: #{conv_comp_forward.1} parent=5 // pred_fallthru
        _
      %p500 = scmp.lt.s32.totalorder %s28, 2
      // Predicated region
      $region65: #{conv_comp_forward.1} parent=5 // pred_check
        %p501 = pneg %p500
      $region66: #{conv_comp_forward.1} parent=5 // pred_check_branch
        %503 = sbr.rel (%p501) target = $region68
      $region67: #{conv_comp_forward.1} parent=5 // pred_region
        // Predicated region
        $region69: #{conv_comp_forward.1} parent=67 // pred_check
          %p504 = pneg %p48
        $region70: #{conv_comp_forward.1} parent=67 // pred_check_branch
          %506 = sbr.rel (%p504) target = $region72
        $region71: #{conv_comp_forward.1} parent=67 // pred_region
          %s507 = smul.u32 16, %s28
          %p508 = scmp.lt.s32.totalorder %s507, 31
          %s509 = scalar_select %p508, %s507, 31
          %s510 = smul.addr %s509, 4
          %s511 = scalar_lea.vmem %s0, %s510
          %s512 = smul.u32 16, %s28
        $region72: #{conv_comp_forward.1} parent=67 // pred_fallthru
          _
      $region68: #{conv_comp_forward.1} parent=5 // pred_fallthru
        _
      %p513 = scmp.le.s32.totalorder 1, %s28
      %p514 = scmp.lt.s32.totalorder %s28, 3
      %p515 = pnand %p513, %p514
      %p516 = pneg %p515
      // Predicated region
      $region73: #{conv_comp_forward.1} parent=5 // pred_check
        _
      $region74: #{conv_comp_forward.1} parent=5 // pred_check_branch
        %518 = sbr.rel (%p515) target = $region76
      $region75: #{conv_comp_forward.1} parent=5 // pred_region
        %s519 = ssub.s32 %s28, 1
        // Predicated region
        $region77: #{conv_comp_forward.1} parent=75 // pred_check
          %p520 = pneg %p75
        $region78: #{conv_comp_forward.1} parent=75 // pred_check_branch
          %522 = sbr.rel (%p520) target = $region80
        $region79: #{conv_comp_forward.1} parent=75 // pred_region
          %524 = dma.done [#allocation3], 1536
        $region80: #{conv_comp_forward.1} parent=75 // pred_fallthru
          _
        // Predicated region
        $region81: #{conv_comp_forward.1} parent=75 // pred_check
          %p525 = pneg %p96
        $region82: #{conv_comp_forward.1} parent=75 // pred_check_branch
          %527 = sbr.rel (%p525) target = $region84
        $region83: #{conv_comp_forward.1} parent=75 // pred_region
          %529 = dma.done [#allocation6], 1536
        $region84: #{conv_comp_forward.1} parent=75 // pred_fallthru
          _
        // Predicated region
        $region85: #{conv_comp_forward.1} parent=75 // pred_check
          %p530 = pneg %p138
        $region86: #{conv_comp_forward.1} parent=75 // pred_check_branch
          %532 = sbr.rel (%p530) target = $region88
        $region87: #{conv_comp_forward.1} parent=75 // pred_region
          %534 = dma.done [#allocation6], 64
        $region88: #{conv_comp_forward.1} parent=75 // pred_fallthru
          _
        // Predicated region
        $region89: #{conv_comp_forward.1} parent=75 // pred_check
          %p535 = pneg %p180
        $region90: #{conv_comp_forward.1} parent=75 // pred_check_branch
          %537 = sbr.rel (%p535) target = $region92
        $region91: #{conv_comp_forward.1} parent=75 // pred_region
          %539 = dma.done [#allocation9], 512
        $region92: #{conv_comp_forward.1} parent=75 // pred_fallthru
          _
        // Predicated region
        $region93: #{conv_comp_forward.1} parent=75 // pred_check
          %p540 = pneg %p243
        $region94: #{conv_comp_forward.1} parent=75 // pred_check_branch
          %542 = sbr.rel (%p540) target = $region96
        $region95: #{conv_comp_forward.1} parent=75 // pred_region
          %544 = dma.done [#allocation9], 256
        $region96: #{conv_comp_forward.1} parent=75 // pred_fallthru
          _
        // Predicated region
        $region97: #{conv_comp_forward.1} parent=75 // pred_check
          %p545 = pneg %p264
        $region98: #{conv_comp_forward.1} parent=75 // pred_check_branch
          %547 = sbr.rel (%p545) target = $region100
        $region99: #{conv_comp_forward.1} parent=75 // pred_region
          %549 = dma.done [#allocation12], 4096
        $region100: #{conv_comp_forward.1} parent=75 // pred_fallthru
          _
        // Predicated region
        $region101: #{conv_comp_forward.1} parent=75 // pred_check
          %p550 = pneg %p285
        $region102: #{conv_comp_forward.1} parent=75 // pred_check_branch
          %552 = sbr.rel (%p550) target = $region104
        $region103: #{conv_comp_forward.1} parent=75 // pred_region
          %554 = dma.done [#allocation12], 16
        $region104: #{conv_comp_forward.1} parent=75 // pred_fallthru
          _
        // Predicated region
        $region105: #{conv_comp_forward.1} parent=75 // pred_check
          %p555 = pneg %p306
        $region106: #{conv_comp_forward.1} parent=75 // pred_check_branch
          %557 = sbr.rel (%p555) target = $region108
        $region107: #{conv_comp_forward.1} parent=75 // pred_region
          %559 = dma.done [#allocation15], 1024
        $region108: #{conv_comp_forward.1} parent=75 // pred_fallthru
          _
        // Predicated region
        $region109: #{conv_comp_forward.1} parent=75 // pred_check
          %p560 = pneg %p327
        $region110: #{conv_comp_forward.1} parent=75 // pred_check_branch
          %562 = sbr.rel (%p560) target = $region112
        $region111: #{conv_comp_forward.1} parent=75 // pred_region
          %564 = dma.done [#allocation15], 16
        $region112: #{conv_comp_forward.1} parent=75 // pred_fallthru
          _
        %s565 = smul.u32 16, %s33
        %p566 = scmp.lt.s32.totalorder %s565, 31
        %s567 = scalar_select %p566, %s565, 31
        %s568 = smul.addr %s567, 4
        %s569 = scalar_lea.vmem %s0, %s568
        %p570 = pneg %p54
        %p571 = pneg %p51
        %p572 = pneg %p75
        %p573 = pneg %p72
        %p574 = pneg %p96
        %p575 = pneg %p93
        %p576 = pneg %p117
        %p577 = pneg %p114
        %p578 = pneg %p138
        %p579 = pneg %p135
        %p580 = pneg %p159
        %p581 = pneg %p156
        %p582 = pneg %p180
        %p583 = pneg %p177
        %p584 = pneg %p201
        %p585 = pneg %p198
        %p586 = pneg %p222
        %p587 = pneg %p219
        %p588 = pneg %p243
        %p589 = pneg %p240
        %p590 = pneg %p264
        %p591 = pneg %p261
        %p592 = pneg %p285
        %p593 = pneg %p282
        %p594 = pneg %p306
        %p595 = pneg %p303
        %p596 = pneg %p327
        %p597 = pneg %p324
        %p598 = pneg %p353
        %p599 = pneg %p350
        %s600 = sand.u32 %s340, 1
        %s601 = scalar_lea.sflag [#allocation4], %s600
        %s602 = sand.u32 %s340, 1
        %s603 = smul.addr %s602, 8
        %s604 = scalar_lea.vmem [#allocation17], %s603
        %s605 = smul.u32 16, %s33
        %p606 = scmp.lt.s32.totalorder %s605, 31
        %s607 = scalar_select %p606, %s605, 31
        %s608 = smul.addr %s607, 4
        %s609 = scalar_lea.vmem %s0, %s608
        %s610 = smul.u32 16, %s33
        %v612 = vld [vmem:[%s609] sm:$0xf]
        %v613 = vld [vmem:[%s609 + $0x4] sm:$0xf]
        %v614 = vld [vmem:[%s609 + $0x8] sm:$0xf]
        %v615 = vld [vmem:[%s609 + $0xc] sm:$0xf]
        %v616 = vld [vmem:[%s609 + $0x10] sm:$0xf]
        %v617 = vld [vmem:[%s609 + $0x14] sm:$0xf]
        %v618 = vld [vmem:[%s609 + $0x18] sm:$0xf]
        %v619 = vld [vmem:[%s609 + $0x1c] sm:$0xf]
        %v620 = vld [vmem:[%s609 + $0x20] sm:$0xf]
        %v621 = vld [vmem:[%s609 + $0x24] sm:$0xf]
        %v622 = vld [vmem:[%s609 + $0x28] sm:$0xf]
        %v623 = vld [vmem:[%s609 + $0x2c] sm:$0xf]
        %v624 = vld [vmem:[%s609 + $0x30] sm:$0xf]
        %v625 = vld [vmem:[%s609 + $0x34] sm:$0xf]
        %v626 = vld [vmem:[%s609 + $0x38] sm:$0xf]
        %v627 = vld [vmem:[%s609 + $0x3c] sm:$0xf]
        %v628 = vld [vmem:[#allocation2] sm:$0xff]
        %v629 = vld [vmem:[#allocation2 + $0x8] sm:$0xff]
        %v630 = vld [vmem:[#allocation2 + $0x10] sm:$0xff]
        %v631 = vld [vmem:[#allocation2 + $0x18] sm:$0xff]
        %v632 = vld [vmem:[#allocation2 + $0x20] sm:$0xff]
        %v633 = vld [vmem:[#allocation2 + $0x28] sm:$0xff]
        %v634 = vld [vmem:[#allocation2 + $0x30] sm:$0xff]
        %v635 = vld [vmem:[#allocation2 + $0x38] sm:$0xff]
        %v636 = vld [vmem:[#allocation2 + $0x40] sm:$0xff]
        %v637 = vld [vmem:[#allocation2 + $0x48] sm:$0xff]
        %v638 = vld [vmem:[#allocation2 + $0x50] sm:$0xff]
        %v639 = vld [vmem:[#allocation2 + $0x58] sm:$0xff]
        %v656 = vunpack.c.l.b16 %v612
        %v657 = vunpack.c.l.b16 %v613
        %v658 = vunpack.c.l.b16 %v614
        %v659 = vunpack.c.l.b16 %v615
        %v660 = vunpack.c.l.b16 %v616
        %v661 = vunpack.c.l.b16 %v617
        %v662 = vunpack.c.l.b16 %v618
        %v663 = vunpack.c.l.b16 %v619
        %v664 = vunpack.c.l.b16 %v620
        %v665 = vunpack.c.l.b16 %v621
        %v666 = vunpack.c.l.b16 %v622
        %v667 = vunpack.c.l.b16 %v623
        %v668 = vunpack.c.l.b16 %v624
        %v669 = vunpack.c.l.b16 %v625
        %v670 = vunpack.c.l.b16 %v626
        %v671 = vunpack.c.l.b16 %v627
        %v672 = vpack.c.b16 %v657, %v656
        %v673 = vpack.c.b16 %v659, %v658
        %v674 = vpack.c.b16 %v661, %v660
        %v675 = vpack.c.b16 %v663, %v662
        %v676 = vpack.c.b16 %v665, %v664
        %v677 = vpack.c.b16 %v667, %v666
        %v678 = vpack.c.b16 %v669, %v668
        %v679 = vpack.c.b16 %v671, %v670
        %v692 = vunpack.c.l.b16 %v628
        %v693 = vunpack.c.h.b16 %v628
        %v694 = vunpack.c.l.b16 %v629
        %v695 = vunpack.c.h.b16 %v629
        %v696 = vunpack.c.l.b16 %v630
        %v697 = vunpack.c.h.b16 %v630
        %v698 = vunpack.c.l.b16 %v631
        %v699 = vunpack.c.h.b16 %v631
        %v700 = vunpack.c.l.b16 %v632
        %v701 = vunpack.c.h.b16 %v632
        %v702 = vunpack.c.l.b16 %v633
        %v703 = vunpack.c.h.b16 %v633
        %v704 = vunpack.c.l.b16 %v634
        %v705 = vunpack.c.h.b16 %v634
        %v706 = vunpack.c.l.b16 %v635
        %v707 = vunpack.c.h.b16 %v635
        %v708 = vunpack.c.l.b16 %v636
        %v709 = vunpack.c.h.b16 %v636
        %v710 = vunpack.c.l.b16 %v637
        %v711 = vunpack.c.h.b16 %v637
        %v712 = vunpack.c.l.b16 %v638
        %v713 = vunpack.c.h.b16 %v638
        %v714 = vunpack.c.l.b16 %v639
        %v715 = vunpack.c.h.b16 %v639
        %v716 = vpack.c.b16 %v704, %v692
        %v717 = vpack.c.b16 %v705, %v693
        %v718 = vpack.c.b16 %v706, %v694
        %v719 = vpack.c.b16 %v707, %v695
        %v720 = vpack.c.b16 %v708, %v696
        %v721 = vpack.c.b16 %v709, %v697
        %v722 = vpack.c.b16 %v710, %v698
        %v723 = vpack.c.b16 %v711, %v699
        %v724 = vpack.c.b16 %v712, %v700
        %v725 = vpack.c.b16 %v713, %v701
        %v726 = vpack.c.b16 %v714, %v702
        %v727 = vpack.c.b16 %v715, %v703
        %vm740 = vcmask 130048
        %v742 = vsel %vm740, %v672, 0
        %v745 = vsel %vm740, %v673, 0
        %v748 = vsel %vm740, %v674, 0
        %v751 = vsel %vm740, %v675, 0
        %v754 = vsel %vm740, %v676, 0
        %v757 = vsel %vm740, %v677, 0
        %v760 = vsel %vm740, %v678, 0
        %v763 = vsel %vm740, %v679, 0
        %765 = vmatpush.bf16.msra.mxu0 0
        %766 = vmatpush.bf16.msra.mxu0 0
        %767 = vmatpush.bf16.msra.mxu0 0
        %768 = vmatpush.bf16.msra.mxu0 0
        %769 = vmatpush.bf16.msra.mxu0 0
        %770 = vmatpush.bf16.msra.mxu0 0
        %771 = vmatpush.bf16.msra.mxu0 0
        %772 = vmatpush.bf16.msra.mxu0 %v716
        %773 = vmatmul.bf16.gmra.mxu0 %v742
        %v774 = vpop.f32.mrf.mxu0
        %v775 = vadd.f32 0.0, %v774
        %v776 = vpop.f32.mrf.mxu0
        %v777 = vadd.f32 0.0, %v776
        %778 = vmatmul.bf16.gmra.mxu0 %v745
        %v779 = vpop.f32.mrf.mxu0
        %v780 = vadd.f32 0.0, %v779
        %v781 = vpop.f32.mrf.mxu0
        %v782 = vadd.f32 0.0, %v781
        %783 = vmatmul.bf16.gmra.mxu0 %v748
        %v784 = vpop.f32.mrf.mxu0
        %v785 = vadd.f32 0.0, %v784
        %v786 = vpop.f32.mrf.mxu0
        %v787 = vadd.f32 0.0, %v786
        %788 = vmatmul.bf16.gmra.mxu0 %v751
        %v789 = vpop.f32.mrf.mxu0
        %v790 = vadd.f32 0.0, %v789
        %v791 = vpop.f32.mrf.mxu0
        %v792 = vadd.f32 0.0, %v791
        %793 = vmatmul.bf16.gmra.mxu0 %v754
        %v794 = vpop.f32.mrf.mxu0
        %v795 = vadd.f32 0.0, %v794
        %v796 = vpop.f32.mrf.mxu0
        %v797 = vadd.f32 0.0, %v796
        %798 = vmatmul.bf16.gmra.mxu0 %v757
        %v799 = vpop.f32.mrf.mxu0
        %v800 = vadd.f32 0.0, %v799
        %v801 = vpop.f32.mrf.mxu0
        %v802 = vadd.f32 0.0, %v801
        %803 = vmatmul.bf16.gmra.mxu0 %v760
        %v804 = vpop.f32.mrf.mxu0
        %v805 = vadd.f32 0.0, %v804
        %v806 = vpop.f32.mrf.mxu0
        %v807 = vadd.f32 0.0, %v806
        %808 = vmatmul.bf16.gmra.mxu0 %v763
        %v809 = vpop.f32.mrf.mxu0
        %v810 = vadd.f32 0.0, %v809
        %v811 = vpop.f32.mrf.mxu0
        %v812 = vadd.f32 0.0, %v811
        %813 = vdwg.mxu0
        %814 = vmatpush.bf16.msra.mxu0 0
        %815 = vmatpush.bf16.msra.mxu0 0
        %816 = vmatpush.bf16.msra.mxu0 0
        %817 = vmatpush.bf16.msra.mxu0 0
        %818 = vmatpush.bf16.msra.mxu0 0
        %819 = vmatpush.bf16.msra.mxu0 0
        %820 = vmatpush.bf16.msra.mxu0 0
        %821 = vmatpush.bf16.msra.mxu0 %v717
        %822 = vmatmul.bf16.gmra.mxu0 %v742
        %v823 = vpop.f32.mrf.mxu0
        %v824 = vadd.f32 0.0, %v823
        %v825 = vpop.f32.mrf.mxu0
        %v826 = vadd.f32 0.0, %v825
        %827 = vmatmul.bf16.gmra.mxu0 %v745
        %v828 = vpop.f32.mrf.mxu0
        %v829 = vadd.f32 0.0, %v828
        %v830 = vpop.f32.mrf.mxu0
        %v831 = vadd.f32 0.0, %v830
        %832 = vmatmul.bf16.gmra.mxu0 %v748
        %v833 = vpop.f32.mrf.mxu0
        %v834 = vadd.f32 0.0, %v833
        %v835 = vpop.f32.mrf.mxu0
        %v836 = vadd.f32 0.0, %v835
        %837 = vmatmul.bf16.gmra.mxu0 %v751
        %v838 = vpop.f32.mrf.mxu0
        %v839 = vadd.f32 0.0, %v838
        %v840 = vpop.f32.mrf.mxu0
        %v841 = vadd.f32 0.0, %v840
        %842 = vmatmul.bf16.gmra.mxu0 %v754
        %v843 = vpop.f32.mrf.mxu0
        %v844 = vadd.f32 0.0, %v843
        %v845 = vpop.f32.mrf.mxu0
        %v846 = vadd.f32 0.0, %v845
        %847 = vmatmul.bf16.gmra.mxu0 %v757
        %v848 = vpop.f32.mrf.mxu0
        %v849 = vadd.f32 0.0, %v848
        %v850 = vpop.f32.mrf.mxu0
        %v851 = vadd.f32 0.0, %v850
        %852 = vmatmul.bf16.gmra.mxu0 %v760
        %v853 = vpop.f32.mrf.mxu0
        %v854 = vadd.f32 0.0, %v853
        %v855 = vpop.f32.mrf.mxu0
        %v856 = vadd.f32 0.0, %v855
        %857 = vmatmul.bf16.gmra.mxu0 %v763
        %v858 = vpop.f32.mrf.mxu0
        %v859 = vadd.f32 0.0, %v858
        %v860 = vpop.f32.mrf.mxu0
        %v861 = vadd.f32 0.0, %v860
        %862 = vdwg.mxu0
        %863 = vmatpush.bf16.msra.mxu0 0
        %864 = vmatpush.bf16.msra.mxu0 0
        %865 = vmatpush.bf16.msra.mxu0 0
        %866 = vmatpush.bf16.msra.mxu0 0
        %867 = vmatpush.bf16.msra.mxu0 0
        %868 = vmatpush.bf16.msra.mxu0 0
        %869 = vmatpush.bf16.msra.mxu0 0
        %870 = vmatpush.bf16.msra.mxu0 %v718
        %871 = vmatmul.bf16.gmra.mxu0 %v742
        %v872 = vpop.f32.mrf.mxu0
        %v873 = vadd.f32 0.0, %v872
        %v874 = vpop.f32.mrf.mxu0
        %v875 = vadd.f32 0.0, %v874
        %876 = vmatmul.bf16.gmra.mxu0 %v745
        %v877 = vpop.f32.mrf.mxu0
        %v878 = vadd.f32 0.0, %v877
        %v879 = vpop.f32.mrf.mxu0
        %v880 = vadd.f32 0.0, %v879
        %881 = vmatmul.bf16.gmra.mxu0 %v748
        %v882 = vpop.f32.mrf.mxu0
        %v883 = vadd.f32 0.0, %v882
        %v884 = vpop.f32.mrf.mxu0
        %v885 = vadd.f32 0.0, %v884
        %886 = vmatmul.bf16.gmra.mxu0 %v751
        %v887 = vpop.f32.mrf.mxu0
        %v888 = vadd.f32 0.0, %v887
        %v889 = vpop.f32.mrf.mxu0
        %v890 = vadd.f32 0.0, %v889
        %891 = vmatmul.bf16.gmra.mxu0 %v754
        %v892 = vpop.f32.mrf.mxu0
        %v893 = vadd.f32 0.0, %v892
        %v894 = vpop.f32.mrf.mxu0
        %v895 = vadd.f32 0.0, %v894
        %896 = vmatmul.bf16.gmra.mxu0 %v757
        %v897 = vpop.f32.mrf.mxu0
        %v898 = vadd.f32 0.0, %v897
        %v899 = vpop.f32.mrf.mxu0
        %v900 = vadd.f32 0.0, %v899
        %901 = vmatmul.bf16.gmra.mxu0 %v760
        %v902 = vpop.f32.mrf.mxu0
        %v903 = vadd.f32 0.0, %v902
        %v904 = vpop.f32.mrf.mxu0
        %v905 = vadd.f32 0.0, %v904
        %906 = vmatmul.bf16.gmra.mxu0 %v763
        %v907 = vpop.f32.mrf.mxu0
        %v908 = vadd.f32 0.0, %v907
        %v909 = vpop.f32.mrf.mxu0
        %v910 = vadd.f32 0.0, %v909
        %911 = vdwg.mxu0
        %912 = vmatpush.bf16.msra.mxu0 0
        %913 = vmatpush.bf16.msra.mxu0 0
        %914 = vmatpush.bf16.msra.mxu0 0
        %915 = vmatpush.bf16.msra.mxu0 0
        %916 = vmatpush.bf16.msra.mxu0 0
        %917 = vmatpush.bf16.msra.mxu0 0
        %918 = vmatpush.bf16.msra.mxu0 0
        %919 = vmatpush.bf16.msra.mxu0 %v719
        %920 = vmatmul.bf16.gmra.mxu0 %v742
        %v921 = vpop.f32.mrf.mxu0
        %v922 = vadd.f32 0.0, %v921
        %v923 = vpop.f32.mrf.mxu0
        %v924 = vadd.f32 0.0, %v923
        %925 = vmatmul.bf16.gmra.mxu0 %v745
        %v926 = vpop.f32.mrf.mxu0
        %v927 = vadd.f32 0.0, %v926
        %v928 = vpop.f32.mrf.mxu0
        %v929 = vadd.f32 0.0, %v928
        %930 = vmatmul.bf16.gmra.mxu0 %v748
        %v931 = vpop.f32.mrf.mxu0
        %v932 = vadd.f32 0.0, %v931
        %v933 = vpop.f32.mrf.mxu0
        %v934 = vadd.f32 0.0, %v933
        %935 = vmatmul.bf16.gmra.mxu0 %v751
        %v936 = vpop.f32.mrf.mxu0
        %v937 = vadd.f32 0.0, %v936
        %v938 = vpop.f32.mrf.mxu0
        %v939 = vadd.f32 0.0, %v938
        %940 = vmatmul.bf16.gmra.mxu0 %v754
        %v941 = vpop.f32.mrf.mxu0
        %v942 = vadd.f32 0.0, %v941
        %v943 = vpop.f32.mrf.mxu0
        %v944 = vadd.f32 0.0, %v943
        %945 = vmatmul.bf16.gmra.mxu0 %v757
        %v946 = vpop.f32.mrf.mxu0
        %v947 = vadd.f32 0.0, %v946
        %v948 = vpop.f32.mrf.mxu0
        %v949 = vadd.f32 0.0, %v948
        %950 = vmatmul.bf16.gmra.mxu0 %v760
        %v951 = vpop.f32.mrf.mxu0
        %v952 = vadd.f32 0.0, %v951
        %v953 = vpop.f32.mrf.mxu0
        %v954 = vadd.f32 0.0, %v953
        %955 = vmatmul.bf16.gmra.mxu0 %v763
        %v956 = vpop.f32.mrf.mxu0
        %v957 = vadd.f32 0.0, %v956
        %v958 = vpop.f32.mrf.mxu0
        %v959 = vadd.f32 0.0, %v958
        %960 = vdwg.mxu0
        %961 = vmatpush.bf16.msra.mxu0 0
        %962 = vmatpush.bf16.msra.mxu0 0
        %963 = vmatpush.bf16.msra.mxu0 0
        %964 = vmatpush.bf16.msra.mxu0 0
        %965 = vmatpush.bf16.msra.mxu0 0
        %966 = vmatpush.bf16.msra.mxu0 0
        %967 = vmatpush.bf16.msra.mxu0 0
        %968 = vmatpush.bf16.msra.mxu0 %v720
        %969 = vmatmul.bf16.gmra.mxu0 %v742
        %v970 = vpop.f32.mrf.mxu0
        %v971 = vadd.f32 0.0, %v970
        %v972 = vpop.f32.mrf.mxu0
        %v973 = vadd.f32 0.0, %v972
        %974 = vmatmul.bf16.gmra.mxu0 %v745
        %v975 = vpop.f32.mrf.mxu0
        %v976 = vadd.f32 0.0, %v975
        %v977 = vpop.f32.mrf.mxu0
        %v978 = vadd.f32 0.0, %v977
        %979 = vmatmul.bf16.gmra.mxu0 %v748
        %v980 = vpop.f32.mrf.mxu0
        %v981 = vadd.f32 0.0, %v980
        %v982 = vpop.f32.mrf.mxu0
        %v983 = vadd.f32 0.0, %v982
        %984 = vmatmul.bf16.gmra.mxu0 %v751
        %v985 = vpop.f32.mrf.mxu0
        %v986 = vadd.f32 0.0, %v985
        %v987 = vpop.f32.mrf.mxu0
        %v988 = vadd.f32 0.0, %v987
        %989 = vmatmul.bf16.gmra.mxu0 %v754
        %v990 = vpop.f32.mrf.mxu0
        %v991 = vadd.f32 0.0, %v990
        %v992 = vpop.f32.mrf.mxu0
        %v993 = vadd.f32 0.0, %v992
        %994 = vmatmul.bf16.gmra.mxu0 %v757
        %v995 = vpop.f32.mrf.mxu0
        %v996 = vadd.f32 0.0, %v995
        %v997 = vpop.f32.mrf.mxu0
        %v998 = vadd.f32 0.0, %v997
        %999 = vmatmul.bf16.gmra.mxu0 %v760
        %v1000 = vpop.f32.mrf.mxu0
        %v1001 = vadd.f32 0.0, %v1000
        %v1002 = vpop.f32.mrf.mxu0
        %v1003 = vadd.f32 0.0, %v1002
        %1004 = vmatmul.bf16.gmra.mxu0 %v763
        %v1005 = vpop.f32.mrf.mxu0
        %v1006 = vadd.f32 0.0, %v1005
        %v1007 = vpop.f32.mrf.mxu0
        %v1008 = vadd.f32 0.0, %v1007
        %1009 = vdwg.mxu0
        %1010 = vmatpush.bf16.msra.mxu0 0
        %1011 = vmatpush.bf16.msra.mxu0 0
        %1012 = vmatpush.bf16.msra.mxu0 0
        %1013 = vmatpush.bf16.msra.mxu0 0
        %1014 = vmatpush.bf16.msra.mxu0 0
        %1015 = vmatpush.bf16.msra.mxu0 0
        %1016 = vmatpush.bf16.msra.mxu0 0
        %1017 = vmatpush.bf16.msra.mxu0 %v721
        %1018 = vmatmul.bf16.gmra.mxu0 %v742
        %v1019 = vpop.f32.mrf.mxu0
        %v1020 = vadd.f32 0.0, %v1019
        %v1021 = vpop.f32.mrf.mxu0
        %v1022 = vadd.f32 0.0, %v1021
        %1023 = vmatmul.bf16.gmra.mxu0 %v745
        %v1024 = vpop.f32.mrf.mxu0
        %v1025 = vadd.f32 0.0, %v1024
        %v1026 = vpop.f32.mrf.mxu0
        %v1027 = vadd.f32 0.0, %v1026
        %1028 = vmatmul.bf16.gmra.mxu0 %v748
        %v1029 = vpop.f32.mrf.mxu0
        %v1030 = vadd.f32 0.0, %v1029
        %v1031 = vpop.f32.mrf.mxu0
        %v1032 = vadd.f32 0.0, %v1031
        %1033 = vmatmul.bf16.gmra.mxu0 %v751
        %v1034 = vpop.f32.mrf.mxu0
        %v1035 = vadd.f32 0.0, %v1034
        %v1036 = vpop.f32.mrf.mxu0
        %v1037 = vadd.f32 0.0, %v1036
        %1038 = vmatmul.bf16.gmra.mxu0 %v754
        %v1039 = vpop.f32.mrf.mxu0
        %v1040 = vadd.f32 0.0, %v1039
        %v1041 = vpop.f32.mrf.mxu0
        %v1042 = vadd.f32 0.0, %v1041
        %1043 = vmatmul.bf16.gmra.mxu0 %v757
        %v1044 = vpop.f32.mrf.mxu0
        %v1045 = vadd.f32 0.0, %v1044
        %v1046 = vpop.f32.mrf.mxu0
        %v1047 = vadd.f32 0.0, %v1046
        %1048 = vmatmul.bf16.gmra.mxu0 %v760
        %v1049 = vpop.f32.mrf.mxu0
        %v1050 = vadd.f32 0.0, %v1049
        %v1051 = vpop.f32.mrf.mxu0
        %v1052 = vadd.f32 0.0, %v1051
        %1053 = vmatmul.bf16.gmra.mxu0 %v763
        %v1054 = vpop.f32.mrf.mxu0
        %v1055 = vadd.f32 0.0, %v1054
        %v1056 = vpop.f32.mrf.mxu0
        %v1057 = vadd.f32 0.0, %v1056
        %1058 = vdwg.mxu0
        %1059 = vmatpush.bf16.msra.mxu0 0
        %1060 = vmatpush.bf16.msra.mxu0 0
        %1061 = vmatpush.bf16.msra.mxu0 0
        %1062 = vmatpush.bf16.msra.mxu0 0
        %1063 = vmatpush.bf16.msra.mxu0 0
        %1064 = vmatpush.bf16.msra.mxu0 0
        %1065 = vmatpush.bf16.msra.mxu0 0
        %1066 = vmatpush.bf16.msra.mxu0 %v722
        %1067 = vmatmul.bf16.gmra.mxu0 %v742
        %v1068 = vpop.f32.mrf.mxu0
        %v1069 = vadd.f32 0.0, %v1068
        %v1070 = vpop.f32.mrf.mxu0
        %v1071 = vadd.f32 0.0, %v1070
        %1072 = vmatmul.bf16.gmra.mxu0 %v745
        %v1073 = vpop.f32.mrf.mxu0
        %v1074 = vadd.f32 0.0, %v1073
        %v1075 = vpop.f32.mrf.mxu0
        %v1076 = vadd.f32 0.0, %v1075
        %1077 = vmatmul.bf16.gmra.mxu0 %v748
        %v1078 = vpop.f32.mrf.mxu0
        %v1079 = vadd.f32 0.0, %v1078
        %v1080 = vpop.f32.mrf.mxu0
        %v1081 = vadd.f32 0.0, %v1080
        %1082 = vmatmul.bf16.gmra.mxu0 %v751
        %v1083 = vpop.f32.mrf.mxu0
        %v1084 = vadd.f32 0.0, %v1083
        %v1085 = vpop.f32.mrf.mxu0
        %v1086 = vadd.f32 0.0, %v1085
        %1087 = vmatmul.bf16.gmra.mxu0 %v754
        %v1088 = vpop.f32.mrf.mxu0
        %v1089 = vadd.f32 0.0, %v1088
        %v1090 = vpop.f32.mrf.mxu0
        %v1091 = vadd.f32 0.0, %v1090
        %1092 = vmatmul.bf16.gmra.mxu0 %v757
        %v1093 = vpop.f32.mrf.mxu0
        %v1094 = vadd.f32 0.0, %v1093
        %v1095 = vpop.f32.mrf.mxu0
        %v1096 = vadd.f32 0.0, %v1095
        %1097 = vmatmul.bf16.gmra.mxu0 %v760
        %v1098 = vpop.f32.mrf.mxu0
        %v1099 = vadd.f32 0.0, %v1098
        %v1100 = vpop.f32.mrf.mxu0
        %v1101 = vadd.f32 0.0, %v1100
        %1102 = vmatmul.bf16.gmra.mxu0 %v763
        %v1103 = vpop.f32.mrf.mxu0
        %v1104 = vadd.f32 0.0, %v1103
        %v1105 = vpop.f32.mrf.mxu0
        %v1106 = vadd.f32 0.0, %v1105
        %1107 = vdwg.mxu0
        %1108 = vmatpush.bf16.msra.mxu0 0
        %1109 = vmatpush.bf16.msra.mxu0 0
        %1110 = vmatpush.bf16.msra.mxu0 0
        %1111 = vmatpush.bf16.msra.mxu0 0
        %1112 = vmatpush.bf16.msra.mxu0 0
        %1113 = vmatpush.bf16.msra.mxu0 0
        %1114 = vmatpush.bf16.msra.mxu0 0
        %1115 = vmatpush.bf16.msra.mxu0 %v723
        %1116 = vmatmul.bf16.gmra.mxu0 %v742
        %v1117 = vpop.f32.mrf.mxu0
        %v1118 = vadd.f32 0.0, %v1117
        %v1119 = vpop.f32.mrf.mxu0
        %v1120 = vadd.f32 0.0, %v1119
        %1121 = vmatmul.bf16.gmra.mxu0 %v745
        %v1122 = vpop.f32.mrf.mxu0
        %v1123 = vadd.f32 0.0, %v1122
        %v1124 = vpop.f32.mrf.mxu0
        %v1125 = vadd.f32 0.0, %v1124
        %1126 = vmatmul.bf16.gmra.mxu0 %v748
        %v1127 = vpop.f32.mrf.mxu0
        %v1128 = vadd.f32 0.0, %v1127
        %v1129 = vpop.f32.mrf.mxu0
        %v1130 = vadd.f32 0.0, %v1129
        %1131 = vmatmul.bf16.gmra.mxu0 %v751
        %v1132 = vpop.f32.mrf.mxu0
        %v1133 = vadd.f32 0.0, %v1132
        %v1134 = vpop.f32.mrf.mxu0
        %v1135 = vadd.f32 0.0, %v1134
        %1136 = vmatmul.bf16.gmra.mxu0 %v754
        %v1137 = vpop.f32.mrf.mxu0
        %v1138 = vadd.f32 0.0, %v1137
        %v1139 = vpop.f32.mrf.mxu0
        %v1140 = vadd.f32 0.0, %v1139
        %1141 = vmatmul.bf16.gmra.mxu0 %v757
        %v1142 = vpop.f32.mrf.mxu0
        %v1143 = vadd.f32 0.0, %v1142
        %v1144 = vpop.f32.mrf.mxu0
        %v1145 = vadd.f32 0.0, %v1144
        %1146 = vmatmul.bf16.gmra.mxu0 %v760
        %v1147 = vpop.f32.mrf.mxu0
        %v1148 = vadd.f32 0.0, %v1147
        %v1149 = vpop.f32.mrf.mxu0
        %v1150 = vadd.f32 0.0, %v1149
        %1151 = vmatmul.bf16.gmra.mxu0 %v763
        %v1152 = vpop.f32.mrf.mxu0
        %v1153 = vadd.f32 0.0, %v1152
        %v1154 = vpop.f32.mrf.mxu0
        %v1155 = vadd.f32 0.0, %v1154
        %1156 = vdwg.mxu0
        %1157 = vmatpush.bf16.msra.mxu0 0
        %1158 = vmatpush.bf16.msra.mxu0 0
        %1159 = vmatpush.bf16.msra.mxu0 0
        %1160 = vmatpush.bf16.msra.mxu0 0
        %1161 = vmatpush.bf16.msra.mxu0 0
        %1162 = vmatpush.bf16.msra.mxu0 0
        %1163 = vmatpush.bf16.msra.mxu0 0
        %1164 = vmatpush.bf16.msra.mxu0 %v724
        %1165 = vmatmul.bf16.gmra.mxu0 %v742
        %v1166 = vpop.f32.mrf.mxu0
        %v1167 = vadd.f32 0.0, %v1166
        %v1168 = vpop.f32.mrf.mxu0
        %v1169 = vadd.f32 0.0, %v1168
        %1170 = vmatmul.bf16.gmra.mxu0 %v745
        %v1171 = vpop.f32.mrf.mxu0
        %v1172 = vadd.f32 0.0, %v1171
        %v1173 = vpop.f32.mrf.mxu0
        %v1174 = vadd.f32 0.0, %v1173
        %1175 = vmatmul.bf16.gmra.mxu0 %v748
        %v1176 = vpop.f32.mrf.mxu0
        %v1177 = vadd.f32 0.0, %v1176
        %v1178 = vpop.f32.mrf.mxu0
        %v1179 = vadd.f32 0.0, %v1178
        %1180 = vmatmul.bf16.gmra.mxu0 %v751
        %v1181 = vpop.f32.mrf.mxu0
        %v1182 = vadd.f32 0.0, %v1181
        %v1183 = vpop.f32.mrf.mxu0
        %v1184 = vadd.f32 0.0, %v1183
        %1185 = vmatmul.bf16.gmra.mxu0 %v754
        %v1186 = vpop.f32.mrf.mxu0
        %v1187 = vadd.f32 0.0, %v1186
        %v1188 = vpop.f32.mrf.mxu0
        %v1189 = vadd.f32 0.0, %v1188
        %1190 = vmatmul.bf16.gmra.mxu0 %v757
        %v1191 = vpop.f32.mrf.mxu0
        %v1192 = vadd.f32 0.0, %v1191
        %v1193 = vpop.f32.mrf.mxu0
        %v1194 = vadd.f32 0.0, %v1193
        %1195 = vmatmul.bf16.gmra.mxu0 %v760
        %v1196 = vpop.f32.mrf.mxu0
        %v1197 = vadd.f32 0.0, %v1196
        %v1198 = vpop.f32.mrf.mxu0
        %v1199 = vadd.f32 0.0, %v1198
        %1200 = vmatmul.bf16.gmra.mxu0 %v763
        %v1201 = vpop.f32.mrf.mxu0
        %v1202 = vadd.f32 0.0, %v1201
        %v1203 = vpop.f32.mrf.mxu0
        %v1204 = vadd.f32 0.0, %v1203
        %1205 = vdwg.mxu0
        %1206 = vmatpush.bf16.msra.mxu0 0
        %1207 = vmatpush.bf16.msra.mxu0 0
        %1208 = vmatpush.bf16.msra.mxu0 0
        %1209 = vmatpush.bf16.msra.mxu0 0
        %1210 = vmatpush.bf16.msra.mxu0 0
        %1211 = vmatpush.bf16.msra.mxu0 0
        %1212 = vmatpush.bf16.msra.mxu0 0
        %1213 = vmatpush.bf16.msra.mxu0 %v725
        %1214 = vmatmul.bf16.gmra.mxu0 %v742
        %v1215 = vpop.f32.mrf.mxu0
        %v1216 = vadd.f32 0.0, %v1215
        %v1217 = vpop.f32.mrf.mxu0
        %v1218 = vadd.f32 0.0, %v1217
        %1219 = vmatmul.bf16.gmra.mxu0 %v745
        %v1220 = vpop.f32.mrf.mxu0
        %v1221 = vadd.f32 0.0, %v1220
        %v1222 = vpop.f32.mrf.mxu0
        %v1223 = vadd.f32 0.0, %v1222
        %1224 = vmatmul.bf16.gmra.mxu0 %v748
        %v1225 = vpop.f32.mrf.mxu0
        %v1226 = vadd.f32 0.0, %v1225
        %v1227 = vpop.f32.mrf.mxu0
        %v1228 = vadd.f32 0.0, %v1227
        %1229 = vmatmul.bf16.gmra.mxu0 %v751
        %v1230 = vpop.f32.mrf.mxu0
        %v1231 = vadd.f32 0.0, %v1230
        %v1232 = vpop.f32.mrf.mxu0
        %v1233 = vadd.f32 0.0, %v1232
        %1234 = vmatmul.bf16.gmra.mxu0 %v754
        %v1235 = vpop.f32.mrf.mxu0
        %v1236 = vadd.f32 0.0, %v1235
        %v1237 = vpop.f32.mrf.mxu0
        %v1238 = vadd.f32 0.0, %v1237
        %1239 = vmatmul.bf16.gmra.mxu0 %v757
        %v1240 = vpop.f32.mrf.mxu0
        %v1241 = vadd.f32 0.0, %v1240
        %v1242 = vpop.f32.mrf.mxu0
        %v1243 = vadd.f32 0.0, %v1242
        %1244 = vmatmul.bf16.gmra.mxu0 %v760
        %v1245 = vpop.f32.mrf.mxu0
        %v1246 = vadd.f32 0.0, %v1245
        %v1247 = vpop.f32.mrf.mxu0
        %v1248 = vadd.f32 0.0, %v1247
        %1249 = vmatmul.bf16.gmra.mxu0 %v763
        %v1250 = vpop.f32.mrf.mxu0
        %v1251 = vadd.f32 0.0, %v1250
        %v1252 = vpop.f32.mrf.mxu0
        %v1253 = vadd.f32 0.0, %v1252
        %1254 = vdwg.mxu0
        %1255 = vmatpush.bf16.msra.mxu0 0
        %1256 = vmatpush.bf16.msra.mxu0 0
        %1257 = vmatpush.bf16.msra.mxu0 0
        %1258 = vmatpush.bf16.msra.mxu0 0
        %1259 = vmatpush.bf16.msra.mxu0 0
        %1260 = vmatpush.bf16.msra.mxu0 0
        %1261 = vmatpush.bf16.msra.mxu0 0
        %1262 = vmatpush.bf16.msra.mxu0 %v726
        %1263 = vmatmul.bf16.gmra.mxu0 %v742
        %v1264 = vpop.f32.mrf.mxu0
        %v1265 = vadd.f32 0.0, %v1264
        %v1266 = vpop.f32.mrf.mxu0
        %v1267 = vadd.f32 0.0, %v1266
        %1268 = vmatmul.bf16.gmra.mxu0 %v745
        %v1269 = vpop.f32.mrf.mxu0
        %v1270 = vadd.f32 0.0, %v1269
        %v1271 = vpop.f32.mrf.mxu0
        %v1272 = vadd.f32 0.0, %v1271
        %1273 = vmatmul.bf16.gmra.mxu0 %v748
        %v1274 = vpop.f32.mrf.mxu0
        %v1275 = vadd.f32 0.0, %v1274
        %v1276 = vpop.f32.mrf.mxu0
        %v1277 = vadd.f32 0.0, %v1276
        %1278 = vmatmul.bf16.gmra.mxu0 %v751
        %v1279 = vpop.f32.mrf.mxu0
        %v1280 = vadd.f32 0.0, %v1279
        %v1281 = vpop.f32.mrf.mxu0
        %v1282 = vadd.f32 0.0, %v1281
        %1283 = vmatmul.bf16.gmra.mxu0 %v754
        %v1284 = vpop.f32.mrf.mxu0
        %v1285 = vadd.f32 0.0, %v1284
        %v1286 = vpop.f32.mrf.mxu0
        %v1287 = vadd.f32 0.0, %v1286
        %1288 = vmatmul.bf16.gmra.mxu0 %v757
        %v1289 = vpop.f32.mrf.mxu0
        %v1290 = vadd.f32 0.0, %v1289
        %v1291 = vpop.f32.mrf.mxu0
        %v1292 = vadd.f32 0.0, %v1291
        %1293 = vmatmul.bf16.gmra.mxu0 %v760
        %v1294 = vpop.f32.mrf.mxu0
        %v1295 = vadd.f32 0.0, %v1294
        %v1296 = vpop.f32.mrf.mxu0
        %v1297 = vadd.f32 0.0, %v1296
        %1298 = vmatmul.bf16.gmra.mxu0 %v763
        %v1299 = vpop.f32.mrf.mxu0
        %v1300 = vadd.f32 0.0, %v1299
        %v1301 = vpop.f32.mrf.mxu0
        %v1302 = vadd.f32 0.0, %v1301
        %1303 = vdwg.mxu0
        %1304 = vmatpush.bf16.msra.mxu0 0
        %1305 = vmatpush.bf16.msra.mxu0 0
        %1306 = vmatpush.bf16.msra.mxu0 0
        %1307 = vmatpush.bf16.msra.mxu0 0
        %1308 = vmatpush.bf16.msra.mxu0 0
        %1309 = vmatpush.bf16.msra.mxu0 0
        %1310 = vmatpush.bf16.msra.mxu0 0
        %1311 = vmatpush.bf16.msra.mxu0 %v727
        %1312 = vmatmul.bf16.gmra.mxu0 %v742
        %v1313 = vpop.f32.mrf.mxu0
        %v1314 = vadd.f32 0.0, %v1313
        %v1315 = vpop.f32.mrf.mxu0
        %v1316 = vadd.f32 0.0, %v1315
        %1317 = vmatmul.bf16.gmra.mxu0 %v745
        %v1318 = vpop.f32.mrf.mxu0
        %v1319 = vadd.f32 0.0, %v1318
        %v1320 = vpop.f32.mrf.mxu0
        %v1321 = vadd.f32 0.0, %v1320
        %1322 = vmatmul.bf16.gmra.mxu0 %v748
        %v1323 = vpop.f32.mrf.mxu0
        %v1324 = vadd.f32 0.0, %v1323
        %v1325 = vpop.f32.mrf.mxu0
        %v1326 = vadd.f32 0.0, %v1325
        %1327 = vmatmul.bf16.gmra.mxu0 %v751
        %v1328 = vpop.f32.mrf.mxu0
        %v1329 = vadd.f32 0.0, %v1328
        %v1330 = vpop.f32.mrf.mxu0
        %v1331 = vadd.f32 0.0, %v1330
        %1332 = vmatmul.bf16.gmra.mxu0 %v754
        %v1333 = vpop.f32.mrf.mxu0
        %v1334 = vadd.f32 0.0, %v1333
        %v1335 = vpop.f32.mrf.mxu0
        %v1336 = vadd.f32 0.0, %v1335
        %1337 = vmatmul.bf16.gmra.mxu0 %v757
        %v1338 = vpop.f32.mrf.mxu0
        %v1339 = vadd.f32 0.0, %v1338
        %v1340 = vpop.f32.mrf.mxu0
        %v1341 = vadd.f32 0.0, %v1340
        %1342 = vmatmul.bf16.gmra.mxu0 %v760
        %v1343 = vpop.f32.mrf.mxu0
        %v1344 = vadd.f32 0.0, %v1343
        %v1345 = vpop.f32.mrf.mxu0
        %v1346 = vadd.f32 0.0, %v1345
        %1347 = vmatmul.bf16.gmra.mxu0 %v763
        %v1348 = vpop.f32.mrf.mxu0
        %v1349 = vadd.f32 0.0, %v1348
        %v1350 = vpop.f32.mrf.mxu0
        %v1351 = vadd.f32 0.0, %v1350
        %1352 = vdwg.mxu0
        %v1353 = vpack.c.bf16 %v824, %v775
        %v1354 = vpack.c.bf16 %v922, %v873
        %v1355 = vpack.c.bf16 %v1020, %v971
        %v1356 = vpack.c.bf16 %v1118, %v1069
        %v1357 = vpack.c.bf16 %v1216, %v1167
        %v1358 = vpack.c.bf16 %v1314, %v1265
        %v1359 = vpack.c.bf16 %v826, %v777
        %v1360 = vpack.c.bf16 %v924, %v875
        %v1361 = vpack.c.bf16 %v1022, %v973
        %v1362 = vpack.c.bf16 %v1120, %v1071
        %v1363 = vpack.c.bf16 %v1218, %v1169
        %v1364 = vpack.c.bf16 %v1316, %v1267
        %v1365 = vpack.c.bf16 %v829, %v780
        %v1366 = vpack.c.bf16 %v927, %v878
        %v1367 = vpack.c.bf16 %v1025, %v976
        %v1368 = vpack.c.bf16 %v1123, %v1074
        %v1369 = vpack.c.bf16 %v1221, %v1172
        %v1370 = vpack.c.bf16 %v1319, %v1270
        %v1371 = vpack.c.bf16 %v831, %v782
        %v1372 = vpack.c.bf16 %v929, %v880
        %v1373 = vpack.c.bf16 %v1027, %v978
        %v1374 = vpack.c.bf16 %v1125, %v1076
        %v1375 = vpack.c.bf16 %v1223, %v1174
        %v1376 = vpack.c.bf16 %v1321, %v1272
        %v1377 = vpack.c.bf16 %v834, %v785
        %v1378 = vpack.c.bf16 %v932, %v883
        %v1379 = vpack.c.bf16 %v1030, %v981
        %v1380 = vpack.c.bf16 %v1128, %v1079
        %v1381 = vpack.c.bf16 %v1226, %v1177
        %v1382 = vpack.c.bf16 %v1324, %v1275
        %v1383 = vpack.c.bf16 %v836, %v787
        %v1384 = vpack.c.bf16 %v934, %v885
        %v1385 = vpack.c.bf16 %v1032, %v983
        %v1386 = vpack.c.bf16 %v1130, %v1081
        %v1387 = vpack.c.bf16 %v1228, %v1179
        %v1388 = vpack.c.bf16 %v1326, %v1277
        %v1389 = vpack.c.bf16 %v839, %v790
        %v1390 = vpack.c.bf16 %v937, %v888
        %v1391 = vpack.c.bf16 %v1035, %v986
        %v1392 = vpack.c.bf16 %v1133, %v1084
        %v1393 = vpack.c.bf16 %v1231, %v1182
        %v1394 = vpack.c.bf16 %v1329, %v1280
        %v1395 = vpack.c.bf16 %v841, %v792
        %v1396 = vpack.c.bf16 %v939, %v890
        %v1397 = vpack.c.bf16 %v1037, %v988
        %v1398 = vpack.c.bf16 %v1135, %v1086
        %v1399 = vpack.c.bf16 %v1233, %v1184
        %v1400 = vpack.c.bf16 %v1331, %v1282
        %v1401 = vpack.c.bf16 %v844, %v795
        %v1402 = vpack.c.bf16 %v942, %v893
        %v1403 = vpack.c.bf16 %v1040, %v991
        %v1404 = vpack.c.bf16 %v1138, %v1089
        %v1405 = vpack.c.bf16 %v1236, %v1187
        %v1406 = vpack.c.bf16 %v1334, %v1285
        %v1407 = vpack.c.bf16 %v846, %v797
        %v1408 = vpack.c.bf16 %v944, %v895
        %v1409 = vpack.c.bf16 %v1042, %v993
        %v1410 = vpack.c.bf16 %v1140, %v1091
        %v1411 = vpack.c.bf16 %v1238, %v1189
        %v1412 = vpack.c.bf16 %v1336, %v1287
        %v1413 = vpack.c.bf16 %v849, %v800
        %v1414 = vpack.c.bf16 %v947, %v898
        %v1415 = vpack.c.bf16 %v1045, %v996
        %v1416 = vpack.c.bf16 %v1143, %v1094
        %v1417 = vpack.c.bf16 %v1241, %v1192
        %v1418 = vpack.c.bf16 %v1339, %v1290
        %v1419 = vpack.c.bf16 %v851, %v802
        %v1420 = vpack.c.bf16 %v949, %v900
        %v1421 = vpack.c.bf16 %v1047, %v998
        %v1422 = vpack.c.bf16 %v1145, %v1096
        %v1423 = vpack.c.bf16 %v1243, %v1194
        %v1424 = vpack.c.bf16 %v1341, %v1292
        %v1425 = vpack.c.bf16 %v854, %v805
        %v1426 = vpack.c.bf16 %v952, %v903
        %v1427 = vpack.c.bf16 %v1050, %v1001
        %v1428 = vpack.c.bf16 %v1148, %v1099
        %v1429 = vpack.c.bf16 %v1246, %v1197
        %v1430 = vpack.c.bf16 %v1344, %v1295
        %v1431 = vpack.c.bf16 %v856, %v807
        %v1432 = vpack.c.bf16 %v954, %v905
        %v1433 = vpack.c.bf16 %v1052, %v1003
        %v1434 = vpack.c.bf16 %v1150, %v1101
        %v1435 = vpack.c.bf16 %v1248, %v1199
        %v1436 = vpack.c.bf16 %v1346, %v1297
        %v1437 = vpack.c.bf16 %v859, %v810
        %v1438 = vpack.c.bf16 %v957, %v908
        %v1439 = vpack.c.bf16 %v1055, %v1006
        %v1440 = vpack.c.bf16 %v1153, %v1104
        %v1441 = vpack.c.bf16 %v1251, %v1202
        %v1442 = vpack.c.bf16 %v1349, %v1300
        %v1443 = vpack.c.bf16 %v861, %v812
        %v1444 = vpack.c.bf16 %v959, %v910
        %v1445 = vpack.c.bf16 %v1057, %v1008
        %v1446 = vpack.c.bf16 %v1155, %v1106
        %v1447 = vpack.c.bf16 %v1253, %v1204
        %v1448 = vpack.c.bf16 %v1351, %v1302
        %v1449 = vld [vmem:[#allocation5] sm:$0xf]
        %v1450 = vld [vmem:[#allocation5 + $0x4] sm:$0xf]
        %v1451 = vld [vmem:[#allocation5 + $0x8] sm:$0xf]
        %v1452 = vld [vmem:[#allocation5 + $0xc] sm:$0xf]
        %v1453 = vld [vmem:[#allocation5 + $0x10] sm:$0xf]
        %v1454 = vld [vmem:[#allocation5 + $0x14] sm:$0xf]
        %v1455 = vld [vmem:[#allocation5 + $0x18] sm:$0xf]
        %v1456 = vld [vmem:[#allocation5 + $0x1c] sm:$0xf]
        %s1457 = scalar_lea.vmem [#allocation5], 32
        %v1458 = vld [vmem:[%s1457] sm:$0xf]
        %v1459 = vld [vmem:[%s1457 + $0x4] sm:$0xf]
        %v1460 = vld [vmem:[%s1457 + $0x8] sm:$0xf]
        %v1461 = vld [vmem:[%s1457 + $0xc] sm:$0xf]
        %v1462 = vld [vmem:[%s1457 + $0x10] sm:$0xf]
        %v1463 = vld [vmem:[%s1457 + $0x14] sm:$0xf]
        %v1464 = vld [vmem:[%s1457 + $0x18] sm:$0xf]
        %v1465 = vld [vmem:[%s1457 + $0x1c] sm:$0xf]
        %v1474 = vunpack.c.l.b16 %v1458
        %v1475 = vunpack.c.l.b16 %v1459
        %v1476 = vunpack.c.l.b16 %v1460
        %v1477 = vunpack.c.l.b16 %v1461
        %v1478 = vunpack.c.l.b16 %v1462
        %v1479 = vunpack.c.l.b16 %v1463
        %v1480 = vunpack.c.l.b16 %v1464
        %v1481 = vunpack.c.l.b16 %v1465
        %v1482 = vpack.c.b16 %v1475, %v1474
        %v1483 = vpack.c.b16 %v1477, %v1476
        %v1484 = vpack.c.b16 %v1479, %v1478
        %v1485 = vpack.c.b16 %v1481, %v1480
        %v1522 = vunpack.c.l.b16 %v1355
        %v1523 = vunpack.c.h.b16 %v1355
        %v1524 = vunpack.c.l.b16 %v1356
        %v1525 = vunpack.c.h.b16 %v1356
        %v1526 = vunpack.c.l.b16 %v1361
        %v1527 = vunpack.c.h.b16 %v1361
        %v1528 = vunpack.c.l.b16 %v1362
        %v1529 = vunpack.c.h.b16 %v1362
        %v1530 = vunpack.c.l.b16 %v1367
        %v1531 = vunpack.c.h.b16 %v1367
        %v1532 = vunpack.c.l.b16 %v1368
        %v1533 = vunpack.c.h.b16 %v1368
        %v1534 = vunpack.c.l.b16 %v1373
        %v1535 = vunpack.c.h.b16 %v1373
        %v1536 = vunpack.c.l.b16 %v1374
        %v1537 = vunpack.c.h.b16 %v1374
        %v1538 = vunpack.c.l.b16 %v1379
        %v1539 = vunpack.c.h.b16 %v1379
        %v1540 = vunpack.c.l.b16 %v1380
        %v1541 = vunpack.c.h.b16 %v1380
        %v1542 = vunpack.c.l.b16 %v1385
        %v1543 = vunpack.c.h.b16 %v1385
        %v1544 = vunpack.c.l.b16 %v1386
        %v1545 = vunpack.c.h.b16 %v1386
        %v1546 = vunpack.c.l.b16 %v1391
        %v1547 = vunpack.c.h.b16 %v1391
        %v1548 = vunpack.c.l.b16 %v1392
        %v1549 = vunpack.c.h.b16 %v1392
        %v1550 = vunpack.c.l.b16 %v1397
        %v1551 = vunpack.c.h.b16 %v1397
        %v1552 = vunpack.c.l.b16 %v1398
        %v1553 = vunpack.c.h.b16 %v1398
        %v1554 = vunpack.c.l.b16 %v1403
        %v1555 = vunpack.c.h.b16 %v1403
        %v1556 = vunpack.c.l.b16 %v1404
        %v1557 = vunpack.c.h.b16 %v1404
        %v1558 = vunpack.c.l.b16 %v1409
        %v1559 = vunpack.c.h.b16 %v1409
        %v1560 = vunpack.c.l.b16 %v1410
        %v1561 = vunpack.c.h.b16 %v1410
        %v1562 = vunpack.c.l.b16 %v1415
        %v1563 = vunpack.c.h.b16 %v1415
        %v1564 = vunpack.c.l.b16 %v1416
        %v1565 = vunpack.c.h.b16 %v1416
        %v1566 = vunpack.c.l.b16 %v1421
        %v1567 = vunpack.c.h.b16 %v1421
        %v1568 = vunpack.c.l.b16 %v1422
        %v1569 = vunpack.c.h.b16 %v1422
        %v1570 = vunpack.c.l.b16 %v1427
        %v1571 = vunpack.c.h.b16 %v1427
        %v1572 = vunpack.c.l.b16 %v1428
        %v1573 = vunpack.c.h.b16 %v1428
        %v1574 = vunpack.c.l.b16 %v1433
        %v1575 = vunpack.c.h.b16 %v1433
        %v1576 = vunpack.c.l.b16 %v1434
        %v1577 = vunpack.c.h.b16 %v1434
        %v1578 = vunpack.c.l.b16 %v1439
        %v1579 = vunpack.c.h.b16 %v1439
        %v1580 = vunpack.c.l.b16 %v1440
        %v1581 = vunpack.c.h.b16 %v1440
        %v1582 = vunpack.c.l.b16 %v1445
        %v1583 = vunpack.c.h.b16 %v1445
        %v1584 = vunpack.c.l.b16 %v1446
        %v1585 = vunpack.c.h.b16 %v1446
        %v1586 = vpack.c.b16 %v1526, %v1522
        %v1587 = vpack.c.b16 %v1527, %v1523
        %v1588 = vpack.c.b16 %v1528, %v1524
        %v1589 = vpack.c.b16 %v1529, %v1525
        %v1590 = vpack.c.b16 %v1534, %v1530
        %v1591 = vpack.c.b16 %v1535, %v1531
        %v1592 = vpack.c.b16 %v1536, %v1532
        %v1593 = vpack.c.b16 %v1537, %v1533
        %v1594 = vpack.c.b16 %v1542, %v1538
        %v1595 = vpack.c.b16 %v1543, %v1539
        %v1596 = vpack.c.b16 %v1544, %v1540
        %v1597 = vpack.c.b16 %v1545, %v1541
        %v1598 = vpack.c.b16 %v1550, %v1546
        %v1599 = vpack.c.b16 %v1551, %v1547
        %v1600 = vpack.c.b16 %v1552, %v1548
        %v1601 = vpack.c.b16 %v1553, %v1549
        %v1602 = vpack.c.b16 %v1558, %v1554
        %v1603 = vpack.c.b16 %v1559, %v1555
        %v1604 = vpack.c.b16 %v1560, %v1556
        %v1605 = vpack.c.b16 %v1561, %v1557
        %v1606 = vpack.c.b16 %v1566, %v1562
        %v1607 = vpack.c.b16 %v1567, %v1563
        %v1608 = vpack.c.b16 %v1568, %v1564
        %v1609 = vpack.c.b16 %v1569, %v1565
        %v1610 = vpack.c.b16 %v1574, %v1570
        %v1611 = vpack.c.b16 %v1575, %v1571
        %v1612 = vpack.c.b16 %v1576, %v1572
        %v1613 = vpack.c.b16 %v1577, %v1573
        %v1614 = vpack.c.b16 %v1582, %v1578
        %v1615 = vpack.c.b16 %v1583, %v1579
        %v1616 = vpack.c.b16 %v1584, %v1580
        %v1617 = vpack.c.b16 %v1585, %v1581
        %1650 = vmatpush.bf16.msra.mxu0 %v1614
        %1651 = vmatpush.bf16.msra.mxu0 %v1610
        %1652 = vmatpush.bf16.msra.mxu0 %v1606
        %1653 = vmatpush.bf16.msra.mxu0 %v1602
        %1654 = vmatpush.bf16.msra.mxu0 %v1598
        %1655 = vmatpush.bf16.msra.mxu0 %v1594
        %1656 = vmatpush.bf16.msra.mxu0 %v1590
        %1657 = vmatpush.bf16.msra.mxu0 %v1586
        %1658 = vmatmul.bf16.gmra.mxu0 %v1482
        %v1659 = vpop.f32.mrf.mxu0
        %v1660 = vadd.f32 0.0, %v1659
        %v1661 = vpop.f32.mrf.mxu0
        %v1662 = vadd.f32 0.0, %v1661
        %1663 = vmatmul.bf16.gmra.mxu0 %v1483
        %v1664 = vpop.f32.mrf.mxu0
        %v1665 = vadd.f32 0.0, %v1664
        %v1666 = vpop.f32.mrf.mxu0
        %v1667 = vadd.f32 0.0, %v1666
        %1668 = vmatmul.bf16.gmra.mxu0 %v1484
        %v1669 = vpop.f32.mrf.mxu0
        %v1670 = vadd.f32 0.0, %v1669
        %v1671 = vpop.f32.mrf.mxu0
        %v1672 = vadd.f32 0.0, %v1671
        %1673 = vmatmul.bf16.gmra.mxu0 %v1485
        %v1674 = vpop.f32.mrf.mxu0
        %v1675 = vadd.f32 0.0, %v1674
        %v1676 = vpop.f32.mrf.mxu0
        %v1677 = vadd.f32 0.0, %v1676
        %1678 = vdwg.mxu0
        %1679 = vmatpush.bf16.msra.mxu0 %v1615
        %1680 = vmatpush.bf16.msra.mxu0 %v1611
        %1681 = vmatpush.bf16.msra.mxu0 %v1607
        %1682 = vmatpush.bf16.msra.mxu0 %v1603
        %1683 = vmatpush.bf16.msra.mxu0 %v1599
        %1684 = vmatpush.bf16.msra.mxu0 %v1595
        %1685 = vmatpush.bf16.msra.mxu0 %v1591
        %1686 = vmatpush.bf16.msra.mxu0 %v1587
        %1687 = vmatmul.bf16.gmra.mxu0 %v1482
        %v1688 = vpop.f32.mrf.mxu0
        %v1689 = vadd.f32 0.0, %v1688
        %v1690 = vpop.f32.mrf.mxu0
        %v1691 = vadd.f32 0.0, %v1690
        %1692 = vmatmul.bf16.gmra.mxu0 %v1483
        %v1693 = vpop.f32.mrf.mxu0
        %v1694 = vadd.f32 0.0, %v1693
        %v1695 = vpop.f32.mrf.mxu0
        %v1696 = vadd.f32 0.0, %v1695
        %1697 = vmatmul.bf16.gmra.mxu0 %v1484
        %v1698 = vpop.f32.mrf.mxu0
        %v1699 = vadd.f32 0.0, %v1698
        %v1700 = vpop.f32.mrf.mxu0
        %v1701 = vadd.f32 0.0, %v1700
        %1702 = vmatmul.bf16.gmra.mxu0 %v1485
        %v1703 = vpop.f32.mrf.mxu0
        %v1704 = vadd.f32 0.0, %v1703
        %v1705 = vpop.f32.mrf.mxu0
        %v1706 = vadd.f32 0.0, %v1705
        %1707 = vdwg.mxu0
        %1708 = vmatpush.bf16.msra.mxu0 %v1616
        %1709 = vmatpush.bf16.msra.mxu0 %v1612
        %1710 = vmatpush.bf16.msra.mxu0 %v1608
        %1711 = vmatpush.bf16.msra.mxu0 %v1604
        %1712 = vmatpush.bf16.msra.mxu0 %v1600
        %1713 = vmatpush.bf16.msra.mxu0 %v1596
        %1714 = vmatpush.bf16.msra.mxu0 %v1592
        %1715 = vmatpush.bf16.msra.mxu0 %v1588
        %1716 = vmatmul.bf16.gmra.mxu0 %v1482
        %v1717 = vpop.f32.mrf.mxu0
        %v1718 = vadd.f32 0.0, %v1717
        %v1719 = vpop.f32.mrf.mxu0
        %v1720 = vadd.f32 0.0, %v1719
        %1721 = vmatmul.bf16.gmra.mxu0 %v1483
        %v1722 = vpop.f32.mrf.mxu0
        %v1723 = vadd.f32 0.0, %v1722
        %v1724 = vpop.f32.mrf.mxu0
        %v1725 = vadd.f32 0.0, %v1724
        %1726 = vmatmul.bf16.gmra.mxu0 %v1484
        %v1727 = vpop.f32.mrf.mxu0
        %v1728 = vadd.f32 0.0, %v1727
        %v1729 = vpop.f32.mrf.mxu0
        %v1730 = vadd.f32 0.0, %v1729
        %1731 = vmatmul.bf16.gmra.mxu0 %v1485
        %v1732 = vpop.f32.mrf.mxu0
        %v1733 = vadd.f32 0.0, %v1732
        %v1734 = vpop.f32.mrf.mxu0
        %v1735 = vadd.f32 0.0, %v1734
        %1736 = vdwg.mxu0
        %1737 = vmatpush.bf16.msra.mxu0 %v1617
        %1738 = vmatpush.bf16.msra.mxu0 %v1613
        %1739 = vmatpush.bf16.msra.mxu0 %v1609
        %1740 = vmatpush.bf16.msra.mxu0 %v1605
        %1741 = vmatpush.bf16.msra.mxu0 %v1601
        %1742 = vmatpush.bf16.msra.mxu0 %v1597
        %1743 = vmatpush.bf16.msra.mxu0 %v1593
        %1744 = vmatpush.bf16.msra.mxu0 %v1589
        %1745 = vmatmul.bf16.gmra.mxu0 %v1482
        %v1746 = vpop.f32.mrf.mxu0
        %v1747 = vadd.f32 0.0, %v1746
        %v1748 = vpop.f32.mrf.mxu0
        %v1749 = vadd.f32 0.0, %v1748
        %1750 = vmatmul.bf16.gmra.mxu0 %v1483
        %v1751 = vpop.f32.mrf.mxu0
        %v1752 = vadd.f32 0.0, %v1751
        %v1753 = vpop.f32.mrf.mxu0
        %v1754 = vadd.f32 0.0, %v1753
        %1755 = vmatmul.bf16.gmra.mxu0 %v1484
        %v1756 = vpop.f32.mrf.mxu0
        %v1757 = vadd.f32 0.0, %v1756
        %v1758 = vpop.f32.mrf.mxu0
        %v1759 = vadd.f32 0.0, %v1758
        %1760 = vmatmul.bf16.gmra.mxu0 %v1485
        %v1761 = vpop.f32.mrf.mxu0
        %v1762 = vadd.f32 0.0, %v1761
        %v1763 = vpop.f32.mrf.mxu0
        %v1764 = vadd.f32 0.0, %v1763
        %1765 = vdwg.mxu0
        %v1774 = vunpack.c.l.b16 %v1449
        %v1775 = vunpack.c.l.b16 %v1450
        %v1776 = vunpack.c.l.b16 %v1451
        %v1777 = vunpack.c.l.b16 %v1452
        %v1778 = vunpack.c.l.b16 %v1453
        %v1779 = vunpack.c.l.b16 %v1454
        %v1780 = vunpack.c.l.b16 %v1455
        %v1781 = vunpack.c.l.b16 %v1456
        %v1782 = vpack.c.b16 %v1775, %v1774
        %v1783 = vpack.c.b16 %v1777, %v1776
        %v1784 = vpack.c.b16 %v1779, %v1778
        %v1785 = vpack.c.b16 %v1781, %v1780
        %v1822 = vunpack.c.l.b16 %v1353
        %v1823 = vunpack.c.h.b16 %v1353
        %v1824 = vunpack.c.l.b16 %v1354
        %v1825 = vunpack.c.h.b16 %v1354
        %v1826 = vunpack.c.l.b16 %v1359
        %v1827 = vunpack.c.h.b16 %v1359
        %v1828 = vunpack.c.l.b16 %v1360
        %v1829 = vunpack.c.h.b16 %v1360
        %v1830 = vunpack.c.l.b16 %v1365
        %v1831 = vunpack.c.h.b16 %v1365
        %v1832 = vunpack.c.l.b16 %v1366
        %v1833 = vunpack.c.h.b16 %v1366
        %v1834 = vunpack.c.l.b16 %v1371
        %v1835 = vunpack.c.h.b16 %v1371
        %v1836 = vunpack.c.l.b16 %v1372
        %v1837 = vunpack.c.h.b16 %v1372
        %v1838 = vunpack.c.l.b16 %v1377
        %v1839 = vunpack.c.h.b16 %v1377
        %v1840 = vunpack.c.l.b16 %v1378
        %v1841 = vunpack.c.h.b16 %v1378
        %v1842 = vunpack.c.l.b16 %v1383
        %v1843 = vunpack.c.h.b16 %v1383
        %v1844 = vunpack.c.l.b16 %v1384
        %v1845 = vunpack.c.h.b16 %v1384
        %v1846 = vunpack.c.l.b16 %v1389
        %v1847 = vunpack.c.h.b16 %v1389
        %v1848 = vunpack.c.l.b16 %v1390
        %v1849 = vunpack.c.h.b16 %v1390
        %v1850 = vunpack.c.l.b16 %v1395
        %v1851 = vunpack.c.h.b16 %v1395
        %v1852 = vunpack.c.l.b16 %v1396
        %v1853 = vunpack.c.h.b16 %v1396
        %v1854 = vunpack.c.l.b16 %v1401
        %v1855 = vunpack.c.h.b16 %v1401
        %v1856 = vunpack.c.l.b16 %v1402
        %v1857 = vunpack.c.h.b16 %v1402
        %v1858 = vunpack.c.l.b16 %v1407
        %v1859 = vunpack.c.h.b16 %v1407
        %v1860 = vunpack.c.l.b16 %v1408
        %v1861 = vunpack.c.h.b16 %v1408
        %v1862 = vunpack.c.l.b16 %v1413
        %v1863 = vunpack.c.h.b16 %v1413
        %v1864 = vunpack.c.l.b16 %v1414
        %v1865 = vunpack.c.h.b16 %v1414
        %v1866 = vunpack.c.l.b16 %v1419
        %v1867 = vunpack.c.h.b16 %v1419
        %v1868 = vunpack.c.l.b16 %v1420
        %v1869 = vunpack.c.h.b16 %v1420
        %v1870 = vunpack.c.l.b16 %v1425
        %v1871 = vunpack.c.h.b16 %v1425
        %v1872 = vunpack.c.l.b16 %v1426
        %v1873 = vunpack.c.h.b16 %v1426
        %v1874 = vunpack.c.l.b16 %v1431
        %v1875 = vunpack.c.h.b16 %v1431
        %v1876 = vunpack.c.l.b16 %v1432
        %v1877 = vunpack.c.h.b16 %v1432
        %v1878 = vunpack.c.l.b16 %v1437
        %v1879 = vunpack.c.h.b16 %v1437
        %v1880 = vunpack.c.l.b16 %v1438
        %v1881 = vunpack.c.h.b16 %v1438
        %v1882 = vunpack.c.l.b16 %v1443
        %v1883 = vunpack.c.h.b16 %v1443
        %v1884 = vunpack.c.l.b16 %v1444
        %v1885 = vunpack.c.h.b16 %v1444
        %v1886 = vpack.c.b16 %v1826, %v1822
        %v1887 = vpack.c.b16 %v1827, %v1823
        %v1888 = vpack.c.b16 %v1828, %v1824
        %v1889 = vpack.c.b16 %v1829, %v1825
        %v1890 = vpack.c.b16 %v1834, %v1830
        %v1891 = vpack.c.b16 %v1835, %v1831
        %v1892 = vpack.c.b16 %v1836, %v1832
        %v1893 = vpack.c.b16 %v1837, %v1833
        %v1894 = vpack.c.b16 %v1842, %v1838
        %v1895 = vpack.c.b16 %v1843, %v1839
        %v1896 = vpack.c.b16 %v1844, %v1840
        %v1897 = vpack.c.b16 %v1845, %v1841
        %v1898 = vpack.c.b16 %v1850, %v1846
        %v1899 = vpack.c.b16 %v1851, %v1847
        %v1900 = vpack.c.b16 %v1852, %v1848
        %v1901 = vpack.c.b16 %v1853, %v1849
        %v1902 = vpack.c.b16 %v1858, %v1854
        %v1903 = vpack.c.b16 %v1859, %v1855
        %v1904 = vpack.c.b16 %v1860, %v1856
        %v1905 = vpack.c.b16 %v1861, %v1857
        %v1906 = vpack.c.b16 %v1866, %v1862
        %v1907 = vpack.c.b16 %v1867, %v1863
        %v1908 = vpack.c.b16 %v1868, %v1864
        %v1909 = vpack.c.b16 %v1869, %v1865
        %v1910 = vpack.c.b16 %v1874, %v1870
        %v1911 = vpack.c.b16 %v1875, %v1871
        %v1912 = vpack.c.b16 %v1876, %v1872
        %v1913 = vpack.c.b16 %v1877, %v1873
        %v1914 = vpack.c.b16 %v1882, %v1878
        %v1915 = vpack.c.b16 %v1883, %v1879
        %v1916 = vpack.c.b16 %v1884, %v1880
        %v1917 = vpack.c.b16 %v1885, %v1881
        %1950 = vmatpush.bf16.msra.mxu0 %v1914
        %1951 = vmatpush.bf16.msra.mxu0 %v1910
        %1952 = vmatpush.bf16.msra.mxu0 %v1906
        %1953 = vmatpush.bf16.msra.mxu0 %v1902
        %1954 = vmatpush.bf16.msra.mxu0 %v1898
        %1955 = vmatpush.bf16.msra.mxu0 %v1894
        %1956 = vmatpush.bf16.msra.mxu0 %v1890
        %1957 = vmatpush.bf16.msra.mxu0 %v1886
        %1958 = vmatmul.bf16.gmra.mxu0 %v1782
        %v1959 = vpop.f32.mrf.mxu0
        %v1960 = vadd.f32 %v1660, %v1959
        %v1961 = vpop.f32.mrf.mxu0
        %v1962 = vadd.f32 %v1662, %v1961
        %1963 = vmatmul.bf16.gmra.mxu0 %v1783
        %v1964 = vpop.f32.mrf.mxu0
        %v1965 = vadd.f32 %v1665, %v1964
        %v1966 = vpop.f32.mrf.mxu0
        %v1967 = vadd.f32 %v1667, %v1966
        %1968 = vmatmul.bf16.gmra.mxu0 %v1784
        %v1969 = vpop.f32.mrf.mxu0
        %v1970 = vadd.f32 %v1670, %v1969
        %v1971 = vpop.f32.mrf.mxu0
        %v1972 = vadd.f32 %v1672, %v1971
        %1973 = vmatmul.bf16.gmra.mxu0 %v1785
        %v1974 = vpop.f32.mrf.mxu0
        %v1975 = vadd.f32 %v1675, %v1974
        %v1976 = vpop.f32.mrf.mxu0
        %v1977 = vadd.f32 %v1677, %v1976
        %1978 = vdwg.mxu0
        %1979 = vmatpush.bf16.msra.mxu0 %v1915
        %1980 = vmatpush.bf16.msra.mxu0 %v1911
        %1981 = vmatpush.bf16.msra.mxu0 %v1907
        %1982 = vmatpush.bf16.msra.mxu0 %v1903
        %1983 = vmatpush.bf16.msra.mxu0 %v1899
        %1984 = vmatpush.bf16.msra.mxu0 %v1895
        %1985 = vmatpush.bf16.msra.mxu0 %v1891
        %1986 = vmatpush.bf16.msra.mxu0 %v1887
        %1987 = vmatmul.bf16.gmra.mxu0 %v1782
        %v1988 = vpop.f32.mrf.mxu0
        %v1989 = vadd.f32 %v1689, %v1988
        %v1990 = vpop.f32.mrf.mxu0
        %v1991 = vadd.f32 %v1691, %v1990
        %1992 = vmatmul.bf16.gmra.mxu0 %v1783
        %v1993 = vpop.f32.mrf.mxu0
        %v1994 = vadd.f32 %v1694, %v1993
        %v1995 = vpop.f32.mrf.mxu0
        %v1996 = vadd.f32 %v1696, %v1995
        %1997 = vmatmul.bf16.gmra.mxu0 %v1784
        %v1998 = vpop.f32.mrf.mxu0
        %v1999 = vadd.f32 %v1699, %v1998
        %v2000 = vpop.f32.mrf.mxu0
        %v2001 = vadd.f32 %v1701, %v2000
        %2002 = vmatmul.bf16.gmra.mxu0 %v1785
        %v2003 = vpop.f32.mrf.mxu0
        %v2004 = vadd.f32 %v1704, %v2003
        %v2005 = vpop.f32.mrf.mxu0
        %v2006 = vadd.f32 %v1706, %v2005
        %2007 = vdwg.mxu0
        %2008 = vmatpush.bf16.msra.mxu0 %v1916
        %2009 = vmatpush.bf16.msra.mxu0 %v1912
        %2010 = vmatpush.bf16.msra.mxu0 %v1908
        %2011 = vmatpush.bf16.msra.mxu0 %v1904
        %2012 = vmatpush.bf16.msra.mxu0 %v1900
        %2013 = vmatpush.bf16.msra.mxu0 %v1896
        %2014 = vmatpush.bf16.msra.mxu0 %v1892
        %2015 = vmatpush.bf16.msra.mxu0 %v1888
        %2016 = vmatmul.bf16.gmra.mxu0 %v1782
        %v2017 = vpop.f32.mrf.mxu0
        %v2018 = vadd.f32 %v1718, %v2017
        %v2019 = vpop.f32.mrf.mxu0
        %v2020 = vadd.f32 %v1720, %v2019
        %2021 = vmatmul.bf16.gmra.mxu0 %v1783
        %v2022 = vpop.f32.mrf.mxu0
        %v2023 = vadd.f32 %v1723, %v2022
        %v2024 = vpop.f32.mrf.mxu0
        %v2025 = vadd.f32 %v1725, %v2024
        %2026 = vmatmul.bf16.gmra.mxu0 %v1784
        %v2027 = vpop.f32.mrf.mxu0
        %v2028 = vadd.f32 %v1728, %v2027
        %v2029 = vpop.f32.mrf.mxu0
        %v2030 = vadd.f32 %v1730, %v2029
        %2031 = vmatmul.bf16.gmra.mxu0 %v1785
        %v2032 = vpop.f32.mrf.mxu0
        %v2033 = vadd.f32 %v1733, %v2032
        %v2034 = vpop.f32.mrf.mxu0
        %v2035 = vadd.f32 %v1735, %v2034
        %2036 = vdwg.mxu0
        %2037 = vmatpush.bf16.msra.mxu0 %v1917
        %2038 = vmatpush.bf16.msra.mxu0 %v1913
        %2039 = vmatpush.bf16.msra.mxu0 %v1909
        %2040 = vmatpush.bf16.msra.mxu0 %v1905
        %2041 = vmatpush.bf16.msra.mxu0 %v1901
        %2042 = vmatpush.bf16.msra.mxu0 %v1897
        %2043 = vmatpush.bf16.msra.mxu0 %v1893
        %2044 = vmatpush.bf16.msra.mxu0 %v1889
        %2045 = vmatmul.bf16.gmra.mxu0 %v1782
        %v2046 = vpop.f32.mrf.mxu0
        %v2047 = vadd.f32 %v1747, %v2046
        %v2048 = vpop.f32.mrf.mxu0
        %v2049 = vadd.f32 %v1749, %v2048
        %2050 = vmatmul.bf16.gmra.mxu0 %v1783
        %v2051 = vpop.f32.mrf.mxu0
        %v2052 = vadd.f32 %v1752, %v2051
        %v2053 = vpop.f32.mrf.mxu0
        %v2054 = vadd.f32 %v1754, %v2053
        %2055 = vmatmul.bf16.gmra.mxu0 %v1784
        %v2056 = vpop.f32.mrf.mxu0
        %v2057 = vadd.f32 %v1757, %v2056
        %v2058 = vpop.f32.mrf.mxu0
        %v2059 = vadd.f32 %v1759, %v2058
        %2060 = vmatmul.bf16.gmra.mxu0 %v1785
        %v2061 = vpop.f32.mrf.mxu0
        %v2062 = vadd.f32 %v1762, %v2061
        %v2063 = vpop.f32.mrf.mxu0
        %v2064 = vadd.f32 %v1764, %v2063
        %2065 = vdwg.mxu0
        %s2066 = scalar_lea.vmem [#allocation5], 64
        %v2067 = vld [vmem:[%s2066] sm:$0xf]
        %v2068 = vld [vmem:[%s2066 + $0x4] sm:$0xf]
        %v2069 = vld [vmem:[%s2066 + $0x8] sm:$0xf]
        %v2070 = vld [vmem:[%s2066 + $0xc] sm:$0xf]
        %v2071 = vld [vmem:[%s2066 + $0x10] sm:$0xf]
        %v2072 = vld [vmem:[%s2066 + $0x14] sm:$0xf]
        %v2073 = vld [vmem:[%s2066 + $0x18] sm:$0xf]
        %v2074 = vld [vmem:[%s2066 + $0x1c] sm:$0xf]
        %v2083 = vunpack.c.l.b16 %v2067
        %v2084 = vunpack.c.l.b16 %v2068
        %v2085 = vunpack.c.l.b16 %v2069
        %v2086 = vunpack.c.l.b16 %v2070
        %v2087 = vunpack.c.l.b16 %v2071
        %v2088 = vunpack.c.l.b16 %v2072
        %v2089 = vunpack.c.l.b16 %v2073
        %v2090 = vunpack.c.l.b16 %v2074
        %v2091 = vpack.c.b16 %v2084, %v2083
        %v2092 = vpack.c.b16 %v2086, %v2085
        %v2093 = vpack.c.b16 %v2088, %v2087
        %v2094 = vpack.c.b16 %v2090, %v2089
        %v2131 = vunpack.c.l.b16 %v1357
        %v2132 = vunpack.c.h.b16 %v1357
        %v2133 = vunpack.c.l.b16 %v1358
        %v2134 = vunpack.c.h.b16 %v1358
        %v2135 = vunpack.c.l.b16 %v1363
        %v2136 = vunpack.c.h.b16 %v1363
        %v2137 = vunpack.c.l.b16 %v1364
        %v2138 = vunpack.c.h.b16 %v1364
        %v2139 = vunpack.c.l.b16 %v1369
        %v2140 = vunpack.c.h.b16 %v1369
        %v2141 = vunpack.c.l.b16 %v1370
        %v2142 = vunpack.c.h.b16 %v1370
        %v2143 = vunpack.c.l.b16 %v1375
        %v2144 = vunpack.c.h.b16 %v1375
        %v2145 = vunpack.c.l.b16 %v1376
        %v2146 = vunpack.c.h.b16 %v1376
        %v2147 = vunpack.c.l.b16 %v1381
        %v2148 = vunpack.c.h.b16 %v1381
        %v2149 = vunpack.c.l.b16 %v1382
        %v2150 = vunpack.c.h.b16 %v1382
        %v2151 = vunpack.c.l.b16 %v1387
        %v2152 = vunpack.c.h.b16 %v1387
        %v2153 = vunpack.c.l.b16 %v1388
        %v2154 = vunpack.c.h.b16 %v1388
        %v2155 = vunpack.c.l.b16 %v1393
        %v2156 = vunpack.c.h.b16 %v1393
        %v2157 = vunpack.c.l.b16 %v1394
        %v2158 = vunpack.c.h.b16 %v1394
        %v2159 = vunpack.c.l.b16 %v1399
        %v2160 = vunpack.c.h.b16 %v1399
        %v2161 = vunpack.c.l.b16 %v1400
        %v2162 = vunpack.c.h.b16 %v1400
        %v2163 = vunpack.c.l.b16 %v1405
        %v2164 = vunpack.c.h.b16 %v1405
        %v2165 = vunpack.c.l.b16 %v1406
        %v2166 = vunpack.c.h.b16 %v1406
        %v2167 = vunpack.c.l.b16 %v1411
        %v2168 = vunpack.c.h.b16 %v1411
        %v2169 = vunpack.c.l.b16 %v1412
        %v2170 = vunpack.c.h.b16 %v1412
        %v2171 = vunpack.c.l.b16 %v1417
        %v2172 = vunpack.c.h.b16 %v1417
        %v2173 = vunpack.c.l.b16 %v1418
        %v2174 = vunpack.c.h.b16 %v1418
        %v2175 = vunpack.c.l.b16 %v1423
        %v2176 = vunpack.c.h.b16 %v1423
        %v2177 = vunpack.c.l.b16 %v1424
        %v2178 = vunpack.c.h.b16 %v1424
        %v2179 = vunpack.c.l.b16 %v1429
        %v2180 = vunpack.c.h.b16 %v1429
        %v2181 = vunpack.c.l.b16 %v1430
        %v2182 = vunpack.c.h.b16 %v1430
        %v2183 = vunpack.c.l.b16 %v1435
        %v2184 = vunpack.c.h.b16 %v1435
        %v2185 = vunpack.c.l.b16 %v1436
        %v2186 = vunpack.c.h.b16 %v1436
        %v2187 = vunpack.c.l.b16 %v1441
        %v2188 = vunpack.c.h.b16 %v1441
        %v2189 = vunpack.c.l.b16 %v1442
        %v2190 = vunpack.c.h.b16 %v1442
        %v2191 = vunpack.c.l.b16 %v1447
        %v2192 = vunpack.c.h.b16 %v1447
        %v2193 = vunpack.c.l.b16 %v1448
        %v2194 = vunpack.c.h.b16 %v1448
        %v2195 = vpack.c.b16 %v2135, %v2131
        %v2196 = vpack.c.b16 %v2136, %v2132
        %v2197 = vpack.c.b16 %v2137, %v2133
        %v2198 = vpack.c.b16 %v2138, %v2134
        %v2199 = vpack.c.b16 %v2143, %v2139
        %v2200 = vpack.c.b16 %v2144, %v2140
        %v2201 = vpack.c.b16 %v2145, %v2141
        %v2202 = vpack.c.b16 %v2146, %v2142
        %v2203 = vpack.c.b16 %v2151, %v2147
        %v2204 = vpack.c.b16 %v2152, %v2148
        %v2205 = vpack.c.b16 %v2153, %v2149
        %v2206 = vpack.c.b16 %v2154, %v2150
        %v2207 = vpack.c.b16 %v2159, %v2155
        %v2208 = vpack.c.b16 %v2160, %v2156
        %v2209 = vpack.c.b16 %v2161, %v2157
        %v2210 = vpack.c.b16 %v2162, %v2158
        %v2211 = vpack.c.b16 %v2167, %v2163
        %v2212 = vpack.c.b16 %v2168, %v2164
        %v2213 = vpack.c.b16 %v2169, %v2165
        %v2214 = vpack.c.b16 %v2170, %v2166
        %v2215 = vpack.c.b16 %v2175, %v2171
        %v2216 = vpack.c.b16 %v2176, %v2172
        %v2217 = vpack.c.b16 %v2177, %v2173
        %v2218 = vpack.c.b16 %v2178, %v2174
        %v2219 = vpack.c.b16 %v2183, %v2179
        %v2220 = vpack.c.b16 %v2184, %v2180
        %v2221 = vpack.c.b16 %v2185, %v2181
        %v2222 = vpack.c.b16 %v2186, %v2182
        %v2223 = vpack.c.b16 %v2191, %v2187
        %v2224 = vpack.c.b16 %v2192, %v2188
        %v2225 = vpack.c.b16 %v2193, %v2189
        %v2226 = vpack.c.b16 %v2194, %v2190
        %2259 = vmatpush.bf16.msra.mxu0 %v2223
        %2260 = vmatpush.bf16.msra.mxu0 %v2219
        %2261 = vmatpush.bf16.msra.mxu0 %v2215
        %2262 = vmatpush.bf16.msra.mxu0 %v2211
        %2263 = vmatpush.bf16.msra.mxu0 %v2207
        %2264 = vmatpush.bf16.msra.mxu0 %v2203
        %2265 = vmatpush.bf16.msra.mxu0 %v2199
        %2266 = vmatpush.bf16.msra.mxu0 %v2195
        %2267 = vmatmul.bf16.gmra.mxu0 %v2091
        %v2268 = vpop.f32.mrf.mxu0
        %v2269 = vadd.f32 0.0, %v2268
        %v2270 = vpop.f32.mrf.mxu0
        %v2271 = vadd.f32 0.0, %v2270
        %2272 = vmatmul.bf16.gmra.mxu0 %v2092
        %v2273 = vpop.f32.mrf.mxu0
        %v2274 = vadd.f32 0.0, %v2273
        %v2275 = vpop.f32.mrf.mxu0
        %v2276 = vadd.f32 0.0, %v2275
        %2277 = vmatmul.bf16.gmra.mxu0 %v2093
        %v2278 = vpop.f32.mrf.mxu0
        %v2279 = vadd.f32 0.0, %v2278
        %v2280 = vpop.f32.mrf.mxu0
        %v2281 = vadd.f32 0.0, %v2280
        %2282 = vmatmul.bf16.gmra.mxu0 %v2094
        %v2283 = vpop.f32.mrf.mxu0
        %v2284 = vadd.f32 0.0, %v2283
        %v2285 = vpop.f32.mrf.mxu0
        %v2286 = vadd.f32 0.0, %v2285
        %2287 = vdwg.mxu0
        %2288 = vmatpush.bf16.msra.mxu0 %v2224
        %2289 = vmatpush.bf16.msra.mxu0 %v2220
        %2290 = vmatpush.bf16.msra.mxu0 %v2216
        %2291 = vmatpush.bf16.msra.mxu0 %v2212
        %2292 = vmatpush.bf16.msra.mxu0 %v2208
        %2293 = vmatpush.bf16.msra.mxu0 %v2204
        %2294 = vmatpush.bf16.msra.mxu0 %v2200
        %2295 = vmatpush.bf16.msra.mxu0 %v2196
        %2296 = vmatmul.bf16.gmra.mxu0 %v2091
        %v2297 = vpop.f32.mrf.mxu0
        %v2298 = vadd.f32 0.0, %v2297
        %v2299 = vpop.f32.mrf.mxu0
        %v2300 = vadd.f32 0.0, %v2299
        %2301 = vmatmul.bf16.gmra.mxu0 %v2092
        %v2302 = vpop.f32.mrf.mxu0
        %v2303 = vadd.f32 0.0, %v2302
        %v2304 = vpop.f32.mrf.mxu0
        %v2305 = vadd.f32 0.0, %v2304
        %2306 = vmatmul.bf16.gmra.mxu0 %v2093
        %v2307 = vpop.f32.mrf.mxu0
        %v2308 = vadd.f32 0.0, %v2307
        %v2309 = vpop.f32.mrf.mxu0
        %v2310 = vadd.f32 0.0, %v2309
        %2311 = vmatmul.bf16.gmra.mxu0 %v2094
        %v2312 = vpop.f32.mrf.mxu0
        %v2313 = vadd.f32 0.0, %v2312
        %v2314 = vpop.f32.mrf.mxu0
        %v2315 = vadd.f32 0.0, %v2314
        %2316 = vdwg.mxu0
        %2317 = vmatpush.bf16.msra.mxu0 %v2225
        %2318 = vmatpush.bf16.msra.mxu0 %v2221
        %2319 = vmatpush.bf16.msra.mxu0 %v2217
        %2320 = vmatpush.bf16.msra.mxu0 %v2213
        %2321 = vmatpush.bf16.msra.mxu0 %v2209
        %2322 = vmatpush.bf16.msra.mxu0 %v2205
        %2323 = vmatpush.bf16.msra.mxu0 %v2201
        %2324 = vmatpush.bf16.msra.mxu0 %v2197
        %2325 = vmatmul.bf16.gmra.mxu0 %v2091
        %v2326 = vpop.f32.mrf.mxu0
        %v2327 = vadd.f32 0.0, %v2326
        %v2328 = vpop.f32.mrf.mxu0
        %v2329 = vadd.f32 0.0, %v2328
        %2330 = vmatmul.bf16.gmra.mxu0 %v2092
        %v2331 = vpop.f32.mrf.mxu0
        %v2332 = vadd.f32 0.0, %v2331
        %v2333 = vpop.f32.mrf.mxu0
        %v2334 = vadd.f32 0.0, %v2333
        %2335 = vmatmul.bf16.gmra.mxu0 %v2093
        %v2336 = vpop.f32.mrf.mxu0
        %v2337 = vadd.f32 0.0, %v2336
        %v2338 = vpop.f32.mrf.mxu0
        %v2339 = vadd.f32 0.0, %v2338
        %2340 = vmatmul.bf16.gmra.mxu0 %v2094
        %v2341 = vpop.f32.mrf.mxu0
        %v2342 = vadd.f32 0.0, %v2341
        %v2343 = vpop.f32.mrf.mxu0
        %v2344 = vadd.f32 0.0, %v2343
        %2345 = vdwg.mxu0
        %2346 = vmatpush.bf16.msra.mxu0 %v2226
        %2347 = vmatpush.bf16.msra.mxu0 %v2222
        %2348 = vmatpush.bf16.msra.mxu0 %v2218
        %2349 = vmatpush.bf16.msra.mxu0 %v2214
        %2350 = vmatpush.bf16.msra.mxu0 %v2210
        %2351 = vmatpush.bf16.msra.mxu0 %v2206
        %2352 = vmatpush.bf16.msra.mxu0 %v2202
        %2353 = vmatpush.bf16.msra.mxu0 %v2198
        %2354 = vmatmul.bf16.gmra.mxu0 %v2091
        %v2355 = vpop.f32.mrf.mxu0
        %v2356 = vadd.f32 0.0, %v2355
        %v2357 = vpop.f32.mrf.mxu0
        %v2358 = vadd.f32 0.0, %v2357
        %2359 = vmatmul.bf16.gmra.mxu0 %v2092
        %v2360 = vpop.f32.mrf.mxu0
        %v2361 = vadd.f32 0.0, %v2360
        %v2362 = vpop.f32.mrf.mxu0
        %v2363 = vadd.f32 0.0, %v2362
        %2364 = vmatmul.bf16.gmra.mxu0 %v2093
        %v2365 = vpop.f32.mrf.mxu0
        %v2366 = vadd.f32 0.0, %v2365
        %v2367 = vpop.f32.mrf.mxu0
        %v2368 = vadd.f32 0.0, %v2367
        %2369 = vmatmul.bf16.gmra.mxu0 %v2094
        %v2370 = vpop.f32.mrf.mxu0
        %v2371 = vadd.f32 0.0, %v2370
        %v2372 = vpop.f32.mrf.mxu0
        %v2373 = vadd.f32 0.0, %v2372
        %2374 = vdwg.mxu0
        %v2375 = vadd.f32 %v1960, %v2269
        %v2376 = vadd.f32 %v1989, %v2298
        %v2377 = vadd.f32 %v2018, %v2327
        %v2378 = vadd.f32 %v2047, %v2356
        %v2379 = vadd.f32 %v1962, %v2271
        %v2380 = vadd.f32 %v1991, %v2300
        %v2381 = vadd.f32 %v2020, %v2329
        %v2382 = vadd.f32 %v2049, %v2358
        %v2383 = vadd.f32 %v1965, %v2274
        %v2384 = vadd.f32 %v1994, %v2303
        %v2385 = vadd.f32 %v2023, %v2332
        %v2386 = vadd.f32 %v2052, %v2361
        %v2387 = vadd.f32 %v1967, %v2276
        %v2388 = vadd.f32 %v1996, %v2305
        %v2389 = vadd.f32 %v2025, %v2334
        %v2390 = vadd.f32 %v2054, %v2363
        %v2391 = vadd.f32 %v1970, %v2279
        %v2392 = vadd.f32 %v1999, %v2308
        %v2393 = vadd.f32 %v2028, %v2337
        %v2394 = vadd.f32 %v2057, %v2366
        %v2395 = vadd.f32 %v1972, %v2281
        %v2396 = vadd.f32 %v2001, %v2310
        %v2397 = vadd.f32 %v2030, %v2339
        %v2398 = vadd.f32 %v2059, %v2368
        %v2399 = vadd.f32 %v1975, %v2284
        %v2400 = vadd.f32 %v2004, %v2313
        %v2401 = vadd.f32 %v2033, %v2342
        %v2402 = vadd.f32 %v2062, %v2371
        %v2403 = vadd.f32 %v1977, %v2286
        %v2404 = vadd.f32 %v2006, %v2315
        %v2405 = vadd.f32 %v2035, %v2344
        %v2406 = vadd.f32 %v2064, %v2373
        %v2407 = vld [vmem:[%s3] sm:$0xf]
        %v2409 = vperm.slane %v2407, 0
        %v2410 = vperm.slane %v2407, 1
        %v2411 = vperm.slane %v2407, 2
        %v2412 = vperm.slane %v2407, 3
        %v2417 = vmul.f32 %v2375, %v2409
        %v2418 = vmul.f32 %v2376, %v2410
        %v2419 = vmul.f32 %v2377, %v2411
        %v2420 = vmul.f32 %v2378, %v2412
        %v2421 = vmul.f32 %v2379, %v2409
        %v2422 = vmul.f32 %v2380, %v2410
        %v2423 = vmul.f32 %v2381, %v2411
        %v2424 = vmul.f32 %v2382, %v2412
        %v2425 = vmul.f32 %v2383, %v2409
        %v2426 = vmul.f32 %v2384, %v2410
        %v2427 = vmul.f32 %v2385, %v2411
        %v2428 = vmul.f32 %v2386, %v2412
        %v2429 = vmul.f32 %v2387, %v2409
        %v2430 = vmul.f32 %v2388, %v2410
        %v2431 = vmul.f32 %v2389, %v2411
        %v2432 = vmul.f32 %v2390, %v2412
        %v2433 = vmul.f32 %v2391, %v2409
        %v2434 = vmul.f32 %v2392, %v2410
        %v2435 = vmul.f32 %v2393, %v2411
        %v2436 = vmul.f32 %v2394, %v2412
        %v2437 = vmul.f32 %v2395, %v2409
        %v2438 = vmul.f32 %v2396, %v2410
        %v2439 = vmul.f32 %v2397, %v2411
        %v2440 = vmul.f32 %v2398, %v2412
        %v2441 = vmul.f32 %v2399, %v2409
        %v2442 = vmul.f32 %v2400, %v2410
        %v2443 = vmul.f32 %v2401, %v2411
        %v2444 = vmul.f32 %v2402, %v2412
        %v2445 = vmul.f32 %v2403, %v2409
        %v2446 = vmul.f32 %v2404, %v2410
        %v2447 = vmul.f32 %v2405, %v2411
        %v2448 = vmul.f32 %v2406, %v2412
        %v2449 = vld [vmem:[#allocation7] sm:$0xf]
        %v2451 = vperm.slane %v2449, 0
        %v2452 = vperm.slane %v2449, 1
        %v2453 = vperm.slane %v2449, 2
        %v2454 = vperm.slane %v2449, 3
        %v2459 = vadd.f32 %v2417, %v2451
        %v2460 = vadd.f32 %v2418, %v2452
        %v2461 = vadd.f32 %v2419, %v2453
        %v2462 = vadd.f32 %v2420, %v2454
        %v2463 = vadd.f32 %v2421, %v2451
        %v2464 = vadd.f32 %v2422, %v2452
        %v2465 = vadd.f32 %v2423, %v2453
        %v2466 = vadd.f32 %v2424, %v2454
        %v2467 = vadd.f32 %v2425, %v2451
        %v2468 = vadd.f32 %v2426, %v2452
        %v2469 = vadd.f32 %v2427, %v2453
        %v2470 = vadd.f32 %v2428, %v2454
        %v2471 = vadd.f32 %v2429, %v2451
        %v2472 = vadd.f32 %v2430, %v2452
        %v2473 = vadd.f32 %v2431, %v2453
        %v2474 = vadd.f32 %v2432, %v2454
        %v2475 = vadd.f32 %v2433, %v2451
        %v2476 = vadd.f32 %v2434, %v2452
        %v2477 = vadd.f32 %v2435, %v2453
        %v2478 = vadd.f32 %v2436, %v2454
        %v2479 = vadd.f32 %v2437, %v2451
        %v2480 = vadd.f32 %v2438, %v2452
        %v2481 = vadd.f32 %v2439, %v2453
        %v2482 = vadd.f32 %v2440, %v2454
        %v2483 = vadd.f32 %v2441, %v2451
        %v2484 = vadd.f32 %v2442, %v2452
        %v2485 = vadd.f32 %v2443, %v2453
        %v2486 = vadd.f32 %v2444, %v2454
        %v2487 = vadd.f32 %v2445, %v2451
        %v2488 = vadd.f32 %v2446, %v2452
        %v2489 = vadd.f32 %v2447, %v2453
        %v2490 = vadd.f32 %v2448, %v2454
        %v2491 = vpack.c.bf16 %v2463, %v2459
        %v2492 = vpack.c.bf16 %v2464, %v2460
        %v2493 = vpack.c.bf16 %v2465, %v2461
        %v2494 = vpack.c.bf16 %v2466, %v2462
        %v2495 = vpack.c.bf16 %v2471, %v2467
        %v2496 = vpack.c.bf16 %v2472, %v2468
        %v2497 = vpack.c.bf16 %v2473, %v2469
        %v2498 = vpack.c.bf16 %v2474, %v2470
        %v2499 = vpack.c.bf16 %v2479, %v2475
        %v2500 = vpack.c.bf16 %v2480, %v2476
        %v2501 = vpack.c.bf16 %v2481, %v2477
        %v2502 = vpack.c.bf16 %v2482, %v2478
        %v2503 = vpack.c.bf16 %v2487, %v2483
        %v2504 = vpack.c.bf16 %v2488, %v2484
        %v2505 = vpack.c.bf16 %v2489, %v2485
        %v2506 = vpack.c.bf16 %v2490, %v2486
        %v2507 = vld [vmem:[%s5] sm:$0xff]
        %v2508 = vld [vmem:[%s5 + $0x8] sm:$0xff]
        %v2509 = vld [vmem:[%s5 + $0x10] sm:$0xff]
        %v2510 = vld [vmem:[%s5 + $0x18] sm:$0xff]
        %v2511 = vld [vmem:[%s5 + $0x20] sm:$0xff]
        %v2512 = vld [vmem:[%s5 + $0x28] sm:$0xff]
        %v2513 = vld [vmem:[%s5 + $0x30] sm:$0xff]
        %v2514 = vld [vmem:[%s5 + $0x38] sm:$0xff]
        %v2515 = vld [vmem:[%s5 + $0x40] sm:$0xff]
        %v2516 = vld [vmem:[%s5 + $0x48] sm:$0xff]
        %v2517 = vld [vmem:[%s5 + $0x50] sm:$0xff]
        %v2518 = vld [vmem:[%s5 + $0x58] sm:$0xff]
        %v2519 = vld [vmem:[%s5 + $0x60] sm:$0xff]
        %v2520 = vld [vmem:[%s5 + $0x68] sm:$0xff]
        %v2521 = vld [vmem:[%s5 + $0x70] sm:$0xff]
        %v2522 = vld [vmem:[%s5 + $0x78] sm:$0xff]
        %v2523 = vld [vmem:[%s5 + $0x80] sm:$0xff]
        %v2524 = vld [vmem:[%s5 + $0x88] sm:$0xff]
        %v2525 = vld [vmem:[%s5 + $0x90] sm:$0xff]
        %v2526 = vld [vmem:[%s5 + $0x98] sm:$0xff]
        %v2527 = vld [vmem:[%s5 + $0xa0] sm:$0xff]
        %v2528 = vld [vmem:[%s5 + $0xa8] sm:$0xff]
        %v2529 = vld [vmem:[%s5 + $0xb0] sm:$0xff]
        %v2530 = vld [vmem:[%s5 + $0xb8] sm:$0xff]
        %v2531 = vld [vmem:[%s5 + $0xc0] sm:$0xff]
        %v2532 = vld [vmem:[%s5 + $0xc8] sm:$0xff]
        %v2533 = vld [vmem:[%s5 + $0xd0] sm:$0xff]
        %v2534 = vld [vmem:[%s5 + $0xd8] sm:$0xff]
        %v2535 = vld [vmem:[%s5 + $0xe0] sm:$0xff]
        %v2536 = vld [vmem:[%s5 + $0xe8] sm:$0xff]
        %v2537 = vld [vmem:[%s5 + $0xf0] sm:$0xff]
        %v2538 = vld [vmem:[%s5 + $0xf8] sm:$0xff]
        %v2539 = vld [vmem:[%s5 + $0x100] sm:$0xff]
        %v2540 = vld [vmem:[%s5 + $0x108] sm:$0xff]
        %v2541 = vld [vmem:[%s5 + $0x110] sm:$0xff]
        %v2542 = vld [vmem:[%s5 + $0x118] sm:$0xff]
        %v2543 = vld [vmem:[%s5 + $0x120] sm:$0xff]
        %v2544 = vld [vmem:[%s5 + $0x128] sm:$0xff]
        %v2545 = vld [vmem:[%s5 + $0x130] sm:$0xff]
        %v2546 = vld [vmem:[%s5 + $0x138] sm:$0xff]
        %v2547 = vld [vmem:[%s5 + $0x140] sm:$0xff]
        %v2548 = vld [vmem:[%s5 + $0x148] sm:$0xff]
        %v2549 = vld [vmem:[%s5 + $0x150] sm:$0xff]
        %v2550 = vld [vmem:[%s5 + $0x158] sm:$0xff]
        %v2551 = vld [vmem:[%s5 + $0x160] sm:$0xff]
        %v2552 = vld [vmem:[%s5 + $0x168] sm:$0xff]
        %v2553 = vld [vmem:[%s5 + $0x170] sm:$0xff]
        %v2554 = vld [vmem:[%s5 + $0x178] sm:$0xff]
        %v2555 = vld [vmem:[%s5 + $0x180] sm:$0xff]
        %v2556 = vld [vmem:[%s5 + $0x188] sm:$0xff]
        %v2557 = vld [vmem:[%s5 + $0x190] sm:$0xff]
        %v2558 = vld [vmem:[%s5 + $0x198] sm:$0xff]
        %v2559 = vld [vmem:[%s5 + $0x1a0] sm:$0xff]
        %v2560 = vld [vmem:[%s5 + $0x1a8] sm:$0xff]
        %v2561 = vld [vmem:[%s5 + $0x1b0] sm:$0xff]
        %v2562 = vld [vmem:[%s5 + $0x1b8] sm:$0xff]
        %v2563 = vld [vmem:[%s5 + $0x1c0] sm:$0xff]
        %v2564 = vld [vmem:[%s5 + $0x1c8] sm:$0xff]
        %v2565 = vld [vmem:[%s5 + $0x1d0] sm:$0xff]
        %v2566 = vld [vmem:[%s5 + $0x1d8] sm:$0xff]
        %v2567 = vld [vmem:[%s5 + $0x1e0] sm:$0xff]
        %v2568 = vld [vmem:[%s5 + $0x1e8] sm:$0xff]
        %v2569 = vld [vmem:[%s5 + $0x1f0] sm:$0xff]
        %v2570 = vld [vmem:[%s5 + $0x1f8] sm:$0xff]
        %v2635 = vunpack.c.l.b16 %v2507
        %v2636 = vunpack.c.h.b16 %v2507
        %v2637 = vunpack.c.l.b16 %v2508
        %v2638 = vunpack.c.h.b16 %v2508
        %v2639 = vunpack.c.l.b16 %v2509
        %v2640 = vunpack.c.h.b16 %v2509
        %v2641 = vunpack.c.l.b16 %v2510
        %v2642 = vunpack.c.h.b16 %v2510
        %v2643 = vunpack.c.l.b16 %v2511
        %v2644 = vunpack.c.h.b16 %v2511
        %v2645 = vunpack.c.l.b16 %v2512
        %v2646 = vunpack.c.h.b16 %v2512
        %v2647 = vunpack.c.l.b16 %v2513
        %v2648 = vunpack.c.h.b16 %v2513
        %v2649 = vunpack.c.l.b16 %v2514
        %v2650 = vunpack.c.h.b16 %v2514
        %v2651 = vunpack.c.l.b16 %v2515
        %v2652 = vunpack.c.h.b16 %v2515
        %v2653 = vunpack.c.l.b16 %v2516
        %v2654 = vunpack.c.h.b16 %v2516
        %v2655 = vunpack.c.l.b16 %v2517
        %v2656 = vunpack.c.h.b16 %v2517
        %v2657 = vunpack.c.l.b16 %v2518
        %v2658 = vunpack.c.h.b16 %v2518
        %v2659 = vunpack.c.l.b16 %v2519
        %v2660 = vunpack.c.h.b16 %v2519
        %v2661 = vunpack.c.l.b16 %v2520
        %v2662 = vunpack.c.h.b16 %v2520
        %v2663 = vunpack.c.l.b16 %v2521
        %v2664 = vunpack.c.h.b16 %v2521
        %v2665 = vunpack.c.l.b16 %v2522
        %v2666 = vunpack.c.h.b16 %v2522
        %v2667 = vunpack.c.l.b16 %v2523
        %v2668 = vunpack.c.h.b16 %v2523
        %v2669 = vunpack.c.l.b16 %v2524
        %v2670 = vunpack.c.h.b16 %v2524
        %v2671 = vunpack.c.l.b16 %v2525
        %v2672 = vunpack.c.h.b16 %v2525
        %v2673 = vunpack.c.l.b16 %v2526
        %v2674 = vunpack.c.h.b16 %v2526
        %v2675 = vunpack.c.l.b16 %v2527
        %v2676 = vunpack.c.h.b16 %v2527
        %v2677 = vunpack.c.l.b16 %v2528
        %v2678 = vunpack.c.h.b16 %v2528
        %v2679 = vunpack.c.l.b16 %v2529
        %v2680 = vunpack.c.h.b16 %v2529
        %v2681 = vunpack.c.l.b16 %v2530
        %v2682 = vunpack.c.h.b16 %v2530
        %v2683 = vunpack.c.l.b16 %v2531
        %v2684 = vunpack.c.h.b16 %v2531
        %v2685 = vunpack.c.l.b16 %v2532
        %v2686 = vunpack.c.h.b16 %v2532
        %v2687 = vunpack.c.l.b16 %v2533
        %v2688 = vunpack.c.h.b16 %v2533
        %v2689 = vunpack.c.l.b16 %v2534
        %v2690 = vunpack.c.h.b16 %v2534
        %v2691 = vunpack.c.l.b16 %v2535
        %v2692 = vunpack.c.h.b16 %v2535
        %v2693 = vunpack.c.l.b16 %v2536
        %v2694 = vunpack.c.h.b16 %v2536
        %v2695 = vunpack.c.l.b16 %v2537
        %v2696 = vunpack.c.h.b16 %v2537
        %v2697 = vunpack.c.l.b16 %v2538
        %v2698 = vunpack.c.h.b16 %v2538
        %v2699 = vunpack.c.l.b16 %v2539
        %v2700 = vunpack.c.h.b16 %v2539
        %v2701 = vunpack.c.l.b16 %v2540
        %v2702 = vunpack.c.h.b16 %v2540
        %v2703 = vunpack.c.l.b16 %v2541
        %v2704 = vunpack.c.h.b16 %v2541
        %v2705 = vunpack.c.l.b16 %v2542
        %v2706 = vunpack.c.h.b16 %v2542
        %v2707 = vunpack.c.l.b16 %v2543
        %v2708 = vunpack.c.h.b16 %v2543
        %v2709 = vunpack.c.l.b16 %v2544
        %v2710 = vunpack.c.h.b16 %v2544
        %v2711 = vunpack.c.l.b16 %v2545
        %v2712 = vunpack.c.h.b16 %v2545
        %v2713 = vunpack.c.l.b16 %v2546
        %v2714 = vunpack.c.h.b16 %v2546
        %v2715 = vunpack.c.l.b16 %v2547
        %v2716 = vunpack.c.h.b16 %v2547
        %v2717 = vunpack.c.l.b16 %v2548
        %v2718 = vunpack.c.h.b16 %v2548
        %v2719 = vunpack.c.l.b16 %v2549
        %v2720 = vunpack.c.h.b16 %v2549
        %v2721 = vunpack.c.l.b16 %v2550
        %v2722 = vunpack.c.h.b16 %v2550
        %v2723 = vunpack.c.l.b16 %v2551
        %v2724 = vunpack.c.h.b16 %v2551
        %v2725 = vunpack.c.l.b16 %v2552
        %v2726 = vunpack.c.h.b16 %v2552
        %v2727 = vunpack.c.l.b16 %v2553
        %v2728 = vunpack.c.h.b16 %v2553
        %v2729 = vunpack.c.l.b16 %v2554
        %v2730 = vunpack.c.h.b16 %v2554
        %v2731 = vunpack.c.l.b16 %v2555
        %v2732 = vunpack.c.h.b16 %v2555
        %v2733 = vunpack.c.l.b16 %v2556
        %v2734 = vunpack.c.h.b16 %v2556
        %v2735 = vunpack.c.l.b16 %v2557
        %v2736 = vunpack.c.h.b16 %v2557
        %v2737 = vunpack.c.l.b16 %v2558
        %v2738 = vunpack.c.h.b16 %v2558
        %v2739 = vunpack.c.l.b16 %v2559
        %v2740 = vunpack.c.h.b16 %v2559
        %v2741 = vunpack.c.l.b16 %v2560
        %v2742 = vunpack.c.h.b16 %v2560
        %v2743 = vunpack.c.l.b16 %v2561
        %v2744 = vunpack.c.h.b16 %v2561
        %v2745 = vunpack.c.l.b16 %v2562
        %v2746 = vunpack.c.h.b16 %v2562
        %v2747 = vunpack.c.l.b16 %v2563
        %v2748 = vunpack.c.h.b16 %v2563
        %v2749 = vunpack.c.l.b16 %v2564
        %v2750 = vunpack.c.h.b16 %v2564
        %v2751 = vunpack.c.l.b16 %v2565
        %v2752 = vunpack.c.h.b16 %v2565
        %v2753 = vunpack.c.l.b16 %v2566
        %v2754 = vunpack.c.h.b16 %v2566
        %v2755 = vunpack.c.l.b16 %v2567
        %v2756 = vunpack.c.h.b16 %v2567
        %v2757 = vunpack.c.l.b16 %v2568
        %v2758 = vunpack.c.h.b16 %v2568
        %v2759 = vunpack.c.l.b16 %v2569
        %v2760 = vunpack.c.h.b16 %v2569
        %v2761 = vunpack.c.l.b16 %v2570
        %v2762 = vunpack.c.h.b16 %v2570
        %v2763 = vpack.c.b16 %v2637, %v2635
        %v2764 = vpack.c.b16 %v2638, %v2636
        %v2765 = vpack.c.b16 %v2641, %v2639
        %v2766 = vpack.c.b16 %v2642, %v2640
        %v2767 = vpack.c.b16 %v2645, %v2643
        %v2768 = vpack.c.b16 %v2646, %v2644
        %v2769 = vpack.c.b16 %v2649, %v2647
        %v2770 = vpack.c.b16 %v2650, %v2648
        %v2771 = vpack.c.b16 %v2653, %v2651
        %v2772 = vpack.c.b16 %v2654, %v2652
        %v2773 = vpack.c.b16 %v2657, %v2655
        %v2774 = vpack.c.b16 %v2658, %v2656
        %v2775 = vpack.c.b16 %v2661, %v2659
        %v2776 = vpack.c.b16 %v2662, %v2660
        %v2777 = vpack.c.b16 %v2665, %v2663
        %v2778 = vpack.c.b16 %v2666, %v2664
        %v2779 = vpack.c.b16 %v2669, %v2667
        %v2780 = vpack.c.b16 %v2670, %v2668
        %v2781 = vpack.c.b16 %v2673, %v2671
        %v2782 = vpack.c.b16 %v2674, %v2672
        %v2783 = vpack.c.b16 %v2677, %v2675
        %v2784 = vpack.c.b16 %v2678, %v2676
        %v2785 = vpack.c.b16 %v2681, %v2679
        %v2786 = vpack.c.b16 %v2682, %v2680
        %v2787 = vpack.c.b16 %v2685, %v2683
        %v2788 = vpack.c.b16 %v2686, %v2684
        %v2789 = vpack.c.b16 %v2689, %v2687
        %v2790 = vpack.c.b16 %v2690, %v2688
        %v2791 = vpack.c.b16 %v2693, %v2691
        %v2792 = vpack.c.b16 %v2694, %v2692
        %v2793 = vpack.c.b16 %v2697, %v2695
        %v2794 = vpack.c.b16 %v2698, %v2696
        %v2795 = vpack.c.b16 %v2701, %v2699
        %v2796 = vpack.c.b16 %v2702, %v2700
        %v2797 = vpack.c.b16 %v2705, %v2703
        %v2798 = vpack.c.b16 %v2706, %v2704
        %v2799 = vpack.c.b16 %v2709, %v2707
        %v2800 = vpack.c.b16 %v2710, %v2708
        %v2801 = vpack.c.b16 %v2713, %v2711
        %v2802 = vpack.c.b16 %v2714, %v2712
        %v2803 = vpack.c.b16 %v2717, %v2715
        %v2804 = vpack.c.b16 %v2718, %v2716
        %v2805 = vpack.c.b16 %v2721, %v2719
        %v2806 = vpack.c.b16 %v2722, %v2720
        %v2807 = vpack.c.b16 %v2725, %v2723
        %v2808 = vpack.c.b16 %v2726, %v2724
        %v2809 = vpack.c.b16 %v2729, %v2727
        %v2810 = vpack.c.b16 %v2730, %v2728
        %v2811 = vpack.c.b16 %v2733, %v2731
        %v2812 = vpack.c.b16 %v2734, %v2732
        %v2813 = vpack.c.b16 %v2737, %v2735
        %v2814 = vpack.c.b16 %v2738, %v2736
        %v2815 = vpack.c.b16 %v2741, %v2739
        %v2816 = vpack.c.b16 %v2742, %v2740
        %v2817 = vpack.c.b16 %v2745, %v2743
        %v2818 = vpack.c.b16 %v2746, %v2744
        %v2819 = vpack.c.b16 %v2749, %v2747
        %v2820 = vpack.c.b16 %v2750, %v2748
        %v2821 = vpack.c.b16 %v2753, %v2751
        %v2822 = vpack.c.b16 %v2754, %v2752
        %v2823 = vpack.c.b16 %v2757, %v2755
        %v2824 = vpack.c.b16 %v2758, %v2756
        %v2825 = vpack.c.b16 %v2761, %v2759
        %v2826 = vpack.c.b16 %v2762, %v2760
        %2891 = vmatpush.bf16.msra.mxu0 %v2777
        %2892 = vmatpush.bf16.msra.mxu0 %v2775
        %2893 = vmatpush.bf16.msra.mxu0 %v2773
        %2894 = vmatpush.bf16.msra.mxu0 %v2771
        %2895 = vmatpush.bf16.msra.mxu0 %v2769
        %2896 = vmatpush.bf16.msra.mxu0 %v2767
        %2897 = vmatpush.bf16.msra.mxu0 %v2765
        %2898 = vmatpush.bf16.msra.mxu0 %v2763
        %2899 = vmatmul.bf16.gmra.mxu0 %v2491
        %v2900 = vpop.f32.mrf.mxu0
        %v2901 = vadd.f32 0.0, %v2900
        %v2902 = vpop.f32.mrf.mxu0
        %v2903 = vadd.f32 0.0, %v2902
        %2904 = vmatmul.bf16.gmra.mxu0 %v2495
        %v2905 = vpop.f32.mrf.mxu0
        %v2906 = vadd.f32 0.0, %v2905
        %v2907 = vpop.f32.mrf.mxu0
        %v2908 = vadd.f32 0.0, %v2907
        %2909 = vmatmul.bf16.gmra.mxu0 %v2499
        %v2910 = vpop.f32.mrf.mxu0
        %v2911 = vadd.f32 0.0, %v2910
        %v2912 = vpop.f32.mrf.mxu0
        %v2913 = vadd.f32 0.0, %v2912
        %2914 = vmatmul.bf16.gmra.mxu0 %v2503
        %v2915 = vpop.f32.mrf.mxu0
        %v2916 = vadd.f32 0.0, %v2915
        %v2917 = vpop.f32.mrf.mxu0
        %v2918 = vadd.f32 0.0, %v2917
        %2919 = vdwg.mxu0
        %2920 = vmatpush.bf16.msra.mxu0 %v2793
        %2921 = vmatpush.bf16.msra.mxu0 %v2791
        %2922 = vmatpush.bf16.msra.mxu0 %v2789
        %2923 = vmatpush.bf16.msra.mxu0 %v2787
        %2924 = vmatpush.bf16.msra.mxu0 %v2785
        %2925 = vmatpush.bf16.msra.mxu0 %v2783
        %2926 = vmatpush.bf16.msra.mxu0 %v2781
        %2927 = vmatpush.bf16.msra.mxu0 %v2779
        %2928 = vmatmul.bf16.gmra.mxu0 %v2492
        %v2929 = vpop.f32.mrf.mxu0
        %v2930 = vadd.f32 %v2901, %v2929
        %v2931 = vpop.f32.mrf.mxu0
        %v2932 = vadd.f32 %v2903, %v2931
        %2933 = vmatmul.bf16.gmra.mxu0 %v2496
        %v2934 = vpop.f32.mrf.mxu0
        %v2935 = vadd.f32 %v2906, %v2934
        %v2936 = vpop.f32.mrf.mxu0
        %v2937 = vadd.f32 %v2908, %v2936
        %2938 = vmatmul.bf16.gmra.mxu0 %v2500
        %v2939 = vpop.f32.mrf.mxu0
        %v2940 = vadd.f32 %v2911, %v2939
        %v2941 = vpop.f32.mrf.mxu0
        %v2942 = vadd.f32 %v2913, %v2941
        %2943 = vmatmul.bf16.gmra.mxu0 %v2504
        %v2944 = vpop.f32.mrf.mxu0
        %v2945 = vadd.f32 %v2916, %v2944
        %v2946 = vpop.f32.mrf.mxu0
        %v2947 = vadd.f32 %v2918, %v2946
        %2948 = vdwg.mxu0
        %2949 = vmatpush.bf16.msra.mxu0 %v2809
        %2950 = vmatpush.bf16.msra.mxu0 %v2807
        %2951 = vmatpush.bf16.msra.mxu0 %v2805
        %2952 = vmatpush.bf16.msra.mxu0 %v2803
        %2953 = vmatpush.bf16.msra.mxu0 %v2801
        %2954 = vmatpush.bf16.msra.mxu0 %v2799
        %2955 = vmatpush.bf16.msra.mxu0 %v2797
        %2956 = vmatpush.bf16.msra.mxu0 %v2795
        %2957 = vmatmul.bf16.gmra.mxu0 %v2493
        %v2958 = vpop.f32.mrf.mxu0
        %v2959 = vadd.f32 %v2930, %v2958
        %v2960 = vpop.f32.mrf.mxu0
        %v2961 = vadd.f32 %v2932, %v2960
        %2962 = vmatmul.bf16.gmra.mxu0 %v2497
        %v2963 = vpop.f32.mrf.mxu0
        %v2964 = vadd.f32 %v2935, %v2963
        %v2965 = vpop.f32.mrf.mxu0
        %v2966 = vadd.f32 %v2937, %v2965
        %2967 = vmatmul.bf16.gmra.mxu0 %v2501
        %v2968 = vpop.f32.mrf.mxu0
        %v2969 = vadd.f32 %v2940, %v2968
        %v2970 = vpop.f32.mrf.mxu0
        %v2971 = vadd.f32 %v2942, %v2970
        %2972 = vmatmul.bf16.gmra.mxu0 %v2505
        %v2973 = vpop.f32.mrf.mxu0
        %v2974 = vadd.f32 %v2945, %v2973
        %v2975 = vpop.f32.mrf.mxu0
        %v2976 = vadd.f32 %v2947, %v2975
        %2977 = vdwg.mxu0
        %2978 = vmatpush.bf16.msra.mxu0 %v2825
        %2979 = vmatpush.bf16.msra.mxu0 %v2823
        %2980 = vmatpush.bf16.msra.mxu0 %v2821
        %2981 = vmatpush.bf16.msra.mxu0 %v2819
        %2982 = vmatpush.bf16.msra.mxu0 %v2817
        %2983 = vmatpush.bf16.msra.mxu0 %v2815
        %2984 = vmatpush.bf16.msra.mxu0 %v2813
        %2985 = vmatpush.bf16.msra.mxu0 %v2811
        %2986 = vmatmul.bf16.gmra.mxu0 %v2494
        %v2987 = vpop.f32.mrf.mxu0
        %v2988 = vadd.f32 %v2959, %v2987
        %v2989 = vpop.f32.mrf.mxu0
        %v2990 = vadd.f32 %v2961, %v2989
        %2991 = vmatmul.bf16.gmra.mxu0 %v2498
        %v2992 = vpop.f32.mrf.mxu0
        %v2993 = vadd.f32 %v2964, %v2992
        %v2994 = vpop.f32.mrf.mxu0
        %v2995 = vadd.f32 %v2966, %v2994
        %2996 = vmatmul.bf16.gmra.mxu0 %v2502
        %v2997 = vpop.f32.mrf.mxu0
        %v2998 = vadd.f32 %v2969, %v2997
        %v2999 = vpop.f32.mrf.mxu0
        %v3000 = vadd.f32 %v2971, %v2999
        %3001 = vmatmul.bf16.gmra.mxu0 %v2506
        %v3002 = vpop.f32.mrf.mxu0
        %v3003 = vadd.f32 %v2974, %v3002
        %v3004 = vpop.f32.mrf.mxu0
        %v3005 = vadd.f32 %v2976, %v3004
        %3006 = vdwg.mxu0
        %3007 = vmatpush.bf16.msra.mxu0 %v2778
        %3008 = vmatpush.bf16.msra.mxu0 %v2776
        %3009 = vmatpush.bf16.msra.mxu0 %v2774
        %3010 = vmatpush.bf16.msra.mxu0 %v2772
        %3011 = vmatpush.bf16.msra.mxu0 %v2770
        %3012 = vmatpush.bf16.msra.mxu0 %v2768
        %3013 = vmatpush.bf16.msra.mxu0 %v2766
        %3014 = vmatpush.bf16.msra.mxu0 %v2764
        %3015 = vmatmul.bf16.gmra.mxu0 %v2491
        %v3016 = vpop.f32.mrf.mxu0
        %v3017 = vadd.f32 0.0, %v3016
        %v3018 = vpop.f32.mrf.mxu0
        %v3019 = vadd.f32 0.0, %v3018
        %3020 = vmatmul.bf16.gmra.mxu0 %v2495
        %v3021 = vpop.f32.mrf.mxu0
        %v3022 = vadd.f32 0.0, %v3021
        %v3023 = vpop.f32.mrf.mxu0
        %v3024 = vadd.f32 0.0, %v3023
        %3025 = vmatmul.bf16.gmra.mxu0 %v2499
        %v3026 = vpop.f32.mrf.mxu0
        %v3027 = vadd.f32 0.0, %v3026
        %v3028 = vpop.f32.mrf.mxu0
        %v3029 = vadd.f32 0.0, %v3028
        %3030 = vmatmul.bf16.gmra.mxu0 %v2503
        %v3031 = vpop.f32.mrf.mxu0
        %v3032 = vadd.f32 0.0, %v3031
        %v3033 = vpop.f32.mrf.mxu0
        %v3034 = vadd.f32 0.0, %v3033
        %3035 = vdwg.mxu0
        %3036 = vmatpush.bf16.msra.mxu0 %v2794
        %3037 = vmatpush.bf16.msra.mxu0 %v2792
        %3038 = vmatpush.bf16.msra.mxu0 %v2790
        %3039 = vmatpush.bf16.msra.mxu0 %v2788
        %3040 = vmatpush.bf16.msra.mxu0 %v2786
        %3041 = vmatpush.bf16.msra.mxu0 %v2784
        %3042 = vmatpush.bf16.msra.mxu0 %v2782
        %3043 = vmatpush.bf16.msra.mxu0 %v2780
        %3044 = vmatmul.bf16.gmra.mxu0 %v2492
        %v3045 = vpop.f32.mrf.mxu0
        %v3046 = vadd.f32 %v3017, %v3045
        %v3047 = vpop.f32.mrf.mxu0
        %v3048 = vadd.f32 %v3019, %v3047
        %3049 = vmatmul.bf16.gmra.mxu0 %v2496
        %v3050 = vpop.f32.mrf.mxu0
        %v3051 = vadd.f32 %v3022, %v3050
        %v3052 = vpop.f32.mrf.mxu0
        %v3053 = vadd.f32 %v3024, %v3052
        %3054 = vmatmul.bf16.gmra.mxu0 %v2500
        %v3055 = vpop.f32.mrf.mxu0
        %v3056 = vadd.f32 %v3027, %v3055
        %v3057 = vpop.f32.mrf.mxu0
        %v3058 = vadd.f32 %v3029, %v3057
        %3059 = vmatmul.bf16.gmra.mxu0 %v2504
        %v3060 = vpop.f32.mrf.mxu0
        %v3061 = vadd.f32 %v3032, %v3060
        %v3062 = vpop.f32.mrf.mxu0
        %v3063 = vadd.f32 %v3034, %v3062
        %3064 = vdwg.mxu0
        %3065 = vmatpush.bf16.msra.mxu0 %v2810
        %3066 = vmatpush.bf16.msra.mxu0 %v2808
        %3067 = vmatpush.bf16.msra.mxu0 %v2806
        %3068 = vmatpush.bf16.msra.mxu0 %v2804
        %3069 = vmatpush.bf16.msra.mxu0 %v2802
        %3070 = vmatpush.bf16.msra.mxu0 %v2800
        %3071 = vmatpush.bf16.msra.mxu0 %v2798
        %3072 = vmatpush.bf16.msra.mxu0 %v2796
        %3073 = vmatmul.bf16.gmra.mxu0 %v2493
        %v3074 = vpop.f32.mrf.mxu0
        %v3075 = vadd.f32 %v3046, %v3074
        %v3076 = vpop.f32.mrf.mxu0
        %v3077 = vadd.f32 %v3048, %v3076
        %3078 = vmatmul.bf16.gmra.mxu0 %v2497
        %v3079 = vpop.f32.mrf.mxu0
        %v3080 = vadd.f32 %v3051, %v3079
        %v3081 = vpop.f32.mrf.mxu0
        %v3082 = vadd.f32 %v3053, %v3081
        %3083 = vmatmul.bf16.gmra.mxu0 %v2501
        %v3084 = vpop.f32.mrf.mxu0
        %v3085 = vadd.f32 %v3056, %v3084
        %v3086 = vpop.f32.mrf.mxu0
        %v3087 = vadd.f32 %v3058, %v3086
        %3088 = vmatmul.bf16.gmra.mxu0 %v2505
        %v3089 = vpop.f32.mrf.mxu0
        %v3090 = vadd.f32 %v3061, %v3089
        %v3091 = vpop.f32.mrf.mxu0
        %v3092 = vadd.f32 %v3063, %v3091
        %3093 = vdwg.mxu0
        %3094 = vmatpush.bf16.msra.mxu0 %v2826
        %3095 = vmatpush.bf16.msra.mxu0 %v2824
        %3096 = vmatpush.bf16.msra.mxu0 %v2822
        %3097 = vmatpush.bf16.msra.mxu0 %v2820
        %3098 = vmatpush.bf16.msra.mxu0 %v2818
        %3099 = vmatpush.bf16.msra.mxu0 %v2816
        %3100 = vmatpush.bf16.msra.mxu0 %v2814
        %3101 = vmatpush.bf16.msra.mxu0 %v2812
        %3102 = vmatmul.bf16.gmra.mxu0 %v2494
        %v3103 = vpop.f32.mrf.mxu0
        %v3104 = vadd.f32 %v3075, %v3103
        %v3105 = vpop.f32.mrf.mxu0
        %v3106 = vadd.f32 %v3077, %v3105
        %3107 = vmatmul.bf16.gmra.mxu0 %v2498
        %v3108 = vpop.f32.mrf.mxu0
        %v3109 = vadd.f32 %v3080, %v3108
        %v3110 = vpop.f32.mrf.mxu0
        %v3111 = vadd.f32 %v3082, %v3110
        %3112 = vmatmul.bf16.gmra.mxu0 %v2502
        %v3113 = vpop.f32.mrf.mxu0
        %v3114 = vadd.f32 %v3085, %v3113
        %v3115 = vpop.f32.mrf.mxu0
        %v3116 = vadd.f32 %v3087, %v3115
        %3117 = vmatmul.bf16.gmra.mxu0 %v2506
        %v3118 = vpop.f32.mrf.mxu0
        %v3119 = vadd.f32 %v3090, %v3118
        %v3120 = vpop.f32.mrf.mxu0
        %v3121 = vadd.f32 %v3092, %v3120
        %3122 = vdwg.mxu0
        %v3123 = vpack.c.bf16 %v3104, %v2988
        %v3124 = vpack.c.bf16 %v3106, %v2990
        %v3125 = vpack.c.bf16 %v3109, %v2993
        %v3126 = vpack.c.bf16 %v3111, %v2995
        %v3127 = vpack.c.bf16 %v3114, %v2998
        %v3128 = vpack.c.bf16 %v3116, %v3000
        %v3129 = vpack.c.bf16 %v3119, %v3003
        %v3130 = vpack.c.bf16 %v3121, %v3005
        %v3131 = vld [vmem:[#allocation8] sm:$0xf]
        %v3132 = vld [vmem:[#allocation8 + $0x4] sm:$0xf]
        %v3133 = vld [vmem:[#allocation8 + $0x8] sm:$0xf]
        %v3134 = vld [vmem:[#allocation8 + $0xc] sm:$0xf]
        %s3135 = scalar_lea.vmem [#allocation8], 16
        %v3136 = vld [vmem:[%s3135] sm:$0xf]
        %v3137 = vld [vmem:[%s3135 + $0x4] sm:$0xf]
        %v3138 = vld [vmem:[%s3135 + $0x8] sm:$0xf]
        %v3139 = vld [vmem:[%s3135 + $0xc] sm:$0xf]
        %v3144 = vunpack.c.l.b16 %v3136
        %v3145 = vunpack.c.l.b16 %v3137
        %v3146 = vunpack.c.l.b16 %v3138
        %v3147 = vunpack.c.l.b16 %v3139
        %v3148 = vpack.c.b16 %v3145, %v3144
        %v3149 = vpack.c.b16 %v3147, %v3146
        %v3158 = vunpack.c.h.b16 %v3123
        %v3159 = vunpack.c.h.b16 %v3124
        %v3160 = vunpack.c.h.b16 %v3125
        %v3161 = vunpack.c.h.b16 %v3126
        %v3162 = vunpack.c.h.b16 %v3127
        %v3163 = vunpack.c.h.b16 %v3128
        %v3164 = vunpack.c.h.b16 %v3129
        %v3165 = vunpack.c.h.b16 %v3130
        %v3166 = vpack.c.b16 %v3159, %v3158
        %v3167 = vpack.c.b16 %v3161, %v3160
        %v3168 = vpack.c.b16 %v3163, %v3162
        %v3169 = vpack.c.b16 %v3165, %v3164
        %vm3174 = vcmask 523264
        %v3176 = vsel %vm3174, %v3148, 0
        %v3179 = vsel %vm3174, %v3149, 0
        %3181 = vmatpush.bf16.msra.mxu0 0
        %3182 = vmatpush.bf16.msra.mxu0 0
        %3183 = vmatpush.bf16.msra.mxu0 0
        %3184 = vmatpush.bf16.msra.mxu0 0
        %3185 = vmatpush.bf16.msra.mxu0 %v3169
        %3186 = vmatpush.bf16.msra.mxu0 %v3168
        %3187 = vmatpush.bf16.msra.mxu0 %v3167
        %3188 = vmatpush.bf16.msra.mxu0 %v3166
        %3189 = vmatmul.bf16.gmra.mxu0 %v3176
        %v3190 = vpop.f32.mrf.mxu0
        %v3191 = vadd.f32 0.0, %v3190
        %v3192 = vpop.f32.mrf.mxu0
        %v3193 = vadd.f32 0.0, %v3192
        %3194 = vmatmul.bf16.gmra.mxu0 %v3179
        %v3195 = vpop.f32.mrf.mxu0
        %v3196 = vadd.f32 0.0, %v3195
        %v3197 = vpop.f32.mrf.mxu0
        %v3198 = vadd.f32 0.0, %v3197
        %3199 = vdwg.mxu0
        %v3204 = vunpack.c.l.b16 %v3131
        %v3205 = vunpack.c.l.b16 %v3132
        %v3206 = vunpack.c.l.b16 %v3133
        %v3207 = vunpack.c.l.b16 %v3134
        %v3208 = vpack.c.b16 %v3205, %v3204
        %v3209 = vpack.c.b16 %v3207, %v3206
        %v3210 = vunpack.c.l.b16 %v3123
        %v3211 = vunpack.c.l.b16 %v3124
        %v3212 = vunpack.c.l.b16 %v3125
        %v3213 = vunpack.c.l.b16 %v3126
        %v3214 = vunpack.c.l.b16 %v3127
        %v3215 = vunpack.c.l.b16 %v3128
        %v3216 = vunpack.c.l.b16 %v3129
        %v3217 = vunpack.c.l.b16 %v3130
        %v3218 = vpack.c.b16 %v3211, %v3210
        %v3219 = vpack.c.b16 %v3213, %v3212
        %v3220 = vpack.c.b16 %v3215, %v3214
        %v3221 = vpack.c.b16 %v3217, %v3216
        %v3227 = vsel %vm3174, %v3208, 0
        %v3230 = vsel %vm3174, %v3209, 0
        %3232 = vmatpush.bf16.msra.mxu0 0
        %3233 = vmatpush.bf16.msra.mxu0 0
        %3234 = vmatpush.bf16.msra.mxu0 0
        %3235 = vmatpush.bf16.msra.mxu0 0
        %3236 = vmatpush.bf16.msra.mxu0 %v3221
        %3237 = vmatpush.bf16.msra.mxu0 %v3220
        %3238 = vmatpush.bf16.msra.mxu0 %v3219
        %3239 = vmatpush.bf16.msra.mxu0 %v3218
        %3240 = vmatmul.bf16.gmra.mxu0 %v3227
        %v3241 = vpop.f32.mrf.mxu0
        %v3242 = vadd.f32 %v3191, %v3241
        %v3243 = vpop.f32.mrf.mxu0
        %v3244 = vadd.f32 %v3193, %v3243
        %3245 = vmatmul.bf16.gmra.mxu0 %v3230
        %v3246 = vpop.f32.mrf.mxu0
        %v3247 = vadd.f32 %v3196, %v3246
        %v3248 = vpop.f32.mrf.mxu0
        %v3249 = vadd.f32 %v3198, %v3248
        %3250 = vdwg.mxu0
        %v3251 = vld [vmem:[%s7] sm:$0x1]
        %v3253 = vperm.slane %v3251, 0
        %v3255 = vmul.f32 %v3242, %v3253
        %v3256 = vmul.f32 %v3244, %v3253
        %v3257 = vmul.f32 %v3247, %v3253
        %v3258 = vmul.f32 %v3249, %v3253
        %v3259 = vld [vmem:[%s8] sm:$0x1]
        %v3261 = vperm.slane %v3259, 0
        %v3263 = vadd.f32 %v3255, %v3261
        %v3264 = vadd.f32 %v3256, %v3261
        %v3265 = vadd.f32 %v3257, %v3261
        %v3266 = vadd.f32 %v3258, %v3261
        %v3267 = vpack.c.bf16 %v3264, %v3263
        %v3268 = vpack.c.bf16 %v3266, %v3265
        %v3269 = vld [vmem:[#allocation10] sm:$0xf]
        %vm3270 = vcmask 261120
        %v3272 = vsel %vm3270, %v3269, 0
        %3274 = vmatpush.bf16.msra.mxu0 0
        %3275 = vmatpush.bf16.msra.mxu0 0
        %3276 = vmatpush.bf16.msra.mxu0 0
        %3277 = vmatpush.bf16.msra.mxu0 0
        %3278 = vmatpush.bf16.msra.mxu0 0
        %3279 = vmatpush.bf16.msra.mxu0 0
        %3280 = vmatpush.bf16.msra.mxu0 %v3268
        %3281 = vmatpush.bf16.msra.mxu0 %v3267
        %3282 = vmatmul.bf16.gmra.mxu0 %v3272
        %v3283 = vpop.f32.mrf.mxu0
        %v3284 = vadd.f32 0.0, %v3283
        %v3285 = vpop.f32.mrf.mxu0
        %3286 = vdwg.mxu0
        %s3287 = scalar_lea.vmem [#allocation10], 4
        %v3288 = vld [vmem:[%s3287] sm:$0xf]
        %v3290 = vsel %vm3270, %v3288, 0
        %3292 = vmatpush.bf16.msra.mxu0 0
        %3293 = vmatpush.bf16.msra.mxu0 0
        %3294 = vmatpush.bf16.msra.mxu0 0
        %3295 = vmatpush.bf16.msra.mxu0 0
        %3296 = vmatpush.bf16.msra.mxu0 0
        %3297 = vmatpush.bf16.msra.mxu0 0
        %3298 = vmatpush.bf16.msra.mxu0 %v3268
        %3299 = vmatpush.bf16.msra.mxu0 %v3267
        %3300 = vmatmul.bf16.gmra.mxu0 %v3290
        %v3301 = vpop.f32.mrf.mxu0
        %v3302 = vadd.f32 0.0, %v3301
        %v3303 = vpop.f32.mrf.mxu0
        %3304 = vdwg.mxu0
        %s3305 = scalar_lea.vmem [#allocation10], 8
        %v3306 = vld [vmem:[%s3305] sm:$0xf]
        %v3308 = vsel %vm3270, %v3306, 0
        %3310 = vmatpush.bf16.msra.mxu0 0
        %3311 = vmatpush.bf16.msra.mxu0 0
        %3312 = vmatpush.bf16.msra.mxu0 0
        %3313 = vmatpush.bf16.msra.mxu0 0
        %3314 = vmatpush.bf16.msra.mxu0 0
        %3315 = vmatpush.bf16.msra.mxu0 0
        %3316 = vmatpush.bf16.msra.mxu0 %v3268
        %3317 = vmatpush.bf16.msra.mxu0 %v3267
        %3318 = vmatmul.bf16.gmra.mxu0 %v3308
        %v3319 = vpop.f32.mrf.mxu0
        %v3320 = vadd.f32 0.0, %v3319
        %v3321 = vpop.f32.mrf.mxu0
        %3322 = vdwg.mxu0
        %s3323 = scalar_lea.vmem [#allocation10], 12
        %v3324 = vld [vmem:[%s3323] sm:$0xf]
        %v3326 = vsel %vm3270, %v3324, 0
        %3328 = vmatpush.bf16.msra.mxu0 0
        %3329 = vmatpush.bf16.msra.mxu0 0
        %3330 = vmatpush.bf16.msra.mxu0 0
        %3331 = vmatpush.bf16.msra.mxu0 0
        %3332 = vmatpush.bf16.msra.mxu0 0
        %3333 = vmatpush.bf16.msra.mxu0 0
        %3334 = vmatpush.bf16.msra.mxu0 %v3268
        %3335 = vmatpush.bf16.msra.mxu0 %v3267
        %3336 = vmatmul.bf16.gmra.mxu0 %v3326
        %v3337 = vpop.f32.mrf.mxu0
        %v3338 = vadd.f32 0.0, %v3337
        %v3339 = vpop.f32.mrf.mxu0
        %3340 = vdwg.mxu0
        %v3341 = vpack.c.bf16 %v3284, %v3284
        %v3342 = vpack.c.bf16 %v3302, %v3302
        %v3343 = vpack.c.bf16 %v3320, %v3320
        %v3344 = vpack.c.bf16 %v3338, %v3338
        %v3345 = vld [vmem:[#allocation11] sm:$0xf]
        %v3346 = vld [vmem:[#allocation11 + $0x4] sm:$0xf]
        %v3347 = vld [vmem:[#allocation11 + $0x8] sm:$0xf]
        %v3348 = vld [vmem:[#allocation11 + $0xc] sm:$0xf]
        %v3349 = vld [vmem:[#allocation11 + $0x10] sm:$0xf]
        %v3350 = vld [vmem:[#allocation11 + $0x14] sm:$0xf]
        %v3351 = vld [vmem:[#allocation11 + $0x18] sm:$0xf]
        %v3352 = vld [vmem:[#allocation11 + $0x1c] sm:$0xf]
        %v3353 = vld [vmem:[#allocation11 + $0x20] sm:$0xf]
        %v3354 = vld [vmem:[#allocation11 + $0x24] sm:$0xf]
        %v3355 = vld [vmem:[#allocation11 + $0x28] sm:$0xf]
        %v3356 = vld [vmem:[#allocation11 + $0x2c] sm:$0xf]
        %v3357 = vld [vmem:[#allocation11 + $0x30] sm:$0xf]
        %v3358 = vld [vmem:[#allocation11 + $0x34] sm:$0xf]
        %v3359 = vld [vmem:[#allocation11 + $0x38] sm:$0xf]
        %v3360 = vld [vmem:[#allocation11 + $0x3c] sm:$0xf]
        %v3361 = vld [vmem:[#allocation11 + $0x40] sm:$0xf]
        %v3362 = vld [vmem:[#allocation11 + $0x44] sm:$0xf]
        %v3363 = vld [vmem:[#allocation11 + $0x48] sm:$0xf]
        %v3364 = vld [vmem:[#allocation11 + $0x4c] sm:$0xf]
        %v3365 = vld [vmem:[#allocation11 + $0x50] sm:$0xf]
        %v3366 = vld [vmem:[#allocation11 + $0x54] sm:$0xf]
        %v3367 = vld [vmem:[#allocation11 + $0x58] sm:$0xf]
        %v3368 = vld [vmem:[#allocation11 + $0x5c] sm:$0xf]
        %v3369 = vld [vmem:[#allocation11 + $0x60] sm:$0xf]
        %v3370 = vld [vmem:[#allocation11 + $0x64] sm:$0xf]
        %v3371 = vld [vmem:[#allocation11 + $0x68] sm:$0xf]
        %v3372 = vld [vmem:[#allocation11 + $0x6c] sm:$0xf]
        %v3373 = vld [vmem:[#allocation11 + $0x70] sm:$0xf]
        %v3374 = vld [vmem:[#allocation11 + $0x74] sm:$0xf]
        %v3375 = vld [vmem:[#allocation11 + $0x78] sm:$0xf]
        %v3376 = vld [vmem:[#allocation11 + $0x7c] sm:$0xf]
        %v3377 = vld [vmem:[#allocation11 + $0x80] sm:$0xf]
        %v3378 = vld [vmem:[#allocation11 + $0x84] sm:$0xf]
        %v3379 = vld [vmem:[#allocation11 + $0x88] sm:$0xf]
        %v3380 = vld [vmem:[#allocation11 + $0x8c] sm:$0xf]
        %v3381 = vld [vmem:[#allocation11 + $0x90] sm:$0xf]
        %v3382 = vld [vmem:[#allocation11 + $0x94] sm:$0xf]
        %v3383 = vld [vmem:[#allocation11 + $0x98] sm:$0xf]
        %v3384 = vld [vmem:[#allocation11 + $0x9c] sm:$0xf]
        %v3385 = vld [vmem:[#allocation11 + $0xa0] sm:$0xf]
        %v3386 = vld [vmem:[#allocation11 + $0xa4] sm:$0xf]
        %v3387 = vld [vmem:[#allocation11 + $0xa8] sm:$0xf]
        %v3388 = vld [vmem:[#allocation11 + $0xac] sm:$0xf]
        %v3389 = vld [vmem:[#allocation11 + $0xb0] sm:$0xf]
        %v3390 = vld [vmem:[#allocation11 + $0xb4] sm:$0xf]
        %v3391 = vld [vmem:[#allocation11 + $0xb8] sm:$0xf]
        %v3392 = vld [vmem:[#allocation11 + $0xbc] sm:$0xf]
        %v3393 = vld [vmem:[#allocation11 + $0xc0] sm:$0xf]
        %v3394 = vld [vmem:[#allocation11 + $0xc4] sm:$0xf]
        %v3395 = vld [vmem:[#allocation11 + $0xc8] sm:$0xf]
        %v3396 = vld [vmem:[#allocation11 + $0xcc] sm:$0xf]
        %v3397 = vld [vmem:[#allocation11 + $0xd0] sm:$0xf]
        %v3398 = vld [vmem:[#allocation11 + $0xd4] sm:$0xf]
        %v3399 = vld [vmem:[#allocation11 + $0xd8] sm:$0xf]
        %v3400 = vld [vmem:[#allocation11 + $0xdc] sm:$0xf]
        %v3401 = vld [vmem:[#allocation11 + $0xe0] sm:$0xf]
        %v3402 = vld [vmem:[#allocation11 + $0xe4] sm:$0xf]
        %v3403 = vld [vmem:[#allocation11 + $0xe8] sm:$0xf]
        %v3404 = vld [vmem:[#allocation11 + $0xec] sm:$0xf]
        %v3405 = vld [vmem:[#allocation11 + $0xf0] sm:$0xf]
        %v3406 = vld [vmem:[#allocation11 + $0xf4] sm:$0xf]
        %v3407 = vld [vmem:[#allocation11 + $0xf8] sm:$0xf]
        %v3408 = vld [vmem:[#allocation11 + $0xfc] sm:$0xf]
        %v3409 = vld [vmem:[#allocation13] sm:$0x1]
        %v3411 = vperm.slane %v3409, 0
        %v3477 = vunpack.c.l.b16 %v3345
        %v3478 = vunpack.c.l.b16 %v3346
        %v3479 = vunpack.c.l.b16 %v3347
        %v3480 = vunpack.c.l.b16 %v3348
        %v3481 = vunpack.c.l.b16 %v3349
        %v3482 = vunpack.c.l.b16 %v3350
        %v3483 = vunpack.c.l.b16 %v3351
        %v3484 = vunpack.c.l.b16 %v3352
        %v3485 = vunpack.c.l.b16 %v3353
        %v3486 = vunpack.c.l.b16 %v3354
        %v3487 = vunpack.c.l.b16 %v3355
        %v3488 = vunpack.c.l.b16 %v3356
        %v3489 = vunpack.c.l.b16 %v3357
        %v3490 = vunpack.c.l.b16 %v3358
        %v3491 = vunpack.c.l.b16 %v3359
        %v3492 = vunpack.c.l.b16 %v3360
        %v3493 = vunpack.c.l.b16 %v3361
        %v3494 = vunpack.c.l.b16 %v3362
        %v3495 = vunpack.c.l.b16 %v3363
        %v3496 = vunpack.c.l.b16 %v3364
        %v3497 = vunpack.c.l.b16 %v3365
        %v3498 = vunpack.c.l.b16 %v3366
        %v3499 = vunpack.c.l.b16 %v3367
        %v3500 = vunpack.c.l.b16 %v3368
        %v3501 = vunpack.c.l.b16 %v3369
        %v3502 = vunpack.c.l.b16 %v3370
        %v3503 = vunpack.c.l.b16 %v3371
        %v3504 = vunpack.c.l.b16 %v3372
        %v3505 = vunpack.c.l.b16 %v3373
        %v3506 = vunpack.c.l.b16 %v3374
        %v3507 = vunpack.c.l.b16 %v3375
        %v3508 = vunpack.c.l.b16 %v3376
        %v3509 = vunpack.c.l.b16 %v3377
        %v3510 = vunpack.c.l.b16 %v3378
        %v3511 = vunpack.c.l.b16 %v3379
        %v3512 = vunpack.c.l.b16 %v3380
        %v3513 = vunpack.c.l.b16 %v3381
        %v3514 = vunpack.c.l.b16 %v3382
        %v3515 = vunpack.c.l.b16 %v3383
        %v3516 = vunpack.c.l.b16 %v3384
        %v3517 = vunpack.c.l.b16 %v3385
        %v3518 = vunpack.c.l.b16 %v3386
        %v3519 = vunpack.c.l.b16 %v3387
        %v3520 = vunpack.c.l.b16 %v3388
        %v3521 = vunpack.c.l.b16 %v3389
        %v3522 = vunpack.c.l.b16 %v3390
        %v3523 = vunpack.c.l.b16 %v3391
        %v3524 = vunpack.c.l.b16 %v3392
        %v3525 = vunpack.c.l.b16 %v3393
        %v3526 = vunpack.c.l.b16 %v3394
        %v3527 = vunpack.c.l.b16 %v3395
        %v3528 = vunpack.c.l.b16 %v3396
        %v3529 = vunpack.c.l.b16 %v3397
        %v3530 = vunpack.c.l.b16 %v3398
        %v3531 = vunpack.c.l.b16 %v3399
        %v3532 = vunpack.c.l.b16 %v3400
        %v3533 = vunpack.c.l.b16 %v3401
        %v3534 = vunpack.c.l.b16 %v3402
        %v3535 = vunpack.c.l.b16 %v3403
        %v3536 = vunpack.c.l.b16 %v3404
        %v3537 = vunpack.c.l.b16 %v3405
        %v3538 = vunpack.c.l.b16 %v3406
        %v3539 = vunpack.c.l.b16 %v3407
        %v3540 = vunpack.c.l.b16 %v3408
        %v3541 = vpack.c.b16 %v3478, %v3477
        %v3542 = vpack.c.b16 %v3480, %v3479
        %v3543 = vpack.c.b16 %v3482, %v3481
        %v3544 = vpack.c.b16 %v3484, %v3483
        %v3545 = vpack.c.b16 %v3486, %v3485
        %v3546 = vpack.c.b16 %v3488, %v3487
        %v3547 = vpack.c.b16 %v3490, %v3489
        %v3548 = vpack.c.b16 %v3492, %v3491
        %v3549 = vpack.c.b16 %v3494, %v3493
        %v3550 = vpack.c.b16 %v3496, %v3495
        %v3551 = vpack.c.b16 %v3498, %v3497
        %v3552 = vpack.c.b16 %v3500, %v3499
        %v3553 = vpack.c.b16 %v3502, %v3501
        %v3554 = vpack.c.b16 %v3504, %v3503
        %v3555 = vpack.c.b16 %v3506, %v3505
        %v3556 = vpack.c.b16 %v3508, %v3507
        %v3557 = vpack.c.b16 %v3510, %v3509
        %v3558 = vpack.c.b16 %v3512, %v3511
        %v3559 = vpack.c.b16 %v3514, %v3513
        %v3560 = vpack.c.b16 %v3516, %v3515
        %v3561 = vpack.c.b16 %v3518, %v3517
        %v3562 = vpack.c.b16 %v3520, %v3519
        %v3563 = vpack.c.b16 %v3522, %v3521
        %v3564 = vpack.c.b16 %v3524, %v3523
        %v3565 = vpack.c.b16 %v3526, %v3525
        %v3566 = vpack.c.b16 %v3528, %v3527
        %v3567 = vpack.c.b16 %v3530, %v3529
        %v3568 = vpack.c.b16 %v3532, %v3531
        %v3569 = vpack.c.b16 %v3534, %v3533
        %v3570 = vpack.c.b16 %v3536, %v3535
        %v3571 = vpack.c.b16 %v3538, %v3537
        %v3572 = vpack.c.b16 %v3540, %v3539
        %3605 = vmatpush.bf16.msra.mxu0 %v3548
        %3606 = vmatpush.bf16.msra.mxu0 %v3547
        %3607 = vmatpush.bf16.msra.mxu0 %v3546
        %3608 = vmatpush.bf16.msra.mxu0 %v3545
        %3609 = vmatpush.bf16.msra.mxu0 %v3544
        %3610 = vmatpush.bf16.msra.mxu0 %v3543
        %3611 = vmatpush.bf16.msra.mxu0 %v3542
        %3612 = vmatpush.bf16.msra.mxu0 %v3541
        %3613 = vmatmul.bf16.gmra.mxu0 %v3341
        %v3614 = vpop.f32.mrf.mxu0
        %v3615 = vadd.f32 %v3411, %v3614
        %v3616 = vpop.f32.mrf.mxu0
        %3617 = vdwg.mxu0
        %3618 = vmatpush.bf16.msra.mxu0 %v3556
        %3619 = vmatpush.bf16.msra.mxu0 %v3555
        %3620 = vmatpush.bf16.msra.mxu0 %v3554
        %3621 = vmatpush.bf16.msra.mxu0 %v3553
        %3622 = vmatpush.bf16.msra.mxu0 %v3552
        %3623 = vmatpush.bf16.msra.mxu0 %v3551
        %3624 = vmatpush.bf16.msra.mxu0 %v3550
        %3625 = vmatpush.bf16.msra.mxu0 %v3549
        %3626 = vmatmul.bf16.gmra.mxu0 %v3342
        %v3627 = vpop.f32.mrf.mxu0
        %v3628 = vadd.f32 %v3615, %v3627
        %v3629 = vpop.f32.mrf.mxu0
        %3630 = vdwg.mxu0
        %3631 = vmatpush.bf16.msra.mxu0 %v3564
        %3632 = vmatpush.bf16.msra.mxu0 %v3563
        %3633 = vmatpush.bf16.msra.mxu0 %v3562
        %3634 = vmatpush.bf16.msra.mxu0 %v3561
        %3635 = vmatpush.bf16.msra.mxu0 %v3560
        %3636 = vmatpush.bf16.msra.mxu0 %v3559
        %3637 = vmatpush.bf16.msra.mxu0 %v3558
        %3638 = vmatpush.bf16.msra.mxu0 %v3557
        %3639 = vmatmul.bf16.gmra.mxu0 %v3343
        %v3640 = vpop.f32.mrf.mxu0
        %v3641 = vadd.f32 %v3628, %v3640
        %v3642 = vpop.f32.mrf.mxu0
        %3643 = vdwg.mxu0
        %3644 = vmatpush.bf16.msra.mxu0 %v3572
        %3645 = vmatpush.bf16.msra.mxu0 %v3571
        %3646 = vmatpush.bf16.msra.mxu0 %v3570
        %3647 = vmatpush.bf16.msra.mxu0 %v3569
        %3648 = vmatpush.bf16.msra.mxu0 %v3568
        %3649 = vmatpush.bf16.msra.mxu0 %v3567
        %3650 = vmatpush.bf16.msra.mxu0 %v3566
        %3651 = vmatpush.bf16.msra.mxu0 %v3565
        %3652 = vmatmul.bf16.gmra.mxu0 %v3344
        %v3653 = vpop.f32.mrf.mxu0
        %v3654 = vadd.f32 %v3641, %v3653
        %v3655 = vpop.f32.mrf.mxu0
        %3656 = vdwg.mxu0
        %v3657 = vmax.f32 %v3654, 0.0
        %v3658 = vpack.c.bf16 %v3657, %v3657
        %v3659 = vld [vmem:[#allocation14] sm:$0xf]
        %v3660 = vld [vmem:[#allocation14 + $0x4] sm:$0xf]
        %v3661 = vld [vmem:[#allocation14 + $0x8] sm:$0xf]
        %v3662 = vld [vmem:[#allocation14 + $0xc] sm:$0xf]
        %v3663 = vld [vmem:[#allocation14 + $0x10] sm:$0xf]
        %v3664 = vld [vmem:[#allocation14 + $0x14] sm:$0xf]
        %v3665 = vld [vmem:[#allocation14 + $0x18] sm:$0xf]
        %v3666 = vld [vmem:[#allocation14 + $0x1c] sm:$0xf]
        %v3667 = vld [vmem:[#allocation14 + $0x20] sm:$0xf]
        %v3668 = vld [vmem:[#allocation14 + $0x24] sm:$0xf]
        %v3669 = vld [vmem:[#allocation14 + $0x28] sm:$0xf]
        %v3670 = vld [vmem:[#allocation14 + $0x2c] sm:$0xf]
        %v3671 = vld [vmem:[#allocation14 + $0x30] sm:$0xf]
        %v3672 = vld [vmem:[#allocation14 + $0x34] sm:$0xf]
        %v3673 = vld [vmem:[#allocation14 + $0x38] sm:$0xf]
        %v3674 = vld [vmem:[#allocation14 + $0x3c] sm:$0xf]
        %v3675 = vld [vmem:[#allocation16] sm:$0x1]
        %v3677 = vperm.slane %v3675, 0
        %v3695 = vunpack.c.l.b16 %v3659
        %v3696 = vunpack.c.l.b16 %v3660
        %v3697 = vunpack.c.l.b16 %v3661
        %v3698 = vunpack.c.l.b16 %v3662
        %v3699 = vunpack.c.l.b16 %v3663
        %v3700 = vunpack.c.l.b16 %v3664
        %v3701 = vunpack.c.l.b16 %v3665
        %v3702 = vunpack.c.l.b16 %v3666
        %v3703 = vunpack.c.l.b16 %v3667
        %v3704 = vunpack.c.l.b16 %v3668
        %v3705 = vunpack.c.l.b16 %v3669
        %v3706 = vunpack.c.l.b16 %v3670
        %v3707 = vunpack.c.l.b16 %v3671
        %v3708 = vunpack.c.l.b16 %v3672
        %v3709 = vunpack.c.l.b16 %v3673
        %v3710 = vunpack.c.l.b16 %v3674
        %v3711 = vpack.c.b16 %v3696, %v3695
        %v3712 = vpack.c.b16 %v3698, %v3697
        %v3713 = vpack.c.b16 %v3700, %v3699
        %v3714 = vpack.c.b16 %v3702, %v3701
        %v3715 = vpack.c.b16 %v3704, %v3703
        %v3716 = vpack.c.b16 %v3706, %v3705
        %v3717 = vpack.c.b16 %v3708, %v3707
        %v3718 = vpack.c.b16 %v3710, %v3709
        %3727 = vmatpush.bf16.msra.mxu0 %v3718
        %3728 = vmatpush.bf16.msra.mxu0 %v3717
        %3729 = vmatpush.bf16.msra.mxu0 %v3716
        %3730 = vmatpush.bf16.msra.mxu0 %v3715
        %3731 = vmatpush.bf16.msra.mxu0 %v3714
        %3732 = vmatpush.bf16.msra.mxu0 %v3713
        %3733 = vmatpush.bf16.msra.mxu0 %v3712
        %3734 = vmatpush.bf16.msra.mxu0 %v3711
        %3735 = vmatmul.bf16.gmra.mxu0 %v3658
        %v3736 = vpop.f32.mrf.mxu0
        %v3737 = vadd.f32 %v3677, %v3736
        %v3738 = vpop.f32.mrf.mxu0
        %3739 = vdwg.mxu0
        %3740 = vmax.xlane.f32.xlu0 %v3737
        %v3741 = vpop.xlane.xlu0 %3740
        %v3742 = vsub.f32 %v3737, %v3741
        %v3743 = vmul.f32 %v3742, 1.442695
        %v3744 = vpow.pop %v3743
        %3745 = vadd.xlane.f32.xlu0 %v3744
        %v3746 = vpop.xlane.xlu0 %3745
        %v3747 = vrcp.pop %v3746
        %v3748 = vmul.f32 %v3746, %v3747
        %v3749 = vsub.f32 2.0, %v3748
        %v3750 = vmul.f32 %v3747, %v3749
        %v3751 = vmul.f32 %v3744, %v3750
        %3752 = vst [vmem:[%s604] sm:$0xff] %v3751
        %s3753 = sand.u32 %s340, 1
        %s3754 = scalar_lea.sflag [#allocation4], %s3753
        %s3755 = sand.u32 %s340, 1
        %s3756 = smul.addr %s3755, 8
        %s3757 = scalar_lea.vmem [#allocation17], %s3756
        // Predicated region
        $region113: #{conv_comp_forward.1} parent=75 // pred_check
          %p3758 = pneg %p350
        $region114: #{conv_comp_forward.1} parent=75 // pred_check_branch
          %3760 = sbr.rel (%p3758) target = $region116
        $region115: #{conv_comp_forward.1} parent=75 // pred_region
          %3762 = vsyncadd %s3754, 0
          %s3763 = smul.addr %s33, 8
          %s3764 = scalar_lea.hbm %s14, %s3763
          %s3766 = sshll.u32 %s3757, 4
          %s3767 = int_to_ptr.vmem [resolvable:$true] %s3766
          %s3768 = sshll.u32 %s3764, 4
          %s3769 = int_to_ptr.hbm [resolvable:$true] %s3768
          %3771 = dma.vmem_to_hbm [thread:$0]  %s3767, 128, %s3769, %s3754
        $region116: #{conv_comp_forward.1} parent=75 // pred_fallthru
          _
      $region76: #{conv_comp_forward.1} parent=5 // pred_fallthru
        _
      %p3772 = scmp.le.s32.totalorder 2, %s28
      // Predicated region
      $region117: #{conv_comp_forward.1} parent=5 // pred_check
        %p3773 = pneg %p3772
      $region118: #{conv_comp_forward.1} parent=5 // pred_check_branch
        %3775 = sbr.rel (%p3773) target = $region120
      $region119: #{conv_comp_forward.1} parent=5 // pred_region
        %s3776 = ssub.s32 %s28, 2
        // Predicated region
        $region121: #{conv_comp_forward.1} parent=119 // pred_check
          %p3777 = pneg %p356
        $region122: #{conv_comp_forward.1} parent=119 // pred_check_branch
          %3779 = sbr.rel (%p3777) target = $region124
        $region123: #{conv_comp_forward.1} parent=119 // pred_region
          %s3780 = sand.u32 %s341, 1
          %s3781 = scalar_lea.sflag [#allocation4], %s3780
          %s3782 = sand.u32 %s341, 1
          %s3783 = smul.addr %s3782, 8
          %s3784 = scalar_lea.vmem [#allocation17], %s3783
          %3786 = dma.done %s3781, 128
        $region124: #{conv_comp_forward.1} parent=119 // pred_fallthru
          _
      $region120: #{conv_comp_forward.1} parent=5 // pred_fallthru
        _
    $region6: #{conv_comp_forward.1} parent=1 // loop_footer
      %s32 = sadd.s32 1, %s28
    $region7: #{conv_comp_forward.1} parent=1 // loop_footer_branch
      %27 = sbr.rel target = $region3
    $region8: #{conv_comp_forward.1} parent=1 // loop_exit
      _
    %3787 = vsyncpa [#allocation3], 1
    %s3788 = scalar_lea.sflag [#allocation3], 1
    %3789 = vsyncpa %s3788, 1
    %3790 = vsyncpa [#allocation6], 1
    %3791 = vsyncpa [#allocation9], 1
    %3792 = vsyncpa [#allocation12], 1
    %3793 = vsyncpa [#allocation15], 1
    %3794 = vsyncpa [#allocation4], 1
    %s3795 = scalar_lea.sflag [#allocation4], 1
    %3796 = vsyncpa %s3795, 1

</llo_original>
